<compile_context>
chip_gen: v5e
topology: v5e:2x2
jax: 0.10.0
libtpu: 0.0.40
codegen_flags: <defaults>
</compile_context>

<pallas_src>
import numpy as np
import jax
import jax.numpy as jnp
from jax.experimental import pallas as pl
from jax.experimental.pallas import tpu as pltpu


_K = 3     # conv kernel size
_W0 = 15   # input height/width (WINDOW_SIZE)
_W1 = 13   # conv1 output height/width
_WP = 6    # pooled height/width
_W2 = 4    # conv2 output height/width


# ----------------------------- fused Pallas kernel ---------------------------

def _policy_kernel(x_ref, s_ref, m1_ref, b1_ref, pe_ref, po_ref, m2_ref, b2_ref,
                   f1c_ref, f1s_ref, fb1_ref, f2_ref, fb2_ref, f3_ref, fb3_ref,
                   o_ref):
    f32 = jnp.float32
    cdt = m1_ref.dtype            # MXU operand dtype (bf16)

    def conv1_row(r):
        # x_ref[h] is the (B, 15*Cin) lane layout of image row h (lanes = w*Cin + c);
        # 3x3 valid conv along width folded into the banded matrices m1[kh].
        z = jnp.dot(x_ref[r], m1_ref[0], preferred_element_type=f32)
        z = z + jnp.dot(x_ref[r + 1], m1_ref[1], preferred_element_type=f32)
        z = z + jnp.dot(x_ref[r + 2], m1_ref[2], preferred_element_type=f32)
        return jnp.maximum(z + b1_ref[...], 0.0)                      # (B, 13*Hc) f32

    # conv1 + ReLU + 2x2 stride-2 max-pool.  Floor pooling drops row/col 12, so only
    # conv1 rows 0..11 are computed.  Row-pair max first (elementwise), then exact
    # even/odd column-block selection matmuls (selection commutes with max).
    pool = []
    for p in range(_WP):
        rmax = jnp.maximum(conv1_row(2 * p), conv1_row(2 * p + 1)).astype(cdt)
        ce = jnp.dot(rmax, pe_ref[...], preferred_element_type=f32)
        co = jnp.dot(rmax, po_ref[...], preferred_element_type=f32)
        pool.append(jnp.maximum(ce, co).astype(cdt))                  # (B, 6*Hc)

    # conv2 + ReLU fused with fc1 (NCHW flatten + state concat folded into f1c / f1s).
    h = jnp.dot(s_ref[...], f1s_ref[...], preferred_element_type=f32)  # (B, hidden)
    for r in range(_W2):
        z = jnp.dot(pool[r], m2_ref[0], preferred_element_type=f32)
        z = z + jnp.dot(pool[r + 1], m2_ref[1], preferred_element_type=f32)
        z = z + jnp.dot(pool[r + 2], m2_ref[2], preferred_element_type=f32)
        a2_r = jnp.maximum(z + b2_ref[...], 0.0).astype(cdt)          # (B, 4*Hc)
        h = h + jnp.dot(a2_r, f1c_ref[r], preferred_element_type=f32)
    h = jnp.maximum(h + fb1_ref[...], 0.0).astype(cdt)
    # TODO(synk): nn.Dropout(p=0.2) in train() mode is stochastic; implemented as
    # identity (eval-mode semantics) to keep the kernel deterministic.
    h = jnp.maximum(jnp.dot(h, f2_ref[...], preferred_element_type=f32)
                    + fb2_ref[...], 0.0).astype(cdt)
    logits = jnp.dot(h, f3_ref[...], preferred_element_type=f32) + fb3_ref[...]

    # softmax over actions (dim=1), exact normalization
    m = jnp.max(logits, axis=-1, keepdims=True)
    e = jnp.exp(logits - m)
    denom = jnp.sum(e, axis=-1, keepdims=True)
    o_ref[...] = (e * pl.reciprocal(denom, approx=False)).astype(o_ref.dtype)


# ----------------------------- wrapper ----------------------------------------

def _round_up(a, m):
    return (a + m - 1) // m * m


def _const_index_map(ndim):
    if ndim == 2:
        return lambda n: (0, 0)
    return lambda n: (0, 0, 0)


def policy_forward(params, s, w_nchw, *, block_n=256, min_grid_steps=2):
    """s: (N, 4) state features; w_nchw: (N, Cin, 15, 15) window (PyTorch NCHW)."""
    N, Cin, H, W = w_nchw.shape
    assert (H, W) == (_W0, _W0)
    A = params["fb3"].shape[1]
    cdt = params["m1"].dtype

    # Batch block: large enough to amortize the per-step overhead and fill the MXU M
    # dimension, >= 2 grid steps when N allows (v7x has 2 TensorCores), multiple of 16
    # so bf16 blocks stay sublane-tile aligned.
    bn = _round_up(min(block_n, max(1, -(-N // min_grid_steps))), 16)
    n_pad = _round_up(N, bn)
    grid = n_pad // bn

    # Input layout prep (API boundary only): NCHW -> (15, N, 15*Cin); dim0 = image row,
    # sublanes = batch, lanes = w*Cin + c.  Pad batch to a multiple of the block.
    x = jnp.transpose(w_nchw, (2, 0, 3, 1)).reshape(H, N, W * Cin).astype(cdt)
    s2 = s.astype(cdt)
    if n_pad != N:
        x = jnp.pad(x, ((0, 0), (0, n_pad - N), (0, 0)))
        s2 = jnp.pad(s2, ((0, n_pad - N), (0, 0)))

    weight_names = ["m1", "b1", "pe", "po", "m2", "b2",
                    "f1c", "f1s", "fb1", "f2", "fb2", "f3", "fb3"]
    weights = [params[k] for k in weight_names]
    weight_specs = [pl.BlockSpec(wt.shape, _const_index_map(wt.ndim)) for wt in weights]

    out = pl.pallas_call(
        _policy_kernel,
        out_shape=jax.ShapeDtypeStruct((n_pad, A), jnp.float32),
        grid_spec=pltpu.PrefetchScalarGridSpec(
            num_scalar_prefetch=0,
            grid=(grid,),
            in_specs=[pl.BlockSpec((H, bn, W * Cin), lambda n: (0, n, 0)),
                      pl.BlockSpec((bn, 4), lambda n: (n, 0))] + weight_specs,
            out_specs=pl.BlockSpec((bn, A), lambda n: (n, 0)),
        ),
        compiler_params=pltpu.CompilerParams(dimension_semantics=("parallel",)),
    )(x, s2, *weights)
    return out[:N]


# ----------------------------- parameter init / packing ----------------------

def init_raw_params(key, in_channels, h_channels, hidden_dim, n_actions):
    """PyTorch-layout parameters with PyTorch-default-style uniform init."""
    ks = jax.random.split(key, 10)

    def u(k, shape, fan_in):
        b = float(fan_in) ** -0.5
        return jax.random.uniform(k, shape, jnp.float32, -b, b)

    conv_size = h_channels * _W2 * _W2        # conv output of a 15x15 window
    input_dim = conv_size + 4
    return dict(
        c1w=u(ks[0], (h_channels, in_channels, 3, 3), in_channels * 9),
        c1b=u(ks[1], (h_channels,), in_channels * 9),
        c2w=u(ks[2], (h_channels, h_channels, 3, 3), h_channels * 9),
        c2b=u(ks[3], (h_channels,), h_channels * 9),
        f1w=u(ks[4], (hidden_dim, input_dim), input_dim),
        f1b=u(ks[5], (hidden_dim,), input_dim),
        f2w=u(ks[6], (hidden_dim, hidden_dim), hidden_dim),
        f2b=u(ks[7], (hidden_dim,), hidden_dim),
        f3w=u(ks[8], (n_actions, hidden_dim), hidden_dim),
        f3b=u(ks[9], (n_actions,), hidden_dim),
    )


def pack_params(raw, Cin, Hc, hidden, n_actions, compute_dtype=jnp.bfloat16):
    """Build banded conv matrices, pool selectors and flatten-permuted fc1 weights."""
    c1w = np.asarray(raw["c1w"], np.float32); c1b = np.asarray(raw["c1b"], np.float32)
    c2w = np.asarray(raw["c2w"], np.float32); c2b = np.asarray(raw["c2b"], np.float32)
    f1w = np.asarray(raw["f1w"], np.float32); f1b = np.asarray(raw["f1b"], np.float32)
    f2w = np.asarray(raw["f2w"], np.float32); f2b = np.asarray(raw["f2b"], np.float32)
    f3w = np.asarray(raw["f3w"], np.float32); f3b = np.asarray(raw["f3b"], np.float32)

    K, W0, W1, WP, W2 = _K, _W0, _W1, _WP, _W2

    # conv1 band matrices: m1[kh][(w+kw)*Cin + c, w*Hc + o] = c1w[o, c, kh, kw]
    m1 = np.zeros((K, W0 * Cin, W1 * Hc), np.float32)
    for kh in range(K):
        for kw in range(K):
            blk = c1w[:, :, kh, kw].T                      # (Cin, Hc)
            for w in range(W1):
                m1[kh, (w + kw) * Cin:(w + kw + 1) * Cin, w * Hc:(w + 1) * Hc] = blk
    b1 = np.tile(c1b, W1).reshape(1, W1 * Hc)

    # even / odd column-block selectors (13*Hc -> 6*Hc), exact 0/1 matrices
    pe = np.zeros((W1 * Hc, WP * Hc), np.float32)
    po = np.zeros((W1 * Hc, WP * Hc), np.float32)
    for wp in range(WP):
        for ch in range(Hc):
            pe[(2 * wp) * Hc + ch, wp * Hc + ch] = 1.0
            po[(2 * wp + 1) * Hc + ch, wp * Hc + ch] = 1.0

    # conv2 band matrices: m2[kh][(w+kw)*Hc + c, w*Hc + o] = c2w[o, c, kh, kw]
    m2 = np.zeros((K, WP * Hc, W2 * Hc), np.float32)
    for kh in range(K):
        for kw in range(K):
            blk = c2w[:, :, kh, kw].T                      # (Hc_in, Hc_out)
            for w in range(W2):
                m2[kh, (w + kw) * Hc:(w + kw + 1) * Hc, w * Hc:(w + 1) * Hc] = blk
    b2 = np.tile(c2b, W2).reshape(1, W2 * Hc)

    # fc1: conv block rows permuted from PyTorch NCHW flatten order (o*16 + h*4 + w)
    # to the kernel's (row h, lane = w*Hc + o) activation layout; state block separate.
    conv_size = Hc * W2 * W2
    f1c = np.zeros((W2, W2 * Hc, hidden), np.float32)
    for h2 in range(W2):
        for w2 in range(W2):
            for o in range(Hc):
                f1c[h2, w2 * Hc + o, :] = f1w[:, o * (W2 * W2) + h2 * W2 + w2]
    f1s = f1w[:, conv_size:conv_size + 4].T.copy()          # (4, hidden)

    j = lambda a: jnp.asarray(a, compute_dtype)              # MXU operands -> bf16
    jf = lambda a: jnp.asarray(a, jnp.float32)                # biases stay f32
    return dict(m1=j(m1), b1=jf(b1), pe=j(pe), po=j(po), m2=j(m2), b2=jf(b2),
                f1c=j(f1c), f1s=j(f1s), fb1=jf(f1b.reshape(1, -1)),
                f2=j(np.ascontiguousarray(f2w.T)), fb2=jf(f2b.reshape(1, -1)),
                f3=j(np.ascontiguousarray(f3w.T)), fb3=jf(f3b.reshape(1, -1)))


# ----------------------------- pure-JAX reference (for validation) -----------

def reference_forward(raw, s, w_nchw):
    hp = jax.lax.Precision.HIGHEST
    x = w_nchw.astype(jnp.float32)
    y = jax.lax.conv_general_dilated(x, raw["c1w"], (1, 1), "VALID",
                                     dimension_numbers=("NCHW", "OIHW", "NCHW"),
                                     precision=hp)
    y = jnp.maximum(y + raw["c1b"][None, :, None, None], 0.0)
    y = jax.lax.reduce_window(y, -jnp.inf, jax.lax.max, (1, 1, 2, 2), (1, 1, 2, 2), "VALID")
    y = jax.lax.conv_general_dilated(y, raw["c2w"], (1, 1), "VALID",
                                     dimension_numbers=("NCHW", "OIHW", "NCHW"),
                                     precision=hp)
    y = jnp.maximum(y + raw["c2b"][None, :, None, None], 0.0)
    fw = y.reshape(y.shape[0], -1)
    z = jnp.concatenate([fw, s.astype(jnp.float32)], axis=1)
    h = jnp.maximum(jnp.dot(z, raw["f1w"].T, precision=hp) + raw["f1b"], 0.0)
    h = jnp.maximum(jnp.dot(h, raw["f2w"].T, precision=hp) + raw["f2b"], 0.0)
    logits = jnp.dot(h, raw["f3w"].T, precision=hp) + raw["f3b"]
    return jax.nn.softmax(logits, axis=-1)


# ----------------------------- main -------------------------------------------

if __name__ == "__main__":
    N, Cin, Hc, hidden_dim, n_actions = 32, 4, 8, 32, 4

    key = jax.random.PRNGKey(0)
    k_params, k_s, k_w = jax.random.split(key, 3)

    raw = init_raw_params(k_params, Cin, Hc, hidden_dim, n_actions)
    params = pack_params(raw, Cin, Hc, hidden_dim, n_actions)

    s = jax.random.normal(k_s, (N, 4), jnp.float32)               # state features
    w = jax.random.normal(k_w, (N, Cin, 15, 15), jnp.float32)     # NCHW 15x15 window

    probs = jax.block_until_ready(jax.jit(policy_forward)(params, s, w))
    ref = jax.block_until_ready(reference_forward(raw, s, w))

    assert probs.shape == (N, n_actions), probs.shape
    assert bool(jnp.all(jnp.isfinite(probs)))
    assert bool(jnp.allclose(jnp.sum(probs, axis=-1), 1.0, atol=1e-3))
    assert bool(jnp.allclose(probs, ref, atol=2e-2)), (probs, ref)
    print("KERNEL_OK")
</pallas_src>

<mosaic_0001>
module attributes {stable_mosaic.version = 11 : i64} {
  func.func @_policy_kernel(%arg0: i32, %arg1: memref<15x16x60xbf16, #tpu.memory_space<vmem>>, %arg2: memref<16x4xbf16, #tpu.memory_space<vmem>>, %arg3: memref<3x60x104xbf16, #tpu.memory_space<vmem>>, %arg4: memref<1x104xf32, #tpu.memory_space<vmem>>, %arg5: memref<104x48xbf16, #tpu.memory_space<vmem>>, %arg6: memref<104x48xbf16, #tpu.memory_space<vmem>>, %arg7: memref<3x48x32xbf16, #tpu.memory_space<vmem>>, %arg8: memref<1x32xf32, #tpu.memory_space<vmem>>, %arg9: memref<4x32x32xbf16, #tpu.memory_space<vmem>>, %arg10: memref<4x32xbf16, #tpu.memory_space<vmem>>, %arg11: memref<1x32xf32, #tpu.memory_space<vmem>>, %arg12: memref<32x32xbf16, #tpu.memory_space<vmem>>, %arg13: memref<1x32xf32, #tpu.memory_space<vmem>>, %arg14: memref<32x4xbf16, #tpu.memory_space<vmem>>, %arg15: memref<1x4xf32, #tpu.memory_space<vmem>>, %arg16: memref<16x4xf32, #tpu.memory_space<vmem>>) attributes {dimension_semantics = [#tpu.dimension_semantics<parallel>], iteration_bounds = array<i64: 2>, scalar_prefetch = 0 : i64, scratch_operands = 0 : i64, tpu.core_type = #tpu.core_type<tc>, window_params = [{transform_indices = @transform_0, window_bounds = array<i64: 15, 16, 60>}, {transform_indices = @transform_1, window_bounds = array<i64: 16, 4>}, {pipeline_mode = #tpu.pipeline_mode<synchronous>, transform_indices = @transform_2, window_bounds = array<i64: 3, 60, 104>}, {pipeline_mode = #tpu.pipeline_mode<synchronous>, transform_indices = @transform_3, window_bounds = array<i64: 1, 104>}, {pipeline_mode = #tpu.pipeline_mode<synchronous>, transform_indices = @transform_4, window_bounds = array<i64: 104, 48>}, {pipeline_mode = #tpu.pipeline_mode<synchronous>, transform_indices = @transform_5, window_bounds = array<i64: 104, 48>}, {pipeline_mode = #tpu.pipeline_mode<synchronous>, transform_indices = @transform_6, window_bounds = array<i64: 3, 48, 32>}, {pipeline_mode = #tpu.pipeline_mode<synchronous>, transform_indices = @transform_7, window_bounds = array<i64: 1, 32>}, {pipeline_mode = #tpu.pipeline_mode<synchronous>, transform_indices = @transform_8, window_bounds = array<i64: 4, 32, 32>}, {pipeline_mode = #tpu.pipeline_mode<synchronous>, transform_indices = @transform_9, window_bounds = array<i64: 4, 32>}, {pipeline_mode = #tpu.pipeline_mode<synchronous>, transform_indices = @transform_10, window_bounds = array<i64: 1, 32>}, {pipeline_mode = #tpu.pipeline_mode<synchronous>, transform_indices = @transform_11, window_bounds = array<i64: 32, 32>}, {pipeline_mode = #tpu.pipeline_mode<synchronous>, transform_indices = @transform_12, window_bounds = array<i64: 1, 32>}, {pipeline_mode = #tpu.pipeline_mode<synchronous>, transform_indices = @transform_13, window_bounds = array<i64: 32, 4>}, {pipeline_mode = #tpu.pipeline_mode<synchronous>, transform_indices = @transform_14, window_bounds = array<i64: 1, 4>}, {transform_indices = @transform_15, window_bounds = array<i64: 16, 4>}]} {
    %c0 = arith.constant 0 : index
    %c0_0 = arith.constant 0 : index
    %c0_1 = arith.constant 0 : index
    %0 = vector.load %arg1[%c0, %c0_0, %c0_1] : memref<15x16x60xbf16, #tpu.memory_space<vmem>>, vector<1x16x60xbf16>
    %1 = vector.shape_cast %0 : vector<1x16x60xbf16> to vector<16x60xbf16>
    %c0_2 = arith.constant 0 : index
    %c0_3 = arith.constant 0 : index
    %c0_4 = arith.constant 0 : index
    %2 = vector.load %arg3[%c0_2, %c0_3, %c0_4] : memref<3x60x104xbf16, #tpu.memory_space<vmem>>, vector<1x60x104xbf16>
    %3 = vector.shape_cast %2 : vector<1x60x104xbf16> to vector<60x104xbf16>
    %cst = arith.constant dense<0.000000e+00> : vector<16x104xf32>
    %4 = tpu.matmul %1, %3, %cst {dimension_numbers = #tpu.dot_dimension_numbers<[1], [0], [0], [1], [0, 0, 1, 1], [], []>} : vector<16x60xbf16>, vector<60x104xbf16>, vector<16x104xf32> -> vector<16x104xf32>
    %c1 = arith.constant 1 : index
    %c0_5 = arith.constant 0 : index
    %c0_6 = arith.constant 0 : index
    %5 = vector.load %arg1[%c1, %c0_5, %c0_6] : memref<15x16x60xbf16, #tpu.memory_space<vmem>>, vector<1x16x60xbf16>
    %6 = vector.shape_cast %5 : vector<1x16x60xbf16> to vector<16x60xbf16>
    %c1_7 = arith.constant 1 : index
    %c0_8 = arith.constant 0 : index
    %c0_9 = arith.constant 0 : index
    %7 = vector.load %arg3[%c1_7, %c0_8, %c0_9] : memref<3x60x104xbf16, #tpu.memory_space<vmem>>, vector<1x60x104xbf16>
    %8 = vector.shape_cast %7 : vector<1x60x104xbf16> to vector<60x104xbf16>
    %cst_10 = arith.constant dense<0.000000e+00> : vector<16x104xf32>
    %9 = tpu.matmul %6, %8, %cst_10 {dimension_numbers = #tpu.dot_dimension_numbers<[1], [0], [0], [1], [0, 0, 1, 1], [], []>} : vector<16x60xbf16>, vector<60x104xbf16>, vector<16x104xf32> -> vector<16x104xf32>
    %10 = arith.addf %4, %9 : vector<16x104xf32>
    %c2 = arith.constant 2 : index
    %c0_11 = arith.constant 0 : index
    %c0_12 = arith.constant 0 : index
    %11 = vector.load %arg1[%c2, %c0_11, %c0_12] : memref<15x16x60xbf16, #tpu.memory_space<vmem>>, vector<1x16x60xbf16>
    %12 = vector.shape_cast %11 : vector<1x16x60xbf16> to vector<16x60xbf16>
    %c2_13 = arith.constant 2 : index
    %c0_14 = arith.constant 0 : index
    %c0_15 = arith.constant 0 : index
    %13 = vector.load %arg3[%c2_13, %c0_14, %c0_15] : memref<3x60x104xbf16, #tpu.memory_space<vmem>>, vector<1x60x104xbf16>
    %14 = vector.shape_cast %13 : vector<1x60x104xbf16> to vector<60x104xbf16>
    %cst_16 = arith.constant dense<0.000000e+00> : vector<16x104xf32>
    %15 = tpu.matmul %12, %14, %cst_16 {dimension_numbers = #tpu.dot_dimension_numbers<[1], [0], [0], [1], [0, 0, 1, 1], [], []>} : vector<16x60xbf16>, vector<60x104xbf16>, vector<16x104xf32> -> vector<16x104xf32>
    %16 = arith.addf %10, %15 : vector<16x104xf32>
    %c0_17 = arith.constant 0 : index
    %c0_18 = arith.constant 0 : index
    %17 = vector.load %arg4[%c0_17, %c0_18] : memref<1x104xf32, #tpu.memory_space<vmem>>, vector<1x104xf32>
    %18 = vector.broadcast %17 : vector<1x104xf32> to vector<16x104xf32>
    %19 = arith.addf %16, %18 : vector<16x104xf32>
    %cst_19 = arith.constant 0.000000e+00 : f32
    %20 = vector.broadcast %cst_19 : f32 to vector<16x104xf32>
    %21 = arith.maximumf %19, %20 : vector<16x104xf32>
    %c1_20 = arith.constant 1 : index
    %c0_21 = arith.constant 0 : index
    %c0_22 = arith.constant 0 : index
    %22 = vector.load %arg1[%c1_20, %c0_21, %c0_22] : memref<15x16x60xbf16, #tpu.memory_space<vmem>>, vector<1x16x60xbf16>
    %23 = vector.shape_cast %22 : vector<1x16x60xbf16> to vector<16x60xbf16>
    %c0_23 = arith.constant 0 : index
    %c0_24 = arith.constant 0 : index
    %c0_25 = arith.constant 0 : index
    %24 = vector.load %arg3[%c0_23, %c0_24, %c0_25] : memref<3x60x104xbf16, #tpu.memory_space<vmem>>, vector<1x60x104xbf16>
    %25 = vector.shape_cast %24 : vector<1x60x104xbf16> to vector<60x104xbf16>
    %cst_26 = arith.constant dense<0.000000e+00> : vector<16x104xf32>
    %26 = tpu.matmul %23, %25, %cst_26 {dimension_numbers = #tpu.dot_dimension_numbers<[1], [0], [0], [1], [0, 0, 1, 1], [], []>} : vector<16x60xbf16>, vector<60x104xbf16>, vector<16x104xf32> -> vector<16x104xf32>
    %c2_27 = arith.constant 2 : index
    %c0_28 = arith.constant 0 : index
    %c0_29 = arith.constant 0 : index
    %27 = vector.load %arg1[%c2_27, %c0_28, %c0_29] : memref<15x16x60xbf16, #tpu.memory_space<vmem>>, vector<1x16x60xbf16>
    %28 = vector.shape_cast %27 : vector<1x16x60xbf16> to vector<16x60xbf16>
    %c1_30 = arith.constant 1 : index
    %c0_31 = arith.constant 0 : index
    %c0_32 = arith.constant 0 : index
    %29 = vector.load %arg3[%c1_30, %c0_31, %c0_32] : memref<3x60x104xbf16, #tpu.memory_space<vmem>>, vector<1x60x104xbf16>
    %30 = vector.shape_cast %29 : vector<1x60x104xbf16> to vector<60x104xbf16>
    %cst_33 = arith.constant dense<0.000000e+00> : vector<16x104xf32>
    %31 = tpu.matmul %28, %30, %cst_33 {dimension_numbers = #tpu.dot_dimension_numbers<[1], [0], [0], [1], [0, 0, 1, 1], [], []>} : vector<16x60xbf16>, vector<60x104xbf16>, vector<16x104xf32> -> vector<16x104xf32>
    %32 = arith.addf %26, %31 : vector<16x104xf32>
    %c3 = arith.constant 3 : index
    %c0_34 = arith.constant 0 : index
    %c0_35 = arith.constant 0 : index
    %33 = vector.load %arg1[%c3, %c0_34, %c0_35] : memref<15x16x60xbf16, #tpu.memory_space<vmem>>, vector<1x16x60xbf16>
    %34 = vector.shape_cast %33 : vector<1x16x60xbf16> to vector<16x60xbf16>
    %c2_36 = arith.constant 2 : index
    %c0_37 = arith.constant 0 : index
    %c0_38 = arith.constant 0 : index
    %35 = vector.load %arg3[%c2_36, %c0_37, %c0_38] : memref<3x60x104xbf16, #tpu.memory_space<vmem>>, vector<1x60x104xbf16>
    %36 = vector.shape_cast %35 : vector<1x60x104xbf16> to vector<60x104xbf16>
    %cst_39 = arith.constant dense<0.000000e+00> : vector<16x104xf32>
    %37 = tpu.matmul %34, %36, %cst_39 {dimension_numbers = #tpu.dot_dimension_numbers<[1], [0], [0], [1], [0, 0, 1, 1], [], []>} : vector<16x60xbf16>, vector<60x104xbf16>, vector<16x104xf32> -> vector<16x104xf32>
    %38 = arith.addf %32, %37 : vector<16x104xf32>
    %c0_40 = arith.constant 0 : index
    %c0_41 = arith.constant 0 : index
    %39 = vector.load %arg4[%c0_40, %c0_41] : memref<1x104xf32, #tpu.memory_space<vmem>>, vector<1x104xf32>
    %40 = vector.broadcast %39 : vector<1x104xf32> to vector<16x104xf32>
    %41 = arith.addf %38, %40 : vector<16x104xf32>
    %cst_42 = arith.constant 0.000000e+00 : f32
    %42 = vector.broadcast %cst_42 : f32 to vector<16x104xf32>
    %43 = arith.maximumf %41, %42 : vector<16x104xf32>
    %44 = arith.maximumf %21, %43 : vector<16x104xf32>
    %45 = arith.truncf %44 : vector<16x104xf32> to vector<16x104xbf16>
    %c0_43 = arith.constant 0 : index
    %c0_44 = arith.constant 0 : index
    %46 = vector.load %arg5[%c0_43, %c0_44] : memref<104x48xbf16, #tpu.memory_space<vmem>>, vector<104x48xbf16>
    %cst_45 = arith.constant dense<0.000000e+00> : vector<16x48xf32>
    %47 = tpu.matmul %45, %46, %cst_45 {dimension_numbers = #tpu.dot_dimension_numbers<[1], [0], [0], [1], [0, 0, 1, 1], [], []>} : vector<16x104xbf16>, vector<104x48xbf16>, vector<16x48xf32> -> vector<16x48xf32>
    %c0_46 = arith.constant 0 : index
    %c0_47 = arith.constant 0 : index
    %48 = vector.load %arg6[%c0_46, %c0_47] : memref<104x48xbf16, #tpu.memory_space<vmem>>, vector<104x48xbf16>
    %cst_48 = arith.constant dense<0.000000e+00> : vector<16x48xf32>
    %49 = tpu.matmul %45, %48, %cst_48 {dimension_numbers = #tpu.dot_dimension_numbers<[1], [0], [0], [1], [0, 0, 1, 1], [], []>} : vector<16x104xbf16>, vector<104x48xbf16>, vector<16x48xf32> -> vector<16x48xf32>
    %50 = arith.maximumf %47, %49 : vector<16x48xf32>
    %51 = arith.truncf %50 : vector<16x48xf32> to vector<16x48xbf16>
    %c2_49 = arith.constant 2 : index
    %c0_50 = arith.constant 0 : index
    %c0_51 = arith.constant 0 : index
    %52 = vector.load %arg1[%c2_49, %c0_50, %c0_51] : memref<15x16x60xbf16, #tpu.memory_space<vmem>>, vector<1x16x60xbf16>
    %53 = vector.shape_cast %52 : vector<1x16x60xbf16> to vector<16x60xbf16>
    %c0_52 = arith.constant 0 : index
    %c0_53 = arith.constant 0 : index
    %c0_54 = arith.constant 0 : index
    %54 = vector.load %arg3[%c0_52, %c0_53, %c0_54] : memref<3x60x104xbf16, #tpu.memory_space<vmem>>, vector<1x60x104xbf16>
    %55 = vector.shape_cast %54 : vector<1x60x104xbf16> to vector<60x104xbf16>
    %cst_55 = arith.constant dense<0.000000e+00> : vector<16x104xf32>
    %56 = tpu.matmul %53, %55, %cst_55 {dimension_numbers = #tpu.dot_dimension_numbers<[1], [0], [0], [1], [0, 0, 1, 1], [], []>} : vector<16x60xbf16>, vector<60x104xbf16>, vector<16x104xf32> -> vector<16x104xf32>
    %c3_56 = arith.constant 3 : index
    %c0_57 = arith.constant 0 : index
    %c0_58 = arith.constant 0 : index
    %57 = vector.load %arg1[%c3_56, %c0_57, %c0_58] : memref<15x16x60xbf16, #tpu.memory_space<vmem>>, vector<1x16x60xbf16>
    %58 = vector.shape_cast %57 : vector<1x16x60xbf16> to vector<16x60xbf16>
    %c1_59 = arith.constant 1 : index
    %c0_60 = arith.constant 0 : index
    %c0_61 = arith.constant 0 : index
    %59 = vector.load %arg3[%c1_59, %c0_60, %c0_61] : memref<3x60x104xbf16, #tpu.memory_space<vmem>>, vector<1x60x104xbf16>
    %60 = vector.shape_cast %59 : vector<1x60x104xbf16> to vector<60x104xbf16>
    %cst_62 = arith.constant dense<0.000000e+00> : vector<16x104xf32>
    %61 = tpu.matmul %58, %60, %cst_62 {dimension_numbers = #tpu.dot_dimension_numbers<[1], [0], [0], [1], [0, 0, 1, 1], [], []>} : vector<16x60xbf16>, vector<60x104xbf16>, vector<16x104xf32> -> vector<16x104xf32>
    %62 = arith.addf %56, %61 : vector<16x104xf32>
    %c4 = arith.constant 4 : index
    %c0_63 = arith.constant 0 : index
    %c0_64 = arith.constant 0 : index
    %63 = vector.load %arg1[%c4, %c0_63, %c0_64] : memref<15x16x60xbf16, #tpu.memory_space<vmem>>, vector<1x16x60xbf16>
    %64 = vector.shape_cast %63 : vector<1x16x60xbf16> to vector<16x60xbf16>
    %c2_65 = arith.constant 2 : index
    %c0_66 = arith.constant 0 : index
    %c0_67 = arith.constant 0 : index
    %65 = vector.load %arg3[%c2_65, %c0_66, %c0_67] : memref<3x60x104xbf16, #tpu.memory_space<vmem>>, vector<1x60x104xbf16>
    %66 = vector.shape_cast %65 : vector<1x60x104xbf16> to vector<60x104xbf16>
    %cst_68 = arith.constant dense<0.000000e+00> : vector<16x104xf32>
    %67 = tpu.matmul %64, %66, %cst_68 {dimension_numbers = #tpu.dot_dimension_numbers<[1], [0], [0], [1], [0, 0, 1, 1], [], []>} : vector<16x60xbf16>, vector<60x104xbf16>, vector<16x104xf32> -> vector<16x104xf32>
    %68 = arith.addf %62, %67 : vector<16x104xf32>
    %c0_69 = arith.constant 0 : index
    %c0_70 = arith.constant 0 : index
    %69 = vector.load %arg4[%c0_69, %c0_70] : memref<1x104xf32, #tpu.memory_space<vmem>>, vector<1x104xf32>
    %70 = vector.broadcast %69 : vector<1x104xf32> to vector<16x104xf32>
    %71 = arith.addf %68, %70 : vector<16x104xf32>
    %cst_71 = arith.constant 0.000000e+00 : f32
    %72 = vector.broadcast %cst_71 : f32 to vector<16x104xf32>
    %73 = arith.maximumf %71, %72 : vector<16x104xf32>
    %c3_72 = arith.constant 3 : index
    %c0_73 = arith.constant 0 : index
    %c0_74 = arith.constant 0 : index
    %74 = vector.load %arg1[%c3_72, %c0_73, %c0_74] : memref<15x16x60xbf16, #tpu.memory_space<vmem>>, vector<1x16x60xbf16>
    %75 = vector.shape_cast %74 : vector<1x16x60xbf16> to vector<16x60xbf16>
    %c0_75 = arith.constant 0 : index
    %c0_76 = arith.constant 0 : index
    %c0_77 = arith.constant 0 : index
    %76 = vector.load %arg3[%c0_75, %c0_76, %c0_77] : memref<3x60x104xbf16, #tpu.memory_space<vmem>>, vector<1x60x104xbf16>
    %77 = vector.shape_cast %76 : vector<1x60x104xbf16> to vector<60x104xbf16>
    %cst_78 = arith.constant dense<0.000000e+00> : vector<16x104xf32>
    %78 = tpu.matmul %75, %77, %cst_78 {dimension_numbers = #tpu.dot_dimension_numbers<[1], [0], [0], [1], [0, 0, 1, 1], [], []>} : vector<16x60xbf16>, vector<60x104xbf16>, vector<16x104xf32> -> vector<16x104xf32>
    %c4_79 = arith.constant 4 : index
    %c0_80 = arith.constant 0 : index
    %c0_81 = arith.constant 0 : index
    %79 = vector.load %arg1[%c4_79, %c0_80, %c0_81] : memref<15x16x60xbf16, #tpu.memory_space<vmem>>, vector<1x16x60xbf16>
    %80 = vector.shape_cast %79 : vector<1x16x60xbf16> to vector<16x60xbf16>
    %c1_82 = arith.constant 1 : index
    %c0_83 = arith.constant 0 : index
    %c0_84 = arith.constant 0 : index
    %81 = vector.load %arg3[%c1_82, %c0_83, %c0_84] : memref<3x60x104xbf16, #tpu.memory_space<vmem>>, vector<1x60x104xbf16>
    %82 = vector.shape_cast %81 : vector<1x60x104xbf16> to vector<60x104xbf16>
    %cst_85 = arith.constant dense<0.000000e+00> : vector<16x104xf32>
    %83 = tpu.matmul %80, %82, %cst_85 {dimension_numbers = #tpu.dot_dimension_numbers<[1], [0], [0], [1], [0, 0, 1, 1], [], []>} : vector<16x60xbf16>, vector<60x104xbf16>, vector<16x104xf32> -> vector<16x104xf32>
    %84 = arith.addf %78, %83 : vector<16x104xf32>
    %c5 = arith.constant 5 : index
    %c0_86 = arith.constant 0 : index
    %c0_87 = arith.constant 0 : index
    %85 = vector.load %arg1[%c5, %c0_86, %c0_87] : memref<15x16x60xbf16, #tpu.memory_space<vmem>>, vector<1x16x60xbf16>
    %86 = vector.shape_cast %85 : vector<1x16x60xbf16> to vector<16x60xbf16>
    %c2_88 = arith.constant 2 : index
    %c0_89 = arith.constant 0 : index
    %c0_90 = arith.constant 0 : index
    %87 = vector.load %arg3[%c2_88, %c0_89, %c0_90] : memref<3x60x104xbf16, #tpu.memory_space<vmem>>, vector<1x60x104xbf16>
    %88 = vector.shape_cast %87 : vector<1x60x104xbf16> to vector<60x104xbf16>
    %cst_91 = arith.constant dense<0.000000e+00> : vector<16x104xf32>
    %89 = tpu.matmul %86, %88, %cst_91 {dimension_numbers = #tpu.dot_dimension_numbers<[1], [0], [0], [1], [0, 0, 1, 1], [], []>} : vector<16x60xbf16>, vector<60x104xbf16>, vector<16x104xf32> -> vector<16x104xf32>
    %90 = arith.addf %84, %89 : vector<16x104xf32>
    %c0_92 = arith.constant 0 : index
    %c0_93 = arith.constant 0 : index
    %91 = vector.load %arg4[%c0_92, %c0_93] : memref<1x104xf32, #tpu.memory_space<vmem>>, vector<1x104xf32>
    %92 = vector.broadcast %91 : vector<1x104xf32> to vector<16x104xf32>
    %93 = arith.addf %90, %92 : vector<16x104xf32>
    %cst_94 = arith.constant 0.000000e+00 : f32
    %94 = vector.broadcast %cst_94 : f32 to vector<16x104xf32>
    %95 = arith.maximumf %93, %94 : vector<16x104xf32>
    %96 = arith.maximumf %73, %95 : vector<16x104xf32>
    %97 = arith.truncf %96 : vector<16x104xf32> to vector<16x104xbf16>
    %c0_95 = arith.constant 0 : index
    %c0_96 = arith.constant 0 : index
    %98 = vector.load %arg5[%c0_95, %c0_96] : memref<104x48xbf16, #tpu.memory_space<vmem>>, vector<104x48xbf16>
    %cst_97 = arith.constant dense<0.000000e+00> : vector<16x48xf32>
    %99 = tpu.matmul %97, %98, %cst_97 {dimension_numbers = #tpu.dot_dimension_numbers<[1], [0], [0], [1], [0, 0, 1, 1], [], []>} : vector<16x104xbf16>, vector<104x48xbf16>, vector<16x48xf32> -> vector<16x48xf32>
    %c0_98 = arith.constant 0 : index
    %c0_99 = arith.constant 0 : index
    %100 = vector.load %arg6[%c0_98, %c0_99] : memref<104x48xbf16, #tpu.memory_space<vmem>>, vector<104x48xbf16>
    %cst_100 = arith.constant dense<0.000000e+00> : vector<16x48xf32>
    %101 = tpu.matmul %97, %100, %cst_100 {dimension_numbers = #tpu.dot_dimension_numbers<[1], [0], [0], [1], [0, 0, 1, 1], [], []>} : vector<16x104xbf16>, vector<104x48xbf16>, vector<16x48xf32> -> vector<16x48xf32>
    %102 = arith.maximumf %99, %101 : vector<16x48xf32>
    %103 = arith.truncf %102 : vector<16x48xf32> to vector<16x48xbf16>
    %c4_101 = arith.constant 4 : index
    %c0_102 = arith.constant 0 : index
    %c0_103 = arith.constant 0 : index
    %104 = vector.load %arg1[%c4_101, %c0_102, %c0_103] : memref<15x16x60xbf16, #tpu.memory_space<vmem>>, vector<1x16x60xbf16>
    %105 = vector.shape_cast %104 : vector<1x16x60xbf16> to vector<16x60xbf16>
    %c0_104 = arith.constant 0 : index
    %c0_105 = arith.constant 0 : index
    %c0_106 = arith.constant 0 : index
    %106 = vector.load %arg3[%c0_104, %c0_105, %c0_106] : memref<3x60x104xbf16, #tpu.memory_space<vmem>>, vector<1x60x104xbf16>
    %107 = vector.shape_cast %106 : vector<1x60x104xbf16> to vector<60x104xbf16>
    %cst_107 = arith.constant dense<0.000000e+00> : vector<16x104xf32>
    %108 = tpu.matmul %105, %107, %cst_107 {dimension_numbers = #tpu.dot_dimension_numbers<[1], [0], [0], [1], [0, 0, 1, 1], [], []>} : vector<16x60xbf16>, vector<60x104xbf16>, vector<16x104xf32> -> vector<16x104xf32>
    %c5_108 = arith.constant 5 : index
    %c0_109 = arith.constant 0 : index
    %c0_110 = arith.constant 0 : index
    %109 = vector.load %arg1[%c5_108, %c0_109, %c0_110] : memref<15x16x60xbf16, #tpu.memory_space<vmem>>, vector<1x16x60xbf16>
    %110 = vector.shape_cast %109 : vector<1x16x60xbf16> to vector<16x60xbf16>
    %c1_111 = arith.constant 1 : index
    %c0_112 = arith.constant 0 : index
    %c0_113 = arith.constant 0 : index
    %111 = vector.load %arg3[%c1_111, %c0_112, %c0_113] : memref<3x60x104xbf16, #tpu.memory_space<vmem>>, vector<1x60x104xbf16>
    %112 = vector.shape_cast %111 : vector<1x60x104xbf16> to vector<60x104xbf16>
    %cst_114 = arith.constant dense<0.000000e+00> : vector<16x104xf32>
    %113 = tpu.matmul %110, %112, %cst_114 {dimension_numbers = #tpu.dot_dimension_numbers<[1], [0], [0], [1], [0, 0, 1, 1], [], []>} : vector<16x60xbf16>, vector<60x104xbf16>, vector<16x104xf32> -> vector<16x104xf32>
    %114 = arith.addf %108, %113 : vector<16x104xf32>
    %c6 = arith.constant 6 : index
    %c0_115 = arith.constant 0 : index
    %c0_116 = arith.constant 0 : index
    %115 = vector.load %arg1[%c6, %c0_115, %c0_116] : memref<15x16x60xbf16, #tpu.memory_space<vmem>>, vector<1x16x60xbf16>
    %116 = vector.shape_cast %115 : vector<1x16x60xbf16> to vector<16x60xbf16>
    %c2_117 = arith.constant 2 : index
    %c0_118 = arith.constant 0 : index
    %c0_119 = arith.constant 0 : index
    %117 = vector.load %arg3[%c2_117, %c0_118, %c0_119] : memref<3x60x104xbf16, #tpu.memory_space<vmem>>, vector<1x60x104xbf16>
    %118 = vector.shape_cast %117 : vector<1x60x104xbf16> to vector<60x104xbf16>
    %cst_120 = arith.constant dense<0.000000e+00> : vector<16x104xf32>
    %119 = tpu.matmul %116, %118, %cst_120 {dimension_numbers = #tpu.dot_dimension_numbers<[1], [0], [0], [1], [0, 0, 1, 1], [], []>} : vector<16x60xbf16>, vector<60x104xbf16>, vector<16x104xf32> -> vector<16x104xf32>
    %120 = arith.addf %114, %119 : vector<16x104xf32>
    %c0_121 = arith.constant 0 : index
    %c0_122 = arith.constant 0 : index
    %121 = vector.load %arg4[%c0_121, %c0_122] : memref<1x104xf32, #tpu.memory_space<vmem>>, vector<1x104xf32>
    %122 = vector.broadcast %121 : vector<1x104xf32> to vector<16x104xf32>
    %123 = arith.addf %120, %122 : vector<16x104xf32>
    %cst_123 = arith.constant 0.000000e+00 : f32
    %124 = vector.broadcast %cst_123 : f32 to vector<16x104xf32>
    %125 = arith.maximumf %123, %124 : vector<16x104xf32>
    %c5_124 = arith.constant 5 : index
    %c0_125 = arith.constant 0 : index
    %c0_126 = arith.constant 0 : index
    %126 = vector.load %arg1[%c5_124, %c0_125, %c0_126] : memref<15x16x60xbf16, #tpu.memory_space<vmem>>, vector<1x16x60xbf16>
    %127 = vector.shape_cast %126 : vector<1x16x60xbf16> to vector<16x60xbf16>
    %c0_127 = arith.constant 0 : index
    %c0_128 = arith.constant 0 : index
    %c0_129 = arith.constant 0 : index
    %128 = vector.load %arg3[%c0_127, %c0_128, %c0_129] : memref<3x60x104xbf16, #tpu.memory_space<vmem>>, vector<1x60x104xbf16>
    %129 = vector.shape_cast %128 : vector<1x60x104xbf16> to vector<60x104xbf16>
    %cst_130 = arith.constant dense<0.000000e+00> : vector<16x104xf32>
    %130 = tpu.matmul %127, %129, %cst_130 {dimension_numbers = #tpu.dot_dimension_numbers<[1], [0], [0], [1], [0, 0, 1, 1], [], []>} : vector<16x60xbf16>, vector<60x104xbf16>, vector<16x104xf32> -> vector<16x104xf32>
    %c6_131 = arith.constant 6 : index
    %c0_132 = arith.constant 0 : index
    %c0_133 = arith.constant 0 : index
    %131 = vector.load %arg1[%c6_131, %c0_132, %c0_133] : memref<15x16x60xbf16, #tpu.memory_space<vmem>>, vector<1x16x60xbf16>
    %132 = vector.shape_cast %131 : vector<1x16x60xbf16> to vector<16x60xbf16>
    %c1_134 = arith.constant 1 : index
    %c0_135 = arith.constant 0 : index
    %c0_136 = arith.constant 0 : index
    %133 = vector.load %arg3[%c1_134, %c0_135, %c0_136] : memref<3x60x104xbf16, #tpu.memory_space<vmem>>, vector<1x60x104xbf16>
    %134 = vector.shape_cast %133 : vector<1x60x104xbf16> to vector<60x104xbf16>
    %cst_137 = arith.constant dense<0.000000e+00> : vector<16x104xf32>
    %135 = tpu.matmul %132, %134, %cst_137 {dimension_numbers = #tpu.dot_dimension_numbers<[1], [0], [0], [1], [0, 0, 1, 1], [], []>} : vector<16x60xbf16>, vector<60x104xbf16>, vector<16x104xf32> -> vector<16x104xf32>
    %136 = arith.addf %130, %135 : vector<16x104xf32>
    %c7 = arith.constant 7 : index
    %c0_138 = arith.constant 0 : index
    %c0_139 = arith.constant 0 : index
    %137 = vector.load %arg1[%c7, %c0_138, %c0_139] : memref<15x16x60xbf16, #tpu.memory_space<vmem>>, vector<1x16x60xbf16>
    %138 = vector.shape_cast %137 : vector<1x16x60xbf16> to vector<16x60xbf16>
    %c2_140 = arith.constant 2 : index
    %c0_141 = arith.constant 0 : index
    %c0_142 = arith.constant 0 : index
    %139 = vector.load %arg3[%c2_140, %c0_141, %c0_142] : memref<3x60x104xbf16, #tpu.memory_space<vmem>>, vector<1x60x104xbf16>
    %140 = vector.shape_cast %139 : vector<1x60x104xbf16> to vector<60x104xbf16>
    %cst_143 = arith.constant dense<0.000000e+00> : vector<16x104xf32>
    %141 = tpu.matmul %138, %140, %cst_143 {dimension_numbers = #tpu.dot_dimension_numbers<[1], [0], [0], [1], [0, 0, 1, 1], [], []>} : vector<16x60xbf16>, vector<60x104xbf16>, vector<16x104xf32> -> vector<16x104xf32>
    %142 = arith.addf %136, %141 : vector<16x104xf32>
    %c0_144 = arith.constant 0 : index
    %c0_145 = arith.constant 0 : index
    %143 = vector.load %arg4[%c0_144, %c0_145] : memref<1x104xf32, #tpu.memory_space<vmem>>, vector<1x104xf32>
    %144 = vector.broadcast %143 : vector<1x104xf32> to vector<16x104xf32>
    %145 = arith.addf %142, %144 : vector<16x104xf32>
    %cst_146 = arith.constant 0.000000e+00 : f32
    %146 = vector.broadcast %cst_146 : f32 to vector<16x104xf32>
    %147 = arith.maximumf %145, %146 : vector<16x104xf32>
    %148 = arith.maximumf %125, %147 : vector<16x104xf32>
    %149 = arith.truncf %148 : vector<16x104xf32> to vector<16x104xbf16>
    %c0_147 = arith.constant 0 : index
    %c0_148 = arith.constant 0 : index
    %150 = vector.load %arg5[%c0_147, %c0_148] : memref<104x48xbf16, #tpu.memory_space<vmem>>, vector<104x48xbf16>
    %cst_149 = arith.constant dense<0.000000e+00> : vector<16x48xf32>
    %151 = tpu.matmul %149, %150, %cst_149 {dimension_numbers = #tpu.dot_dimension_numbers<[1], [0], [0], [1], [0, 0, 1, 1], [], []>} : vector<16x104xbf16>, vector<104x48xbf16>, vector<16x48xf32> -> vector<16x48xf32>
    %c0_150 = arith.constant 0 : index
    %c0_151 = arith.constant 0 : index
    %152 = vector.load %arg6[%c0_150, %c0_151] : memref<104x48xbf16, #tpu.memory_space<vmem>>, vector<104x48xbf16>
    %cst_152 = arith.constant dense<0.000000e+00> : vector<16x48xf32>
    %153 = tpu.matmul %149, %152, %cst_152 {dimension_numbers = #tpu.dot_dimension_numbers<[1], [0], [0], [1], [0, 0, 1, 1], [], []>} : vector<16x104xbf16>, vector<104x48xbf16>, vector<16x48xf32> -> vector<16x48xf32>
    %154 = arith.maximumf %151, %153 : vector<16x48xf32>
    %155 = arith.truncf %154 : vector<16x48xf32> to vector<16x48xbf16>
    %c6_153 = arith.constant 6 : index
    %c0_154 = arith.constant 0 : index
    %c0_155 = arith.constant 0 : index
    %156 = vector.load %arg1[%c6_153, %c0_154, %c0_155] : memref<15x16x60xbf16, #tpu.memory_space<vmem>>, vector<1x16x60xbf16>
    %157 = vector.shape_cast %156 : vector<1x16x60xbf16> to vector<16x60xbf16>
    %c0_156 = arith.constant 0 : index
    %c0_157 = arith.constant 0 : index
    %c0_158 = arith.constant 0 : index
    %158 = vector.load %arg3[%c0_156, %c0_157, %c0_158] : memref<3x60x104xbf16, #tpu.memory_space<vmem>>, vector<1x60x104xbf16>
    %159 = vector.shape_cast %158 : vector<1x60x104xbf16> to vector<60x104xbf16>
    %cst_159 = arith.constant dense<0.000000e+00> : vector<16x104xf32>
    %160 = tpu.matmul %157, %159, %cst_159 {dimension_numbers = #tpu.dot_dimension_numbers<[1], [0], [0], [1], [0, 0, 1, 1], [], []>} : vector<16x60xbf16>, vector<60x104xbf16>, vector<16x104xf32> -> vector<16x104xf32>
    %c7_160 = arith.constant 7 : index
    %c0_161 = arith.constant 0 : index
    %c0_162 = arith.constant 0 : index
    %161 = vector.load %arg1[%c7_160, %c0_161, %c0_162] : memref<15x16x60xbf16, #tpu.memory_space<vmem>>, vector<1x16x60xbf16>
    %162 = vector.shape_cast %161 : vector<1x16x60xbf16> to vector<16x60xbf16>
    %c1_163 = arith.constant 1 : index
    %c0_164 = arith.constant 0 : index
    %c0_165 = arith.constant 0 : index
    %163 = vector.load %arg3[%c1_163, %c0_164, %c0_165] : memref<3x60x104xbf16, #tpu.memory_space<vmem>>, vector<1x60x104xbf16>
    %164 = vector.shape_cast %163 : vector<1x60x104xbf16> to vector<60x104xbf16>
    %cst_166 = arith.constant dense<0.000000e+00> : vector<16x104xf32>
    %165 = tpu.matmul %162, %164, %cst_166 {dimension_numbers = #tpu.dot_dimension_numbers<[1], [0], [0], [1], [0, 0, 1, 1], [], []>} : vector<16x60xbf16>, vector<60x104xbf16>, vector<16x104xf32> -> vector<16x104xf32>
    %166 = arith.addf %160, %165 : vector<16x104xf32>
    %c8 = arith.constant 8 : index
    %c0_167 = arith.constant 0 : index
    %c0_168 = arith.constant 0 : index
    %167 = vector.load %arg1[%c8, %c0_167, %c0_168] : memref<15x16x60xbf16, #tpu.memory_space<vmem>>, vector<1x16x60xbf16>
    %168 = vector.shape_cast %167 : vector<1x16x60xbf16> to vector<16x60xbf16>
    %c2_169 = arith.constant 2 : index
    %c0_170 = arith.constant 0 : index
    %c0_171 = arith.constant 0 : index
    %169 = vector.load %arg3[%c2_169, %c0_170, %c0_171] : memref<3x60x104xbf16, #tpu.memory_space<vmem>>, vector<1x60x104xbf16>
    %170 = vector.shape_cast %169 : vector<1x60x104xbf16> to vector<60x104xbf16>
    %cst_172 = arith.constant dense<0.000000e+00> : vector<16x104xf32>
    %171 = tpu.matmul %168, %170, %cst_172 {dimension_numbers = #tpu.dot_dimension_numbers<[1], [0], [0], [1], [0, 0, 1, 1], [], []>} : vector<16x60xbf16>, vector<60x104xbf16>, vector<16x104xf32> -> vector<16x104xf32>
    %172 = arith.addf %166, %171 : vector<16x104xf32>
    %c0_173 = arith.constant 0 : index
    %c0_174 = arith.constant 0 : index
    %173 = vector.load %arg4[%c0_173, %c0_174] : memref<1x104xf32, #tpu.memory_space<vmem>>, vector<1x104xf32>
    %174 = vector.broadcast %173 : vector<1x104xf32> to vector<16x104xf32>
    %175 = arith.addf %172, %174 : vector<16x104xf32>
    %cst_175 = arith.constant 0.000000e+00 : f32
    %176 = vector.broadcast %cst_175 : f32 to vector<16x104xf32>
    %177 = arith.maximumf %175, %176 : vector<16x104xf32>
    %c7_176 = arith.constant 7 : index
    %c0_177 = arith.constant 0 : index
    %c0_178 = arith.constant 0 : index
    %178 = vector.load %arg1[%c7_176, %c0_177, %c0_178] : memref<15x16x60xbf16, #tpu.memory_space<vmem>>, vector<1x16x60xbf16>
    %179 = vector.shape_cast %178 : vector<1x16x60xbf16> to vector<16x60xbf16>
    %c0_179 = arith.constant 0 : index
    %c0_180 = arith.constant 0 : index
    %c0_181 = arith.constant 0 : index
    %180 = vector.load %arg3[%c0_179, %c0_180, %c0_181] : memref<3x60x104xbf16, #tpu.memory_space<vmem>>, vector<1x60x104xbf16>
    %181 = vector.shape_cast %180 : vector<1x60x104xbf16> to vector<60x104xbf16>
    %cst_182 = arith.constant dense<0.000000e+00> : vector<16x104xf32>
    %182 = tpu.matmul %179, %181, %cst_182 {dimension_numbers = #tpu.dot_dimension_numbers<[1], [0], [0], [1], [0, 0, 1, 1], [], []>} : vector<16x60xbf16>, vector<60x104xbf16>, vector<16x104xf32> -> vector<16x104xf32>
    %c8_183 = arith.constant 8 : index
    %c0_184 = arith.constant 0 : index
    %c0_185 = arith.constant 0 : index
    %183 = vector.load %arg1[%c8_183, %c0_184, %c0_185] : memref<15x16x60xbf16, #tpu.memory_space<vmem>>, vector<1x16x60xbf16>
    %184 = vector.shape_cast %183 : vector<1x16x60xbf16> to vector<16x60xbf16>
    %c1_186 = arith.constant 1 : index
    %c0_187 = arith.constant 0 : index
    %c0_188 = arith.constant 0 : index
    %185 = vector.load %arg3[%c1_186, %c0_187, %c0_188] : memref<3x60x104xbf16, #tpu.memory_space<vmem>>, vector<1x60x104xbf16>
    %186 = vector.shape_cast %185 : vector<1x60x104xbf16> to vector<60x104xbf16>
    %cst_189 = arith.constant dense<0.000000e+00> : vector<16x104xf32>
    %187 = tpu.matmul %184, %186, %cst_189 {dimension_numbers = #tpu.dot_dimension_numbers<[1], [0], [0], [1], [0, 0, 1, 1], [], []>} : vector<16x60xbf16>, vector<60x104xbf16>, vector<16x104xf32> -> vector<16x104xf32>
    %188 = arith.addf %182, %187 : vector<16x104xf32>
    %c9 = arith.constant 9 : index
    %c0_190 = arith.constant 0 : index
    %c0_191 = arith.constant 0 : index
    %189 = vector.load %arg1[%c9, %c0_190, %c0_191] : memref<15x16x60xbf16, #tpu.memory_space<vmem>>, vector<1x16x60xbf16>
    %190 = vector.shape_cast %189 : vector<1x16x60xbf16> to vector<16x60xbf16>
    %c2_192 = arith.constant 2 : index
    %c0_193 = arith.constant 0 : index
    %c0_194 = arith.constant 0 : index
    %191 = vector.load %arg3[%c2_192, %c0_193, %c0_194] : memref<3x60x104xbf16, #tpu.memory_space<vmem>>, vector<1x60x104xbf16>
    %192 = vector.shape_cast %191 : vector<1x60x104xbf16> to vector<60x104xbf16>
    %cst_195 = arith.constant dense<0.000000e+00> : vector<16x104xf32>
    %193 = tpu.matmul %190, %192, %cst_195 {dimension_numbers = #tpu.dot_dimension_numbers<[1], [0], [0], [1], [0, 0, 1, 1], [], []>} : vector<16x60xbf16>, vector<60x104xbf16>, vector<16x104xf32> -> vector<16x104xf32>
    %194 = arith.addf %188, %193 : vector<16x104xf32>
    %c0_196 = arith.constant 0 : index
    %c0_197 = arith.constant 0 : index
    %195 = vector.load %arg4[%c0_196, %c0_197] : memref<1x104xf32, #tpu.memory_space<vmem>>, vector<1x104xf32>
    %196 = vector.broadcast %195 : vector<1x104xf32> to vector<16x104xf32>
    %197 = arith.addf %194, %196 : vector<16x104xf32>
    %cst_198 = arith.constant 0.000000e+00 : f32
    %198 = vector.broadcast %cst_198 : f32 to vector<16x104xf32>
    %199 = arith.maximumf %197, %198 : vector<16x104xf32>
    %200 = arith.maximumf %177, %199 : vector<16x104xf32>
    %201 = arith.truncf %200 : vector<16x104xf32> to vector<16x104xbf16>
    %c0_199 = arith.constant 0 : index
    %c0_200 = arith.constant 0 : index
    %202 = vector.load %arg5[%c0_199, %c0_200] : memref<104x48xbf16, #tpu.memory_space<vmem>>, vector<104x48xbf16>
    %cst_201 = arith.constant dense<0.000000e+00> : vector<16x48xf32>
    %203 = tpu.matmul %201, %202, %cst_201 {dimension_numbers = #tpu.dot_dimension_numbers<[1], [0], [0], [1], [0, 0, 1, 1], [], []>} : vector<16x104xbf16>, vector<104x48xbf16>, vector<16x48xf32> -> vector<16x48xf32>
    %c0_202 = arith.constant 0 : index
    %c0_203 = arith.constant 0 : index
    %204 = vector.load %arg6[%c0_202, %c0_203] : memref<104x48xbf16, #tpu.memory_space<vmem>>, vector<104x48xbf16>
    %cst_204 = arith.constant dense<0.000000e+00> : vector<16x48xf32>
    %205 = tpu.matmul %201, %204, %cst_204 {dimension_numbers = #tpu.dot_dimension_numbers<[1], [0], [0], [1], [0, 0, 1, 1], [], []>} : vector<16x104xbf16>, vector<104x48xbf16>, vector<16x48xf32> -> vector<16x48xf32>
    %206 = arith.maximumf %203, %205 : vector<16x48xf32>
    %207 = arith.truncf %206 : vector<16x48xf32> to vector<16x48xbf16>
    %c8_205 = arith.constant 8 : index
    %c0_206 = arith.constant 0 : index
    %c0_207 = arith.constant 0 : index
    %208 = vector.load %arg1[%c8_205, %c0_206, %c0_207] : memref<15x16x60xbf16, #tpu.memory_space<vmem>>, vector<1x16x60xbf16>
    %209 = vector.shape_cast %208 : vector<1x16x60xbf16> to vector<16x60xbf16>
    %c0_208 = arith.constant 0 : index
    %c0_209 = arith.constant 0 : index
    %c0_210 = arith.constant 0 : index
    %210 = vector.load %arg3[%c0_208, %c0_209, %c0_210] : memref<3x60x104xbf16, #tpu.memory_space<vmem>>, vector<1x60x104xbf16>
    %211 = vector.shape_cast %210 : vector<1x60x104xbf16> to vector<60x104xbf16>
    %cst_211 = arith.constant dense<0.000000e+00> : vector<16x104xf32>
    %212 = tpu.matmul %209, %211, %cst_211 {dimension_numbers = #tpu.dot_dimension_numbers<[1], [0], [0], [1], [0, 0, 1, 1], [], []>} : vector<16x60xbf16>, vector<60x104xbf16>, vector<16x104xf32> -> vector<16x104xf32>
    %c9_212 = arith.constant 9 : index
    %c0_213 = arith.constant 0 : index
    %c0_214 = arith.constant 0 : index
    %213 = vector.load %arg1[%c9_212, %c0_213, %c0_214] : memref<15x16x60xbf16, #tpu.memory_space<vmem>>, vector<1x16x60xbf16>
    %214 = vector.shape_cast %213 : vector<1x16x60xbf16> to vector<16x60xbf16>
    %c1_215 = arith.constant 1 : index
    %c0_216 = arith.constant 0 : index
    %c0_217 = arith.constant 0 : index
    %215 = vector.load %arg3[%c1_215, %c0_216, %c0_217] : memref<3x60x104xbf16, #tpu.memory_space<vmem>>, vector<1x60x104xbf16>
    %216 = vector.shape_cast %215 : vector<1x60x104xbf16> to vector<60x104xbf16>
    %cst_218 = arith.constant dense<0.000000e+00> : vector<16x104xf32>
    %217 = tpu.matmul %214, %216, %cst_218 {dimension_numbers = #tpu.dot_dimension_numbers<[1], [0], [0], [1], [0, 0, 1, 1], [], []>} : vector<16x60xbf16>, vector<60x104xbf16>, vector<16x104xf32> -> vector<16x104xf32>
    %218 = arith.addf %212, %217 : vector<16x104xf32>
    %c10 = arith.constant 10 : index
    %c0_219 = arith.constant 0 : index
    %c0_220 = arith.constant 0 : index
    %219 = vector.load %arg1[%c10, %c0_219, %c0_220] : memref<15x16x60xbf16, #tpu.memory_space<vmem>>, vector<1x16x60xbf16>
    %220 = vector.shape_cast %219 : vector<1x16x60xbf16> to vector<16x60xbf16>
    %c2_221 = arith.constant 2 : index
    %c0_222 = arith.constant 0 : index
    %c0_223 = arith.constant 0 : index
    %221 = vector.load %arg3[%c2_221, %c0_222, %c0_223] : memref<3x60x104xbf16, #tpu.memory_space<vmem>>, vector<1x60x104xbf16>
    %222 = vector.shape_cast %221 : vector<1x60x104xbf16> to vector<60x104xbf16>
    %cst_224 = arith.constant dense<0.000000e+00> : vector<16x104xf32>
    %223 = tpu.matmul %220, %222, %cst_224 {dimension_numbers = #tpu.dot_dimension_numbers<[1], [0], [0], [1], [0, 0, 1, 1], [], []>} : vector<16x60xbf16>, vector<60x104xbf16>, vector<16x104xf32> -> vector<16x104xf32>
    %224 = arith.addf %218, %223 : vector<16x104xf32>
    %c0_225 = arith.constant 0 : index
    %c0_226 = arith.constant 0 : index
    %225 = vector.load %arg4[%c0_225, %c0_226] : memref<1x104xf32, #tpu.memory_space<vmem>>, vector<1x104xf32>
    %226 = vector.broadcast %225 : vector<1x104xf32> to vector<16x104xf32>
    %227 = arith.addf %224, %226 : vector<16x104xf32>
    %cst_227 = arith.constant 0.000000e+00 : f32
    %228 = vector.broadcast %cst_227 : f32 to vector<16x104xf32>
    %229 = arith.maximumf %227, %228 : vector<16x104xf32>
    %c9_228 = arith.constant 9 : index
    %c0_229 = arith.constant 0 : index
    %c0_230 = arith.constant 0 : index
    %230 = vector.load %arg1[%c9_228, %c0_229, %c0_230] : memref<15x16x60xbf16, #tpu.memory_space<vmem>>, vector<1x16x60xbf16>
    %231 = vector.shape_cast %230 : vector<1x16x60xbf16> to vector<16x60xbf16>
    %c0_231 = arith.constant 0 : index
    %c0_232 = arith.constant 0 : index
    %c0_233 = arith.constant 0 : index
    %232 = vector.load %arg3[%c0_231, %c0_232, %c0_233] : memref<3x60x104xbf16, #tpu.memory_space<vmem>>, vector<1x60x104xbf16>
    %233 = vector.shape_cast %232 : vector<1x60x104xbf16> to vector<60x104xbf16>
    %cst_234 = arith.constant dense<0.000000e+00> : vector<16x104xf32>
    %234 = tpu.matmul %231, %233, %cst_234 {dimension_numbers = #tpu.dot_dimension_numbers<[1], [0], [0], [1], [0, 0, 1, 1], [], []>} : vector<16x60xbf16>, vector<60x104xbf16>, vector<16x104xf32> -> vector<16x104xf32>
    %c10_235 = arith.constant 10 : index
    %c0_236 = arith.constant 0 : index
    %c0_237 = arith.constant 0 : index
    %235 = vector.load %arg1[%c10_235, %c0_236, %c0_237] : memref<15x16x60xbf16, #tpu.memory_space<vmem>>, vector<1x16x60xbf16>
    %236 = vector.shape_cast %235 : vector<1x16x60xbf16> to vector<16x60xbf16>
    %c1_238 = arith.constant 1 : index
    %c0_239 = arith.constant 0 : index
    %c0_240 = arith.constant 0 : index
    %237 = vector.load %arg3[%c1_238, %c0_239, %c0_240] : memref<3x60x104xbf16, #tpu.memory_space<vmem>>, vector<1x60x104xbf16>
    %238 = vector.shape_cast %237 : vector<1x60x104xbf16> to vector<60x104xbf16>
    %cst_241 = arith.constant dense<0.000000e+00> : vector<16x104xf32>
    %239 = tpu.matmul %236, %238, %cst_241 {dimension_numbers = #tpu.dot_dimension_numbers<[1], [0], [0], [1], [0, 0, 1, 1], [], []>} : vector<16x60xbf16>, vector<60x104xbf16>, vector<16x104xf32> -> vector<16x104xf32>
    %240 = arith.addf %234, %239 : vector<16x104xf32>
    %c11 = arith.constant 11 : index
    %c0_242 = arith.constant 0 : index
    %c0_243 = arith.constant 0 : index
    %241 = vector.load %arg1[%c11, %c0_242, %c0_243] : memref<15x16x60xbf16, #tpu.memory_space<vmem>>, vector<1x16x60xbf16>
    %242 = vector.shape_cast %241 : vector<1x16x60xbf16> to vector<16x60xbf16>
    %c2_244 = arith.constant 2 : index
    %c0_245 = arith.constant 0 : index
    %c0_246 = arith.constant 0 : index
    %243 = vector.load %arg3[%c2_244, %c0_245, %c0_246] : memref<3x60x104xbf16, #tpu.memory_space<vmem>>, vector<1x60x104xbf16>
    %244 = vector.shape_cast %243 : vector<1x60x104xbf16> to vector<60x104xbf16>
    %cst_247 = arith.constant dense<0.000000e+00> : vector<16x104xf32>
    %245 = tpu.matmul %242, %244, %cst_247 {dimension_numbers = #tpu.dot_dimension_numbers<[1], [0], [0], [1], [0, 0, 1, 1], [], []>} : vector<16x60xbf16>, vector<60x104xbf16>, vector<16x104xf32> -> vector<16x104xf32>
    %246 = arith.addf %240, %245 : vector<16x104xf32>
    %c0_248 = arith.constant 0 : index
    %c0_249 = arith.constant 0 : index
    %247 = vector.load %arg4[%c0_248, %c0_249] : memref<1x104xf32, #tpu.memory_space<vmem>>, vector<1x104xf32>
    %248 = vector.broadcast %247 : vector<1x104xf32> to vector<16x104xf32>
    %249 = arith.addf %246, %248 : vector<16x104xf32>
    %cst_250 = arith.constant 0.000000e+00 : f32
    %250 = vector.broadcast %cst_250 : f32 to vector<16x104xf32>
    %251 = arith.maximumf %249, %250 : vector<16x104xf32>
    %252 = arith.maximumf %229, %251 : vector<16x104xf32>
    %253 = arith.truncf %252 : vector<16x104xf32> to vector<16x104xbf16>
    %c0_251 = arith.constant 0 : index
    %c0_252 = arith.constant 0 : index
    %254 = vector.load %arg5[%c0_251, %c0_252] : memref<104x48xbf16, #tpu.memory_space<vmem>>, vector<104x48xbf16>
    %cst_253 = arith.constant dense<0.000000e+00> : vector<16x48xf32>
    %255 = tpu.matmul %253, %254, %cst_253 {dimension_numbers = #tpu.dot_dimension_numbers<[1], [0], [0], [1], [0, 0, 1, 1], [], []>} : vector<16x104xbf16>, vector<104x48xbf16>, vector<16x48xf32> -> vector<16x48xf32>
    %c0_254 = arith.constant 0 : index
    %c0_255 = arith.constant 0 : index
    %256 = vector.load %arg6[%c0_254, %c0_255] : memref<104x48xbf16, #tpu.memory_space<vmem>>, vector<104x48xbf16>
    %cst_256 = arith.constant dense<0.000000e+00> : vector<16x48xf32>
    %257 = tpu.matmul %253, %256, %cst_256 {dimension_numbers = #tpu.dot_dimension_numbers<[1], [0], [0], [1], [0, 0, 1, 1], [], []>} : vector<16x104xbf16>, vector<104x48xbf16>, vector<16x48xf32> -> vector<16x48xf32>
    %258 = arith.maximumf %255, %257 : vector<16x48xf32>
    %259 = arith.truncf %258 : vector<16x48xf32> to vector<16x48xbf16>
    %c10_257 = arith.constant 10 : index
    %c0_258 = arith.constant 0 : index
    %c0_259 = arith.constant 0 : index
    %260 = vector.load %arg1[%c10_257, %c0_258, %c0_259] : memref<15x16x60xbf16, #tpu.memory_space<vmem>>, vector<1x16x60xbf16>
    %261 = vector.shape_cast %260 : vector<1x16x60xbf16> to vector<16x60xbf16>
    %c0_260 = arith.constant 0 : index
    %c0_261 = arith.constant 0 : index
    %c0_262 = arith.constant 0 : index
    %262 = vector.load %arg3[%c0_260, %c0_261, %c0_262] : memref<3x60x104xbf16, #tpu.memory_space<vmem>>, vector<1x60x104xbf16>
    %263 = vector.shape_cast %262 : vector<1x60x104xbf16> to vector<60x104xbf16>
    %cst_263 = arith.constant dense<0.000000e+00> : vector<16x104xf32>
    %264 = tpu.matmul %261, %263, %cst_263 {dimension_numbers = #tpu.dot_dimension_numbers<[1], [0], [0], [1], [0, 0, 1, 1], [], []>} : vector<16x60xbf16>, vector<60x104xbf16>, vector<16x104xf32> -> vector<16x104xf32>
    %c11_264 = arith.constant 11 : index
    %c0_265 = arith.constant 0 : index
    %c0_266 = arith.constant 0 : index
    %265 = vector.load %arg1[%c11_264, %c0_265, %c0_266] : memref<15x16x60xbf16, #tpu.memory_space<vmem>>, vector<1x16x60xbf16>
    %266 = vector.shape_cast %265 : vector<1x16x60xbf16> to vector<16x60xbf16>
    %c1_267 = arith.constant 1 : index
    %c0_268 = arith.constant 0 : index
    %c0_269 = arith.constant 0 : index
    %267 = vector.load %arg3[%c1_267, %c0_268, %c0_269] : memref<3x60x104xbf16, #tpu.memory_space<vmem>>, vector<1x60x104xbf16>
    %268 = vector.shape_cast %267 : vector<1x60x104xbf16> to vector<60x104xbf16>
    %cst_270 = arith.constant dense<0.000000e+00> : vector<16x104xf32>
    %269 = tpu.matmul %266, %268, %cst_270 {dimension_numbers = #tpu.dot_dimension_numbers<[1], [0], [0], [1], [0, 0, 1, 1], [], []>} : vector<16x60xbf16>, vector<60x104xbf16>, vector<16x104xf32> -> vector<16x104xf32>
    %270 = arith.addf %264, %269 : vector<16x104xf32>
    %c12 = arith.constant 12 : index
    %c0_271 = arith.constant 0 : index
    %c0_272 = arith.constant 0 : index
    %271 = vector.load %arg1[%c12, %c0_271, %c0_272] : memref<15x16x60xbf16, #tpu.memory_space<vmem>>, vector<1x16x60xbf16>
    %272 = vector.shape_cast %271 : vector<1x16x60xbf16> to vector<16x60xbf16>
    %c2_273 = arith.constant 2 : index
    %c0_274 = arith.constant 0 : index
    %c0_275 = arith.constant 0 : index
    %273 = vector.load %arg3[%c2_273, %c0_274, %c0_275] : memref<3x60x104xbf16, #tpu.memory_space<vmem>>, vector<1x60x104xbf16>
    %274 = vector.shape_cast %273 : vector<1x60x104xbf16> to vector<60x104xbf16>
    %cst_276 = arith.constant dense<0.000000e+00> : vector<16x104xf32>
    %275 = tpu.matmul %272, %274, %cst_276 {dimension_numbers = #tpu.dot_dimension_numbers<[1], [0], [0], [1], [0, 0, 1, 1], [], []>} : vector<16x60xbf16>, vector<60x104xbf16>, vector<16x104xf32> -> vector<16x104xf32>
    %276 = arith.addf %270, %275 : vector<16x104xf32>
    %c0_277 = arith.constant 0 : index
    %c0_278 = arith.constant 0 : index
    %277 = vector.load %arg4[%c0_277, %c0_278] : memref<1x104xf32, #tpu.memory_space<vmem>>, vector<1x104xf32>
    %278 = vector.broadcast %277 : vector<1x104xf32> to vector<16x104xf32>
    %279 = arith.addf %276, %278 : vector<16x104xf32>
    %cst_279 = arith.constant 0.000000e+00 : f32
    %280 = vector.broadcast %cst_279 : f32 to vector<16x104xf32>
    %281 = arith.maximumf %279, %280 : vector<16x104xf32>
    %c11_280 = arith.constant 11 : index
    %c0_281 = arith.constant 0 : index
    %c0_282 = arith.constant 0 : index
    %282 = vector.load %arg1[%c11_280, %c0_281, %c0_282] : memref<15x16x60xbf16, #tpu.memory_space<vmem>>, vector<1x16x60xbf16>
    %283 = vector.shape_cast %282 : vector<1x16x60xbf16> to vector<16x60xbf16>
    %c0_283 = arith.constant 0 : index
    %c0_284 = arith.constant 0 : index
    %c0_285 = arith.constant 0 : index
    %284 = vector.load %arg3[%c0_283, %c0_284, %c0_285] : memref<3x60x104xbf16, #tpu.memory_space<vmem>>, vector<1x60x104xbf16>
    %285 = vector.shape_cast %284 : vector<1x60x104xbf16> to vector<60x104xbf16>
    %cst_286 = arith.constant dense<0.000000e+00> : vector<16x104xf32>
    %286 = tpu.matmul %283, %285, %cst_286 {dimension_numbers = #tpu.dot_dimension_numbers<[1], [0], [0], [1], [0, 0, 1, 1], [], []>} : vector<16x60xbf16>, vector<60x104xbf16>, vector<16x104xf32> -> vector<16x104xf32>
    %c12_287 = arith.constant 12 : index
    %c0_288 = arith.constant 0 : index
    %c0_289 = arith.constant 0 : index
    %287 = vector.load %arg1[%c12_287, %c0_288, %c0_289] : memref<15x16x60xbf16, #tpu.memory_space<vmem>>, vector<1x16x60xbf16>
    %288 = vector.shape_cast %287 : vector<1x16x60xbf16> to vector<16x60xbf16>
    %c1_290 = arith.constant 1 : index
    %c0_291 = arith.constant 0 : index
    %c0_292 = arith.constant 0 : index
    %289 = vector.load %arg3[%c1_290, %c0_291, %c0_292] : memref<3x60x104xbf16, #tpu.memory_space<vmem>>, vector<1x60x104xbf16>
    %290 = vector.shape_cast %289 : vector<1x60x104xbf16> to vector<60x104xbf16>
    %cst_293 = arith.constant dense<0.000000e+00> : vector<16x104xf32>
    %291 = tpu.matmul %288, %290, %cst_293 {dimension_numbers = #tpu.dot_dimension_numbers<[1], [0], [0], [1], [0, 0, 1, 1], [], []>} : vector<16x60xbf16>, vector<60x104xbf16>, vector<16x104xf32> -> vector<16x104xf32>
    %292 = arith.addf %286, %291 : vector<16x104xf32>
    %c13 = arith.constant 13 : index
    %c0_294 = arith.constant 0 : index
    %c0_295 = arith.constant 0 : index
    %293 = vector.load %arg1[%c13, %c0_294, %c0_295] : memref<15x16x60xbf16, #tpu.memory_space<vmem>>, vector<1x16x60xbf16>
    %294 = vector.shape_cast %293 : vector<1x16x60xbf16> to vector<16x60xbf16>
    %c2_296 = arith.constant 2 : index
    %c0_297 = arith.constant 0 : index
    %c0_298 = arith.constant 0 : index
    %295 = vector.load %arg3[%c2_296, %c0_297, %c0_298] : memref<3x60x104xbf16, #tpu.memory_space<vmem>>, vector<1x60x104xbf16>
    %296 = vector.shape_cast %295 : vector<1x60x104xbf16> to vector<60x104xbf16>
    %cst_299 = arith.constant dense<0.000000e+00> : vector<16x104xf32>
    %297 = tpu.matmul %294, %296, %cst_299 {dimension_numbers = #tpu.dot_dimension_numbers<[1], [0], [0], [1], [0, 0, 1, 1], [], []>} : vector<16x60xbf16>, vector<60x104xbf16>, vector<16x104xf32> -> vector<16x104xf32>
    %298 = arith.addf %292, %297 : vector<16x104xf32>
    %c0_300 = arith.constant 0 : index
    %c0_301 = arith.constant 0 : index
    %299 = vector.load %arg4[%c0_300, %c0_301] : memref<1x104xf32, #tpu.memory_space<vmem>>, vector<1x104xf32>
    %300 = vector.broadcast %299 : vector<1x104xf32> to vector<16x104xf32>
    %301 = arith.addf %298, %300 : vector<16x104xf32>
    %cst_302 = arith.constant 0.000000e+00 : f32
    %302 = vector.broadcast %cst_302 : f32 to vector<16x104xf32>
    %303 = arith.maximumf %301, %302 : vector<16x104xf32>
    %304 = arith.maximumf %281, %303 : vector<16x104xf32>
    %305 = arith.truncf %304 : vector<16x104xf32> to vector<16x104xbf16>
    %c0_303 = arith.constant 0 : index
    %c0_304 = arith.constant 0 : index
    %306 = vector.load %arg5[%c0_303, %c0_304] : memref<104x48xbf16, #tpu.memory_space<vmem>>, vector<104x48xbf16>
    %cst_305 = arith.constant dense<0.000000e+00> : vector<16x48xf32>
    %307 = tpu.matmul %305, %306, %cst_305 {dimension_numbers = #tpu.dot_dimension_numbers<[1], [0], [0], [1], [0, 0, 1, 1], [], []>} : vector<16x104xbf16>, vector<104x48xbf16>, vector<16x48xf32> -> vector<16x48xf32>
    %c0_306 = arith.constant 0 : index
    %c0_307 = arith.constant 0 : index
    %308 = vector.load %arg6[%c0_306, %c0_307] : memref<104x48xbf16, #tpu.memory_space<vmem>>, vector<104x48xbf16>
    %cst_308 = arith.constant dense<0.000000e+00> : vector<16x48xf32>
    %309 = tpu.matmul %305, %308, %cst_308 {dimension_numbers = #tpu.dot_dimension_numbers<[1], [0], [0], [1], [0, 0, 1, 1], [], []>} : vector<16x104xbf16>, vector<104x48xbf16>, vector<16x48xf32> -> vector<16x48xf32>
    %310 = arith.maximumf %307, %309 : vector<16x48xf32>
    %311 = arith.truncf %310 : vector<16x48xf32> to vector<16x48xbf16>
    %c0_309 = arith.constant 0 : index
    %c0_310 = arith.constant 0 : index
    %312 = vector.load %arg2[%c0_309, %c0_310] : memref<16x4xbf16, #tpu.memory_space<vmem>>, vector<16x4xbf16>
    %c0_311 = arith.constant 0 : index
    %c0_312 = arith.constant 0 : index
    %313 = vector.load %arg10[%c0_311, %c0_312] : memref<4x32xbf16, #tpu.memory_space<vmem>>, vector<4x32xbf16>
    %cst_313 = arith.constant dense<0.000000e+00> : vector<16x32xf32>
    %314 = tpu.matmul %312, %313, %cst_313 {dimension_numbers = #tpu.dot_dimension_numbers<[1], [0], [0], [1], [0, 0, 1, 1], [], []>} : vector<16x4xbf16>, vector<4x32xbf16>, vector<16x32xf32> -> vector<16x32xf32>
    %c0_314 = arith.constant 0 : index
    %c0_315 = arith.constant 0 : index
    %c0_316 = arith.constant 0 : index
    %315 = vector.load %arg7[%c0_314, %c0_315, %c0_316] : memref<3x48x32xbf16, #tpu.memory_space<vmem>>, vector<1x48x32xbf16>
    %316 = vector.shape_cast %315 : vector<1x48x32xbf16> to vector<48x32xbf16>
    %cst_317 = arith.constant dense<0.000000e+00> : vector<16x32xf32>
    %317 = tpu.matmul %51, %316, %cst_317 {dimension_numbers = #tpu.dot_dimension_numbers<[1], [0], [0], [1], [0, 0, 1, 1], [], []>} : vector<16x48xbf16>, vector<48x32xbf16>, vector<16x32xf32> -> vector<16x32xf32>
    %c1_318 = arith.constant 1 : index
    %c0_319 = arith.constant 0 : index
    %c0_320 = arith.constant 0 : index
    %318 = vector.load %arg7[%c1_318, %c0_319, %c0_320] : memref<3x48x32xbf16, #tpu.memory_space<vmem>>, vector<1x48x32xbf16>
    %319 = vector.shape_cast %318 : vector<1x48x32xbf16> to vector<48x32xbf16>
    %cst_321 = arith.constant dense<0.000000e+00> : vector<16x32xf32>
    %320 = tpu.matmul %103, %319, %cst_321 {dimension_numbers = #tpu.dot_dimension_numbers<[1], [0], [0], [1], [0, 0, 1, 1], [], []>} : vector<16x48xbf16>, vector<48x32xbf16>, vector<16x32xf32> -> vector<16x32xf32>
    %321 = arith.addf %317, %320 : vector<16x32xf32>
    %c2_322 = arith.constant 2 : index
    %c0_323 = arith.constant 0 : index
    %c0_324 = arith.constant 0 : index
    %322 = vector.load %arg7[%c2_322, %c0_323, %c0_324] : memref<3x48x32xbf16, #tpu.memory_space<vmem>>, vector<1x48x32xbf16>
    %323 = vector.shape_cast %322 : vector<1x48x32xbf16> to vector<48x32xbf16>
    %cst_325 = arith.constant dense<0.000000e+00> : vector<16x32xf32>
    %324 = tpu.matmul %155, %323, %cst_325 {dimension_numbers = #tpu.dot_dimension_numbers<[1], [0], [0], [1], [0, 0, 1, 1], [], []>} : vector<16x48xbf16>, vector<48x32xbf16>, vector<16x32xf32> -> vector<16x32xf32>
    %325 = arith.addf %321, %324 : vector<16x32xf32>
    %c0_326 = arith.constant 0 : index
    %c0_327 = arith.constant 0 : index
    %326 = vector.load %arg8[%c0_326, %c0_327] : memref<1x32xf32, #tpu.memory_space<vmem>>, vector<1x32xf32>
    %327 = vector.broadcast %326 : vector<1x32xf32> to vector<16x32xf32>
    %328 = arith.addf %325, %327 : vector<16x32xf32>
    %cst_328 = arith.constant 0.000000e+00 : f32
    %329 = vector.broadcast %cst_328 : f32 to vector<16x32xf32>
    %330 = arith.maximumf %328, %329 : vector<16x32xf32>
    %331 = arith.truncf %330 : vector<16x32xf32> to vector<16x32xbf16>
    %c0_329 = arith.constant 0 : index
    %c0_330 = arith.constant 0 : index
    %c0_331 = arith.constant 0 : index
    %332 = vector.load %arg9[%c0_329, %c0_330, %c0_331] : memref<4x32x32xbf16, #tpu.memory_space<vmem>>, vector<1x32x32xbf16>
    %333 = vector.shape_cast %332 : vector<1x32x32xbf16> to vector<32x32xbf16>
    %cst_332 = arith.constant dense<0.000000e+00> : vector<16x32xf32>
    %334 = tpu.matmul %331, %333, %cst_332 {dimension_numbers = #tpu.dot_dimension_numbers<[1], [0], [0], [1], [0, 0, 1, 1], [], []>} : vector<16x32xbf16>, vector<32x32xbf16>, vector<16x32xf32> -> vector<16x32xf32>
    %335 = arith.addf %314, %334 : vector<16x32xf32>
    %c0_333 = arith.constant 0 : index
    %c0_334 = arith.constant 0 : index
    %c0_335 = arith.constant 0 : index
    %336 = vector.load %arg7[%c0_333, %c0_334, %c0_335] : memref<3x48x32xbf16, #tpu.memory_space<vmem>>, vector<1x48x32xbf16>
    %337 = vector.shape_cast %336 : vector<1x48x32xbf16> to vector<48x32xbf16>
    %cst_336 = arith.constant dense<0.000000e+00> : vector<16x32xf32>
    %338 = tpu.matmul %103, %337, %cst_336 {dimension_numbers = #tpu.dot_dimension_numbers<[1], [0], [0], [1], [0, 0, 1, 1], [], []>} : vector<16x48xbf16>, vector<48x32xbf16>, vector<16x32xf32> -> vector<16x32xf32>
    %c1_337 = arith.constant 1 : index
    %c0_338 = arith.constant 0 : index
    %c0_339 = arith.constant 0 : index
    %339 = vector.load %arg7[%c1_337, %c0_338, %c0_339] : memref<3x48x32xbf16, #tpu.memory_space<vmem>>, vector<1x48x32xbf16>
    %340 = vector.shape_cast %339 : vector<1x48x32xbf16> to vector<48x32xbf16>
    %cst_340 = arith.constant dense<0.000000e+00> : vector<16x32xf32>
    %341 = tpu.matmul %155, %340, %cst_340 {dimension_numbers = #tpu.dot_dimension_numbers<[1], [0], [0], [1], [0, 0, 1, 1], [], []>} : vector<16x48xbf16>, vector<48x32xbf16>, vector<16x32xf32> -> vector<16x32xf32>
    %342 = arith.addf %338, %341 : vector<16x32xf32>
    %c2_341 = arith.constant 2 : index
    %c0_342 = arith.constant 0 : index
    %c0_343 = arith.constant 0 : index
    %343 = vector.load %arg7[%c2_341, %c0_342, %c0_343] : memref<3x48x32xbf16, #tpu.memory_space<vmem>>, vector<1x48x32xbf16>
    %344 = vector.shape_cast %343 : vector<1x48x32xbf16> to vector<48x32xbf16>
    %cst_344 = arith.constant dense<0.000000e+00> : vector<16x32xf32>
    %345 = tpu.matmul %207, %344, %cst_344 {dimension_numbers = #tpu.dot_dimension_numbers<[1], [0], [0], [1], [0, 0, 1, 1], [], []>} : vector<16x48xbf16>, vector<48x32xbf16>, vector<16x32xf32> -> vector<16x32xf32>
    %346 = arith.addf %342, %345 : vector<16x32xf32>
    %c0_345 = arith.constant 0 : index
    %c0_346 = arith.constant 0 : index
    %347 = vector.load %arg8[%c0_345, %c0_346] : memref<1x32xf32, #tpu.memory_space<vmem>>, vector<1x32xf32>
    %348 = vector.broadcast %347 : vector<1x32xf32> to vector<16x32xf32>
    %349 = arith.addf %346, %348 : vector<16x32xf32>
    %cst_347 = arith.constant 0.000000e+00 : f32
    %350 = vector.broadcast %cst_347 : f32 to vector<16x32xf32>
    %351 = arith.maximumf %349, %350 : vector<16x32xf32>
    %352 = arith.truncf %351 : vector<16x32xf32> to vector<16x32xbf16>
    %c1_348 = arith.constant 1 : index
    %c0_349 = arith.constant 0 : index
    %c0_350 = arith.constant 0 : index
    %353 = vector.load %arg9[%c1_348, %c0_349, %c0_350] : memref<4x32x32xbf16, #tpu.memory_space<vmem>>, vector<1x32x32xbf16>
    %354 = vector.shape_cast %353 : vector<1x32x32xbf16> to vector<32x32xbf16>
    %cst_351 = arith.constant dense<0.000000e+00> : vector<16x32xf32>
    %355 = tpu.matmul %352, %354, %cst_351 {dimension_numbers = #tpu.dot_dimension_numbers<[1], [0], [0], [1], [0, 0, 1, 1], [], []>} : vector<16x32xbf16>, vector<32x32xbf16>, vector<16x32xf32> -> vector<16x32xf32>
    %356 = arith.addf %335, %355 : vector<16x32xf32>
    %c0_352 = arith.constant 0 : index
    %c0_353 = arith.constant 0 : index
    %c0_354 = arith.constant 0 : index
    %357 = vector.load %arg7[%c0_352, %c0_353, %c0_354] : memref<3x48x32xbf16, #tpu.memory_space<vmem>>, vector<1x48x32xbf16>
    %358 = vector.shape_cast %357 : vector<1x48x32xbf16> to vector<48x32xbf16>
    %cst_355 = arith.constant dense<0.000000e+00> : vector<16x32xf32>
    %359 = tpu.matmul %155, %358, %cst_355 {dimension_numbers = #tpu.dot_dimension_numbers<[1], [0], [0], [1], [0, 0, 1, 1], [], []>} : vector<16x48xbf16>, vector<48x32xbf16>, vector<16x32xf32> -> vector<16x32xf32>
    %c1_356 = arith.constant 1 : index
    %c0_357 = arith.constant 0 : index
    %c0_358 = arith.constant 0 : index
    %360 = vector.load %arg7[%c1_356, %c0_357, %c0_358] : memref<3x48x32xbf16, #tpu.memory_space<vmem>>, vector<1x48x32xbf16>
    %361 = vector.shape_cast %360 : vector<1x48x32xbf16> to vector<48x32xbf16>
    %cst_359 = arith.constant dense<0.000000e+00> : vector<16x32xf32>
    %362 = tpu.matmul %207, %361, %cst_359 {dimension_numbers = #tpu.dot_dimension_numbers<[1], [0], [0], [1], [0, 0, 1, 1], [], []>} : vector<16x48xbf16>, vector<48x32xbf16>, vector<16x32xf32> -> vector<16x32xf32>
    %363 = arith.addf %359, %362 : vector<16x32xf32>
    %c2_360 = arith.constant 2 : index
    %c0_361 = arith.constant 0 : index
    %c0_362 = arith.constant 0 : index
    %364 = vector.load %arg7[%c2_360, %c0_361, %c0_362] : memref<3x48x32xbf16, #tpu.memory_space<vmem>>, vector<1x48x32xbf16>
    %365 = vector.shape_cast %364 : vector<1x48x32xbf16> to vector<48x32xbf16>
    %cst_363 = arith.constant dense<0.000000e+00> : vector<16x32xf32>
    %366 = tpu.matmul %259, %365, %cst_363 {dimension_numbers = #tpu.dot_dimension_numbers<[1], [0], [0], [1], [0, 0, 1, 1], [], []>} : vector<16x48xbf16>, vector<48x32xbf16>, vector<16x32xf32> -> vector<16x32xf32>
    %367 = arith.addf %363, %366 : vector<16x32xf32>
    %c0_364 = arith.constant 0 : index
    %c0_365 = arith.constant 0 : index
    %368 = vector.load %arg8[%c0_364, %c0_365] : memref<1x32xf32, #tpu.memory_space<vmem>>, vector<1x32xf32>
    %369 = vector.broadcast %368 : vector<1x32xf32> to vector<16x32xf32>
    %370 = arith.addf %367, %369 : vector<16x32xf32>
    %cst_366 = arith.constant 0.000000e+00 : f32
    %371 = vector.broadcast %cst_366 : f32 to vector<16x32xf32>
    %372 = arith.maximumf %370, %371 : vector<16x32xf32>
    %373 = arith.truncf %372 : vector<16x32xf32> to vector<16x32xbf16>
    %c2_367 = arith.constant 2 : index
    %c0_368 = arith.constant 0 : index
    %c0_369 = arith.constant 0 : index
    %374 = vector.load %arg9[%c2_367, %c0_368, %c0_369] : memref<4x32x32xbf16, #tpu.memory_space<vmem>>, vector<1x32x32xbf16>
    %375 = vector.shape_cast %374 : vector<1x32x32xbf16> to vector<32x32xbf16>
    %cst_370 = arith.constant dense<0.000000e+00> : vector<16x32xf32>
    %376 = tpu.matmul %373, %375, %cst_370 {dimension_numbers = #tpu.dot_dimension_numbers<[1], [0], [0], [1], [0, 0, 1, 1], [], []>} : vector<16x32xbf16>, vector<32x32xbf16>, vector<16x32xf32> -> vector<16x32xf32>
    %377 = arith.addf %356, %376 : vector<16x32xf32>
    %c0_371 = arith.constant 0 : index
    %c0_372 = arith.constant 0 : index
    %c0_373 = arith.constant 0 : index
    %378 = vector.load %arg7[%c0_371, %c0_372, %c0_373] : memref<3x48x32xbf16, #tpu.memory_space<vmem>>, vector<1x48x32xbf16>
    %379 = vector.shape_cast %378 : vector<1x48x32xbf16> to vector<48x32xbf16>
    %cst_374 = arith.constant dense<0.000000e+00> : vector<16x32xf32>
    %380 = tpu.matmul %207, %379, %cst_374 {dimension_numbers = #tpu.dot_dimension_numbers<[1], [0], [0], [1], [0, 0, 1, 1], [], []>} : vector<16x48xbf16>, vector<48x32xbf16>, vector<16x32xf32> -> vector<16x32xf32>
    %c1_375 = arith.constant 1 : index
    %c0_376 = arith.constant 0 : index
    %c0_377 = arith.constant 0 : index
    %381 = vector.load %arg7[%c1_375, %c0_376, %c0_377] : memref<3x48x32xbf16, #tpu.memory_space<vmem>>, vector<1x48x32xbf16>
    %382 = vector.shape_cast %381 : vector<1x48x32xbf16> to vector<48x32xbf16>
    %cst_378 = arith.constant dense<0.000000e+00> : vector<16x32xf32>
    %383 = tpu.matmul %259, %382, %cst_378 {dimension_numbers = #tpu.dot_dimension_numbers<[1], [0], [0], [1], [0, 0, 1, 1], [], []>} : vector<16x48xbf16>, vector<48x32xbf16>, vector<16x32xf32> -> vector<16x32xf32>
    %384 = arith.addf %380, %383 : vector<16x32xf32>
    %c2_379 = arith.constant 2 : index
    %c0_380 = arith.constant 0 : index
    %c0_381 = arith.constant 0 : index
    %385 = vector.load %arg7[%c2_379, %c0_380, %c0_381] : memref<3x48x32xbf16, #tpu.memory_space<vmem>>, vector<1x48x32xbf16>
    %386 = vector.shape_cast %385 : vector<1x48x32xbf16> to vector<48x32xbf16>
    %cst_382 = arith.constant dense<0.000000e+00> : vector<16x32xf32>
    %387 = tpu.matmul %311, %386, %cst_382 {dimension_numbers = #tpu.dot_dimension_numbers<[1], [0], [0], [1], [0, 0, 1, 1], [], []>} : vector<16x48xbf16>, vector<48x32xbf16>, vector<16x32xf32> -> vector<16x32xf32>
    %388 = arith.addf %384, %387 : vector<16x32xf32>
    %c0_383 = arith.constant 0 : index
    %c0_384 = arith.constant 0 : index
    %389 = vector.load %arg8[%c0_383, %c0_384] : memref<1x32xf32, #tpu.memory_space<vmem>>, vector<1x32xf32>
    %390 = vector.broadcast %389 : vector<1x32xf32> to vector<16x32xf32>
    %391 = arith.addf %388, %390 : vector<16x32xf32>
    %cst_385 = arith.constant 0.000000e+00 : f32
    %392 = vector.broadcast %cst_385 : f32 to vector<16x32xf32>
    %393 = arith.maximumf %391, %392 : vector<16x32xf32>
    %394 = arith.truncf %393 : vector<16x32xf32> to vector<16x32xbf16>
    %c3_386 = arith.constant 3 : index
    %c0_387 = arith.constant 0 : index
    %c0_388 = arith.constant 0 : index
    %395 = vector.load %arg9[%c3_386, %c0_387, %c0_388] : memref<4x32x32xbf16, #tpu.memory_space<vmem>>, vector<1x32x32xbf16>
    %396 = vector.shape_cast %395 : vector<1x32x32xbf16> to vector<32x32xbf16>
    %cst_389 = arith.constant dense<0.000000e+00> : vector<16x32xf32>
    %397 = tpu.matmul %394, %396, %cst_389 {dimension_numbers = #tpu.dot_dimension_numbers<[1], [0], [0], [1], [0, 0, 1, 1], [], []>} : vector<16x32xbf16>, vector<32x32xbf16>, vector<16x32xf32> -> vector<16x32xf32>
    %398 = arith.addf %377, %397 : vector<16x32xf32>
    %c0_390 = arith.constant 0 : index
    %c0_391 = arith.constant 0 : index
    %399 = vector.load %arg11[%c0_390, %c0_391] : memref<1x32xf32, #tpu.memory_space<vmem>>, vector<1x32xf32>
    %400 = vector.broadcast %399 : vector<1x32xf32> to vector<16x32xf32>
    %401 = arith.addf %398, %400 : vector<16x32xf32>
    %cst_392 = arith.constant 0.000000e+00 : f32
    %402 = vector.broadcast %cst_392 : f32 to vector<16x32xf32>
    %403 = arith.maximumf %401, %402 : vector<16x32xf32>
    %404 = arith.truncf %403 : vector<16x32xf32> to vector<16x32xbf16>
    %c0_393 = arith.constant 0 : index
    %c0_394 = arith.constant 0 : index
    %405 = vector.load %arg12[%c0_393, %c0_394] : memref<32x32xbf16, #tpu.memory_space<vmem>>, vector<32x32xbf16>
    %cst_395 = arith.constant dense<0.000000e+00> : vector<16x32xf32>
    %406 = tpu.matmul %404, %405, %cst_395 {dimension_numbers = #tpu.dot_dimension_numbers<[1], [0], [0], [1], [0, 0, 1, 1], [], []>} : vector<16x32xbf16>, vector<32x32xbf16>, vector<16x32xf32> -> vector<16x32xf32>
    %c0_396 = arith.constant 0 : index
    %c0_397 = arith.constant 0 : index
    %407 = vector.load %arg13[%c0_396, %c0_397] : memref<1x32xf32, #tpu.memory_space<vmem>>, vector<1x32xf32>
    %408 = vector.broadcast %407 : vector<1x32xf32> to vector<16x32xf32>
    %409 = arith.addf %406, %408 : vector<16x32xf32>
    %cst_398 = arith.constant 0.000000e+00 : f32
    %410 = vector.broadcast %cst_398 : f32 to vector<16x32xf32>
    %411 = arith.maximumf %409, %410 : vector<16x32xf32>
    %412 = arith.truncf %411 : vector<16x32xf32> to vector<16x32xbf16>
    %c0_399 = arith.constant 0 : index
    %c0_400 = arith.constant 0 : index
    %413 = vector.load %arg14[%c0_399, %c0_400] : memref<32x4xbf16, #tpu.memory_space<vmem>>, vector<32x4xbf16>
    %cst_401 = arith.constant dense<0.000000e+00> : vector<16x4xf32>
    %414 = tpu.matmul %412, %413, %cst_401 {dimension_numbers = #tpu.dot_dimension_numbers<[1], [0], [0], [1], [0, 0, 1, 1], [], []>} : vector<16x32xbf16>, vector<32x4xbf16>, vector<16x4xf32> -> vector<16x4xf32>
    %c0_402 = arith.constant 0 : index
    %c0_403 = arith.constant 0 : index
    %415 = vector.load %arg15[%c0_402, %c0_403] : memref<1x4xf32, #tpu.memory_space<vmem>>, vector<1x4xf32>
    %416 = vector.broadcast %415 : vector<1x4xf32> to vector<16x4xf32>
    %417 = arith.addf %414, %416 : vector<16x4xf32>
    %cst_404 = arith.constant dense<0xFF800000> : vector<16xf32>
    %418 = vector.multi_reduction <maximumf>, %417, %cst_404 [1] : vector<16x4xf32> to vector<16xf32>
    %419 = vector.shape_cast %418 : vector<16xf32> to vector<16x1xf32>
    %420 = vector.broadcast %419 : vector<16x1xf32> to vector<16x4xf32>
    %421 = arith.subf %417, %420 : vector<16x4xf32>
    %422 = math.exp %421 : vector<16x4xf32>
    %cst_405 = arith.constant dense<0.000000e+00> : vector<16xf32>
    %423 = vector.multi_reduction <add>, %422, %cst_405 [1] : vector<16x4xf32> to vector<16xf32>
    %424 = vector.shape_cast %423 : vector<16xf32> to vector<16x1xf32>
    %425 = tpu.reciprocal %424 : vector<16x1xf32> -> vector<16x1xf32>
    %426 = vector.broadcast %425 : vector<16x1xf32> to vector<16x4xf32>
    %427 = arith.mulf %422, %426 : vector<16x4xf32>
    %c0_406 = arith.constant 0 : index
    %c0_407 = arith.constant 0 : index
    %428 = vector.load %arg16[%c0_406, %c0_407] : memref<16x4xf32, #tpu.memory_space<vmem>>, vector<16x4xf32>
    tpu.vector_store %arg16[%c0_406, %c0_407], %427 {strides = array<i32>} : memref<16x4xf32, #tpu.memory_space<vmem>>, vector<16x4xf32>,
    return
  }
  func.func @transform_0(%arg0: i32) -> (i32, i32, i32) {
    %c0_i32 = arith.constant 0 : i32
    %c0_i32_0 = arith.constant 0 : i32
    %c0_i32_1 = arith.constant 0 : i32
    return %c0_i32, %arg0, %c0_i32_0 : i32, i32, i32
  }
  func.func @transform_1(%arg0: i32) -> (i32, i32) {
    %c0_i32 = arith.constant 0 : i32
    %c0_i32_0 = arith.constant 0 : i32
    return %arg0, %c0_i32 : i32, i32
  }
  func.func @transform_2(%arg0: i32) -> (i32, i32, i32) {
    %c0_i32 = arith.constant 0 : i32
    %c0_i32_0 = arith.constant 0 : i32
    %c0_i32_1 = arith.constant 0 : i32
    %c0_i32_2 = arith.constant 0 : i32
    return %c0_i32, %c0_i32_0, %c0_i32_1 : i32, i32, i32
  }
  func.func @transform_3(%arg0: i32) -> (i32, i32) {
    %c0_i32 = arith.constant 0 : i32
    %c0_i32_0 = arith.constant 0 : i32
    %c0_i32_1 = arith.constant 0 : i32
    return %c0_i32, %c0_i32_0 : i32, i32
  }
  func.func @transform_4(%arg0: i32) -> (i32, i32) {
    %c0_i32 = arith.constant 0 : i32
    %c0_i32_0 = arith.constant 0 : i32
    %c0_i32_1 = arith.constant 0 : i32
    return %c0_i32, %c0_i32_0 : i32, i32
  }
  func.func @transform_5(%arg0: i32) -> (i32, i32) {
    %c0_i32 = arith.constant 0 : i32
    %c0_i32_0 = arith.constant 0 : i32
    %c0_i32_1 = arith.constant 0 : i32
    return %c0_i32, %c0_i32_0 : i32, i32
  }
  func.func @transform_6(%arg0: i32) -> (i32, i32, i32) {
    %c0_i32 = arith.constant 0 : i32
    %c0_i32_0 = arith.constant 0 : i32
    %c0_i32_1 = arith.constant 0 : i32
    %c0_i32_2 = arith.constant 0 : i32
    return %c0_i32, %c0_i32_0, %c0_i32_1 : i32, i32, i32
  }
  func.func @transform_7(%arg0: i32) -> (i32, i32) {
    %c0_i32 = arith.constant 0 : i32
    %c0_i32_0 = arith.constant 0 : i32
    %c0_i32_1 = arith.constant 0 : i32
    return %c0_i32, %c0_i32_0 : i32, i32
  }
  func.func @transform_8(%arg0: i32) -> (i32, i32, i32) {
    %c0_i32 = arith.constant 0 : i32
    %c0_i32_0 = arith.constant 0 : i32
    %c0_i32_1 = arith.constant 0 : i32
    %c0_i32_2 = arith.constant 0 : i32
    return %c0_i32, %c0_i32_0, %c0_i32_1 : i32, i32, i32
  }
  func.func @transform_9(%arg0: i32) -> (i32, i32) {
    %c0_i32 = arith.constant 0 : i32
    %c0_i32_0 = arith.constant 0 : i32
    %c0_i32_1 = arith.constant 0 : i32
    return %c0_i32, %c0_i32_0 : i32, i32
  }
  func.func @transform_10(%arg0: i32) -> (i32, i32) {
    %c0_i32 = arith.constant 0 : i32
    %c0_i32_0 = arith.constant 0 : i32
    %c0_i32_1 = arith.constant 0 : i32
    return %c0_i32, %c0_i32_0 : i32, i32
  }
  func.func @transform_11(%arg0: i32) -> (i32, i32) {
    %c0_i32 = arith.constant 0 : i32
    %c0_i32_0 = arith.constant 0 : i32
    %c0_i32_1 = arith.constant 0 : i32
    return %c0_i32, %c0_i32_0 : i32, i32
  }
  func.func @transform_12(%arg0: i32) -> (i32, i32) {
    %c0_i32 = arith.constant 0 : i32
    %c0_i32_0 = arith.constant 0 : i32
    %c0_i32_1 = arith.constant 0 : i32
    return %c0_i32, %c0_i32_0 : i32, i32
  }
  func.func @transform_13(%arg0: i32) -> (i32, i32) {
    %c0_i32 = arith.constant 0 : i32
    %c0_i32_0 = arith.constant 0 : i32
    %c0_i32_1 = arith.constant 0 : i32
    return %c0_i32, %c0_i32_0 : i32, i32
  }
  func.func @transform_14(%arg0: i32) -> (i32, i32) {
    %c0_i32 = arith.constant 0 : i32
    %c0_i32_0 = arith.constant 0 : i32
    %c0_i32_1 = arith.constant 0 : i32
    return %c0_i32, %c0_i32_0 : i32, i32
  }
  func.func @transform_15(%arg0: i32) -> (i32, i32) {
    %c0_i32 = arith.constant 0 : i32
    %c0_i32_0 = arith.constant 0 : i32
    return %arg0, %c0_i32 : i32, i32
  }
}

</mosaic_0001>

<llo_original>
// kernel: policy_forward.1
$region0: #{policy_forward.1}
  #allocation0 [shape = 'u32[]', space=smem, size = 0x4, offset = 0x4, fixed_abs, tag = 'smem constant byte address 0x4 - core index']
  #allocation1 [shape = 'u32[72,128]{1,0:T(1,128)}', space=vmem, size = 0x9000, scoped, tag = 'internal scratch']
  %s0 = inlined_call_operand.vmem [shape: bf16[15,32,60], index: 0, kind: input, shape index: {}]
  %s1 = inlined_call_operand.vmem [shape: bf16[32,4], index: 1, kind: input, shape index: {}]
  %s2 = inlined_call_operand.vmem [shape: bf16[3,60,104], index: 2, kind: input, shape index: {}]
  %s3 = inlined_call_operand.vmem [shape: f32[1,104], index: 3, kind: input, shape index: {}]
  %s4 = inlined_call_operand.vmem [shape: bf16[104,48], index: 4, kind: input, shape index: {}]
  %s5 = inlined_call_operand.vmem [shape: bf16[104,48], index: 5, kind: input, shape index: {}]
  %s6 = inlined_call_operand.vmem [shape: bf16[3,48,32], index: 6, kind: input, shape index: {}]
  %s7 = inlined_call_operand.vmem [shape: f32[1,32], index: 7, kind: input, shape index: {}]
  %s8 = inlined_call_operand.vmem [shape: bf16[4,32,32], index: 8, kind: input, shape index: {}]
  %s9 = inlined_call_operand.vmem [shape: bf16[4,32], index: 9, kind: input, shape index: {}]
  %s10 = inlined_call_operand.vmem [shape: f32[1,32], index: 10, kind: input, shape index: {}]
  %s11 = inlined_call_operand.vmem [shape: bf16[32,32], index: 11, kind: input, shape index: {}]
  %s12 = inlined_call_operand.vmem [shape: f32[1,32], index: 12, kind: input, shape index: {}]
  %s13 = inlined_call_operand.vmem [shape: bf16[32,4], index: 13, kind: input, shape index: {}]
  %s14 = inlined_call_operand.vmem [shape: f32[1,4], index: 14, kind: input, shape index: {}]
  %s15 = inlined_call_operand.vmem [shape: f32[32,4], index: 15, kind: output, shape index: {}]
  %s16 = sld [smem:[#allocation0]]
  $region134: #{policy_forward.1} parent=0
    _
  %s18 = ssub.s32 1, %s16
  %s19 = scalar_select 0, %s18, %s16
  $region1: #{policy_forward.1} parent=0
    #allocation2 [shape = 'u8[122880]{0}', space=vmem, size = 0x1e000, scoped, tag = 'input window, operand 0']
    loop: start=0, step=1, limit=4
    $region2: #{policy_forward.1} parent=1 // loop_pre_header
      _
    $region3: #{policy_forward.1} parent=1 // loop_header
      %s21 = sphi 0, %s25
      %p22 = scmp.ge.s32.totalorder %s21, 4
      %s31 = sphi 0, %s33
      %s34 = sphi 0, %s31
      %s35 = sphi 0, %s34
      %s51 = sphi 0, %s35
      %s57 = sphi 0, %s59
      %s60 = sphi 0, %s57
      %s61 = sphi 0, %s60
      %s77 = sphi 0, %s61
      %s81 = sphi 0, %s81
      %s83 = sphi 0, %s81
      %s84 = sphi 0, %s83
      %s98 = sphi 0, %s84
      %s102 = sphi 0, %s102
      %s104 = sphi 0, %s102
      %s105 = sphi 0, %s104
      %s119 = sphi 0, %s105
      %s123 = sphi 0, %s123
      %s125 = sphi 0, %s123
      %s126 = sphi 0, %s125
      %s140 = sphi 0, %s126
      %s144 = sphi 0, %s144
      %s146 = sphi 0, %s144
      %s147 = sphi 0, %s146
      %s161 = sphi 0, %s147
      %s165 = sphi 0, %s165
      %s167 = sphi 0, %s165
      %s168 = sphi 0, %s167
      %s182 = sphi 0, %s168
      %s186 = sphi 0, %s186
      %s188 = sphi 0, %s186
      %s189 = sphi 0, %s188
      %s203 = sphi 0, %s189
      %s207 = sphi 0, %s207
      %s209 = sphi 0, %s207
      %s210 = sphi 0, %s209
      %s224 = sphi 0, %s210
      %s228 = sphi 0, %s228
      %s230 = sphi 0, %s228
      %s231 = sphi 0, %s230
      %s245 = sphi 0, %s231
      %s249 = sphi 0, %s249
      %s251 = sphi 0, %s249
      %s252 = sphi 0, %s251
      %s266 = sphi 0, %s252
      %s270 = sphi 0, %s270
      %s272 = sphi 0, %s270
      %s273 = sphi 0, %s272
      %s287 = sphi 0, %s273
      %s291 = sphi 0, %s291
      %s293 = sphi 0, %s291
      %s294 = sphi 0, %s293
      %s308 = sphi 0, %s294
      %s312 = sphi 0, %s312
      %s314 = sphi 0, %s312
      %s315 = sphi 0, %s314
      %s329 = sphi 0, %s315
      %s333 = sphi 0, %s333
      %s335 = sphi 0, %s333
      %s336 = sphi 0, %s335
      %s350 = sphi 0, %s336
      %s356 = sphi 0, %s358
      %s359 = sphi 0, %s356
      %s360 = sphi 0, %s359
      %s376 = sphi 0, %s360
    $region4: #{policy_forward.1} parent=1 // loop_header_branch
      %24 = sbr.rel (%p22) target = $region8
    $region5: #{policy_forward.1} parent=1 // loop_body
      %s26 = ssub.s32 %s21, 1
      %s27 = ssub.s32 %s21, 2
      %s28 = sadd.s32 %s21, 1
      %s29 = ssub.s32 %s21, %s28
      %p30 = scmp.eq.s32.totalorder %s29, 0
      %s32 = sadd.s32 %s31, 1
      %s33 = scalar_select %p30, %s31, %s32
      %p36 = pneg %p30
      %p37 = scmp.eq.s32.totalorder %s21, 1
      %p38 = por %p36, %p37
      %p39 = scmp.ne.s32.totalorder %s31, %s34
      %p40 = scmp.eq.s32.totalorder %s21, 0
      %p41 = por %p39, %p40
      %p42 = scmp.ne.s32.totalorder %s31, %s34
      %p43 = scmp.eq.s32.totalorder %s26, 1
      %p44 = por %p42, %p43
      %p45 = scmp.ne.s32.totalorder %s34, %s35
      %p46 = scmp.eq.s32.totalorder %s26, 0
      %p47 = por %p45, %p46
      %p48 = scmp.ne.s32.totalorder %s34, %s35
      %p49 = scmp.eq.s32.totalorder %s27, 1
      %p50 = por %p48, %p49
      %p52 = scmp.ne.s32.totalorder %s35, %s51
      %p53 = scmp.eq.s32.totalorder %s27, 0
      %p54 = por %p52, %p53
      %s55 = ssub.s32 %s21, %s28
      %p56 = scmp.eq.s32.totalorder %s55, 0
      %s58 = sadd.s32 %s57, 1
      %s59 = scalar_select %p56, %s57, %s58
      %p62 = pneg %p56
      %p63 = scmp.eq.s32.totalorder %s21, 1
      %p64 = por %p62, %p63
      %p65 = scmp.ne.s32.totalorder %s57, %s60
      %p66 = scmp.eq.s32.totalorder %s21, 0
      %p67 = por %p65, %p66
      %p68 = scmp.ne.s32.totalorder %s57, %s60
      %p69 = scmp.eq.s32.totalorder %s26, 1
      %p70 = por %p68, %p69
      %p71 = scmp.ne.s32.totalorder %s60, %s61
      %p72 = scmp.eq.s32.totalorder %s26, 0
      %p73 = por %p71, %p72
      %p74 = scmp.ne.s32.totalorder %s60, %s61
      %p75 = scmp.eq.s32.totalorder %s27, 1
      %p76 = por %p74, %p75
      %p78 = scmp.ne.s32.totalorder %s61, %s77
      %p79 = scmp.eq.s32.totalorder %s27, 0
      %p80 = por %p78, %p79
      %s82 = sadd.s32 %s81, 1
      %p85 = scmp.eq.s32.totalorder %s21, 1
      %p86 = scmp.ne.s32.totalorder %s81, %s83
      %p87 = scmp.eq.s32.totalorder %s21, 0
      %p88 = por %p86, %p87
      %p89 = scmp.ne.s32.totalorder %s81, %s83
      %p90 = scmp.eq.s32.totalorder %s26, 1
      %p91 = por %p89, %p90
      %p92 = scmp.ne.s32.totalorder %s83, %s84
      %p93 = scmp.eq.s32.totalorder %s26, 0
      %p94 = por %p92, %p93
      %p95 = scmp.ne.s32.totalorder %s83, %s84
      %p96 = scmp.eq.s32.totalorder %s27, 1
      %p97 = por %p95, %p96
      %p99 = scmp.ne.s32.totalorder %s84, %s98
      %p100 = scmp.eq.s32.totalorder %s27, 0
      %p101 = por %p99, %p100
      %s103 = sadd.s32 %s102, 1
      %p106 = scmp.eq.s32.totalorder %s21, 1
      %p107 = scmp.ne.s32.totalorder %s102, %s104
      %p108 = scmp.eq.s32.totalorder %s21, 0
      %p109 = por %p107, %p108
      %p110 = scmp.ne.s32.totalorder %s102, %s104
      %p111 = scmp.eq.s32.totalorder %s26, 1
      %p112 = por %p110, %p111
      %p113 = scmp.ne.s32.totalorder %s104, %s105
      %p114 = scmp.eq.s32.totalorder %s26, 0
      %p115 = por %p113, %p114
      %p116 = scmp.ne.s32.totalorder %s104, %s105
      %p117 = scmp.eq.s32.totalorder %s27, 1
      %p118 = por %p116, %p117
      %p120 = scmp.ne.s32.totalorder %s105, %s119
      %p121 = scmp.eq.s32.totalorder %s27, 0
      %p122 = por %p120, %p121
      %s124 = sadd.s32 %s123, 1
      %p127 = scmp.eq.s32.totalorder %s21, 1
      %p128 = scmp.ne.s32.totalorder %s123, %s125
      %p129 = scmp.eq.s32.totalorder %s21, 0
      %p130 = por %p128, %p129
      %p131 = scmp.ne.s32.totalorder %s123, %s125
      %p132 = scmp.eq.s32.totalorder %s26, 1
      %p133 = por %p131, %p132
      %p134 = scmp.ne.s32.totalorder %s125, %s126
      %p135 = scmp.eq.s32.totalorder %s26, 0
      %p136 = por %p134, %p135
      %p137 = scmp.ne.s32.totalorder %s125, %s126
      %p138 = scmp.eq.s32.totalorder %s27, 1
      %p139 = por %p137, %p138
      %p141 = scmp.ne.s32.totalorder %s126, %s140
      %p142 = scmp.eq.s32.totalorder %s27, 0
      %p143 = por %p141, %p142
      %s145 = sadd.s32 %s144, 1
      %p148 = scmp.eq.s32.totalorder %s21, 1
      %p149 = scmp.ne.s32.totalorder %s144, %s146
      %p150 = scmp.eq.s32.totalorder %s21, 0
      %p151 = por %p149, %p150
      %p152 = scmp.ne.s32.totalorder %s144, %s146
      %p153 = scmp.eq.s32.totalorder %s26, 1
      %p154 = por %p152, %p153
      %p155 = scmp.ne.s32.totalorder %s146, %s147
      %p156 = scmp.eq.s32.totalorder %s26, 0
      %p157 = por %p155, %p156
      %p158 = scmp.ne.s32.totalorder %s146, %s147
      %p159 = scmp.eq.s32.totalorder %s27, 1
      %p160 = por %p158, %p159
      %p162 = scmp.ne.s32.totalorder %s147, %s161
      %p163 = scmp.eq.s32.totalorder %s27, 0
      %p164 = por %p162, %p163
      %s166 = sadd.s32 %s165, 1
      %p169 = scmp.eq.s32.totalorder %s21, 1
      %p170 = scmp.ne.s32.totalorder %s165, %s167
      %p171 = scmp.eq.s32.totalorder %s21, 0
      %p172 = por %p170, %p171
      %p173 = scmp.ne.s32.totalorder %s165, %s167
      %p174 = scmp.eq.s32.totalorder %s26, 1
      %p175 = por %p173, %p174
      %p176 = scmp.ne.s32.totalorder %s167, %s168
      %p177 = scmp.eq.s32.totalorder %s26, 0
      %p178 = por %p176, %p177
      %p179 = scmp.ne.s32.totalorder %s167, %s168
      %p180 = scmp.eq.s32.totalorder %s27, 1
      %p181 = por %p179, %p180
      %p183 = scmp.ne.s32.totalorder %s168, %s182
      %p184 = scmp.eq.s32.totalorder %s27, 0
      %p185 = por %p183, %p184
      %s187 = sadd.s32 %s186, 1
      %p190 = scmp.eq.s32.totalorder %s21, 1
      %p191 = scmp.ne.s32.totalorder %s186, %s188
      %p192 = scmp.eq.s32.totalorder %s21, 0
      %p193 = por %p191, %p192
      %p194 = scmp.ne.s32.totalorder %s186, %s188
      %p195 = scmp.eq.s32.totalorder %s26, 1
      %p196 = por %p194, %p195
      %p197 = scmp.ne.s32.totalorder %s188, %s189
      %p198 = scmp.eq.s32.totalorder %s26, 0
      %p199 = por %p197, %p198
      %p200 = scmp.ne.s32.totalorder %s188, %s189
      %p201 = scmp.eq.s32.totalorder %s27, 1
      %p202 = por %p200, %p201
      %p204 = scmp.ne.s32.totalorder %s189, %s203
      %p205 = scmp.eq.s32.totalorder %s27, 0
      %p206 = por %p204, %p205
      %s208 = sadd.s32 %s207, 1
      %p211 = scmp.eq.s32.totalorder %s21, 1
      %p212 = scmp.ne.s32.totalorder %s207, %s209
      %p213 = scmp.eq.s32.totalorder %s21, 0
      %p214 = por %p212, %p213
      %p215 = scmp.ne.s32.totalorder %s207, %s209
      %p216 = scmp.eq.s32.totalorder %s26, 1
      %p217 = por %p215, %p216
      %p218 = scmp.ne.s32.totalorder %s209, %s210
      %p219 = scmp.eq.s32.totalorder %s26, 0
      %p220 = por %p218, %p219
      %p221 = scmp.ne.s32.totalorder %s209, %s210
      %p222 = scmp.eq.s32.totalorder %s27, 1
      %p223 = por %p221, %p222
      %p225 = scmp.ne.s32.totalorder %s210, %s224
      %p226 = scmp.eq.s32.totalorder %s27, 0
      %p227 = por %p225, %p226
      %s229 = sadd.s32 %s228, 1
      %p232 = scmp.eq.s32.totalorder %s21, 1
      %p233 = scmp.ne.s32.totalorder %s228, %s230
      %p234 = scmp.eq.s32.totalorder %s21, 0
      %p235 = por %p233, %p234
      %p236 = scmp.ne.s32.totalorder %s228, %s230
      %p237 = scmp.eq.s32.totalorder %s26, 1
      %p238 = por %p236, %p237
      %p239 = scmp.ne.s32.totalorder %s230, %s231
      %p240 = scmp.eq.s32.totalorder %s26, 0
      %p241 = por %p239, %p240
      %p242 = scmp.ne.s32.totalorder %s230, %s231
      %p243 = scmp.eq.s32.totalorder %s27, 1
      %p244 = por %p242, %p243
      %p246 = scmp.ne.s32.totalorder %s231, %s245
      %p247 = scmp.eq.s32.totalorder %s27, 0
      %p248 = por %p246, %p247
      %s250 = sadd.s32 %s249, 1
      %p253 = scmp.eq.s32.totalorder %s21, 1
      %p254 = scmp.ne.s32.totalorder %s249, %s251
      %p255 = scmp.eq.s32.totalorder %s21, 0
      %p256 = por %p254, %p255
      %p257 = scmp.ne.s32.totalorder %s249, %s251
      %p258 = scmp.eq.s32.totalorder %s26, 1
      %p259 = por %p257, %p258
      %p260 = scmp.ne.s32.totalorder %s251, %s252
      %p261 = scmp.eq.s32.totalorder %s26, 0
      %p262 = por %p260, %p261
      %p263 = scmp.ne.s32.totalorder %s251, %s252
      %p264 = scmp.eq.s32.totalorder %s27, 1
      %p265 = por %p263, %p264
      %p267 = scmp.ne.s32.totalorder %s252, %s266
      %p268 = scmp.eq.s32.totalorder %s27, 0
      %p269 = por %p267, %p268
      %s271 = sadd.s32 %s270, 1
      %p274 = scmp.eq.s32.totalorder %s21, 1
      %p275 = scmp.ne.s32.totalorder %s270, %s272
      %p276 = scmp.eq.s32.totalorder %s21, 0
      %p277 = por %p275, %p276
      %p278 = scmp.ne.s32.totalorder %s270, %s272
      %p279 = scmp.eq.s32.totalorder %s26, 1
      %p280 = por %p278, %p279
      %p281 = scmp.ne.s32.totalorder %s272, %s273
      %p282 = scmp.eq.s32.totalorder %s26, 0
      %p283 = por %p281, %p282
      %p284 = scmp.ne.s32.totalorder %s272, %s273
      %p285 = scmp.eq.s32.totalorder %s27, 1
      %p286 = por %p284, %p285
      %p288 = scmp.ne.s32.totalorder %s273, %s287
      %p289 = scmp.eq.s32.totalorder %s27, 0
      %p290 = por %p288, %p289
      %s292 = sadd.s32 %s291, 1
      %p295 = scmp.eq.s32.totalorder %s21, 1
      %p296 = scmp.ne.s32.totalorder %s291, %s293
      %p297 = scmp.eq.s32.totalorder %s21, 0
      %p298 = por %p296, %p297
      %p299 = scmp.ne.s32.totalorder %s291, %s293
      %p300 = scmp.eq.s32.totalorder %s26, 1
      %p301 = por %p299, %p300
      %p302 = scmp.ne.s32.totalorder %s293, %s294
      %p303 = scmp.eq.s32.totalorder %s26, 0
      %p304 = por %p302, %p303
      %p305 = scmp.ne.s32.totalorder %s293, %s294
      %p306 = scmp.eq.s32.totalorder %s27, 1
      %p307 = por %p305, %p306
      %p309 = scmp.ne.s32.totalorder %s294, %s308
      %p310 = scmp.eq.s32.totalorder %s27, 0
      %p311 = por %p309, %p310
      %s313 = sadd.s32 %s312, 1
      %p316 = scmp.eq.s32.totalorder %s21, 1
      %p317 = scmp.ne.s32.totalorder %s312, %s314
      %p318 = scmp.eq.s32.totalorder %s21, 0
      %p319 = por %p317, %p318
      %p320 = scmp.ne.s32.totalorder %s312, %s314
      %p321 = scmp.eq.s32.totalorder %s26, 1
      %p322 = por %p320, %p321
      %p323 = scmp.ne.s32.totalorder %s314, %s315
      %p324 = scmp.eq.s32.totalorder %s26, 0
      %p325 = por %p323, %p324
      %p326 = scmp.ne.s32.totalorder %s314, %s315
      %p327 = scmp.eq.s32.totalorder %s27, 1
      %p328 = por %p326, %p327
      %p330 = scmp.ne.s32.totalorder %s315, %s329
      %p331 = scmp.eq.s32.totalorder %s27, 0
      %p332 = por %p330, %p331
      %s334 = sadd.s32 %s333, 1
      %p337 = scmp.eq.s32.totalorder %s21, 1
      %p338 = scmp.ne.s32.totalorder %s333, %s335
      %p339 = scmp.eq.s32.totalorder %s21, 0
      %p340 = por %p338, %p339
      %p341 = scmp.ne.s32.totalorder %s333, %s335
      %p342 = scmp.eq.s32.totalorder %s26, 1
      %p343 = por %p341, %p342
      %p344 = scmp.ne.s32.totalorder %s335, %s336
      %p345 = scmp.eq.s32.totalorder %s26, 0
      %p346 = por %p344, %p345
      %p347 = scmp.ne.s32.totalorder %s335, %s336
      %p348 = scmp.eq.s32.totalorder %s27, 1
      %p349 = por %p347, %p348
      %p351 = scmp.ne.s32.totalorder %s336, %s350
      %p352 = scmp.eq.s32.totalorder %s27, 0
      %p353 = por %p351, %p352
      %s354 = ssub.s32 %s21, %s28
      %p355 = scmp.eq.s32.totalorder %s354, 0
      %s357 = sadd.s32 %s356, 1
      %s358 = scalar_select %p355, %s356, %s357
      %p361 = pneg %p355
      %p362 = scmp.eq.s32.totalorder %s21, 1
      %p363 = por %p361, %p362
      %p364 = scmp.ne.s32.totalorder %s356, %s359
      %p365 = scmp.eq.s32.totalorder %s21, 0
      %p366 = por %p364, %p365
      %p367 = scmp.ne.s32.totalorder %s356, %s359
      %p368 = scmp.eq.s32.totalorder %s26, 1
      %p369 = por %p367, %p368
      %p370 = scmp.ne.s32.totalorder %s359, %s360
      %p371 = scmp.eq.s32.totalorder %s26, 0
      %p372 = por %p370, %p371
      %p373 = scmp.ne.s32.totalorder %s359, %s360
      %p374 = scmp.eq.s32.totalorder %s27, 1
      %p375 = por %p373, %p374
      %p377 = scmp.ne.s32.totalorder %s360, %s376
      %p378 = scmp.eq.s32.totalorder %s27, 0
      %p379 = por %p377, %p378
      %p380 = scmp.le.s32.totalorder 1, %s21
      %p381 = scmp.lt.s32.totalorder %s21, 3
      %p382 = pnand %p380, %p381
      %p383 = pneg %p382
      // Predicated region
      $region9: #{policy_forward.1} parent=5 // pred_check
        _
      $region10: #{policy_forward.1} parent=5 // pred_check_branch
        %385 = sbr.rel (%p382) target = $region12
      $region11: #{policy_forward.1} parent=5 // pred_region
        %s386 = ssub.s32 %s21, 1
        // Predicated region
        $region13: #{policy_forward.1} parent=11 // pred_check
          %p387 = pneg %p94
        $region14: #{policy_forward.1} parent=11 // pred_check_branch
          %389 = sbr.rel (%p387) target = $region16
        $region15: #{policy_forward.1} parent=11 // pred_region
          _
        $region16: #{policy_forward.1} parent=11 // pred_fallthru
          _
        // Predicated region
        $region17: #{policy_forward.1} parent=11 // pred_check
          %p390 = pneg %p115
        $region18: #{policy_forward.1} parent=11 // pred_check_branch
          %392 = sbr.rel (%p390) target = $region20
        $region19: #{policy_forward.1} parent=11 // pred_region
          _
        $region20: #{policy_forward.1} parent=11 // pred_fallthru
          _
        // Predicated region
        $region21: #{policy_forward.1} parent=11 // pred_check
          %p393 = pneg %p136
        $region22: #{policy_forward.1} parent=11 // pred_check_branch
          %395 = sbr.rel (%p393) target = $region24
        $region23: #{policy_forward.1} parent=11 // pred_region
          _
        $region24: #{policy_forward.1} parent=11 // pred_fallthru
          _
        // Predicated region
        $region25: #{policy_forward.1} parent=11 // pred_check
          %p396 = pneg %p157
        $region26: #{policy_forward.1} parent=11 // pred_check_branch
          %398 = sbr.rel (%p396) target = $region28
        $region27: #{policy_forward.1} parent=11 // pred_region
          _
        $region28: #{policy_forward.1} parent=11 // pred_fallthru
          _
        // Predicated region
        $region29: #{policy_forward.1} parent=11 // pred_check
          %p399 = pneg %p178
        $region30: #{policy_forward.1} parent=11 // pred_check_branch
          %401 = sbr.rel (%p399) target = $region32
        $region31: #{policy_forward.1} parent=11 // pred_region
          _
        $region32: #{policy_forward.1} parent=11 // pred_fallthru
          _
        // Predicated region
        $region33: #{policy_forward.1} parent=11 // pred_check
          %p402 = pneg %p199
        $region34: #{policy_forward.1} parent=11 // pred_check_branch
          %404 = sbr.rel (%p402) target = $region36
        $region35: #{policy_forward.1} parent=11 // pred_region
          _
        $region36: #{policy_forward.1} parent=11 // pred_fallthru
          _
        // Predicated region
        $region37: #{policy_forward.1} parent=11 // pred_check
          %p405 = pneg %p220
        $region38: #{policy_forward.1} parent=11 // pred_check_branch
          %407 = sbr.rel (%p405) target = $region40
        $region39: #{policy_forward.1} parent=11 // pred_region
          _
        $region40: #{policy_forward.1} parent=11 // pred_fallthru
          _
        // Predicated region
        $region41: #{policy_forward.1} parent=11 // pred_check
          %p408 = pneg %p241
        $region42: #{policy_forward.1} parent=11 // pred_check_branch
          %410 = sbr.rel (%p408) target = $region44
        $region43: #{policy_forward.1} parent=11 // pred_region
          _
        $region44: #{policy_forward.1} parent=11 // pred_fallthru
          _
        // Predicated region
        $region45: #{policy_forward.1} parent=11 // pred_check
          %p411 = pneg %p262
        $region46: #{policy_forward.1} parent=11 // pred_check_branch
          %413 = sbr.rel (%p411) target = $region48
        $region47: #{policy_forward.1} parent=11 // pred_region
          _
        $region48: #{policy_forward.1} parent=11 // pred_fallthru
          _
        // Predicated region
        $region49: #{policy_forward.1} parent=11 // pred_check
          %p414 = pneg %p283
        $region50: #{policy_forward.1} parent=11 // pred_check_branch
          %416 = sbr.rel (%p414) target = $region52
        $region51: #{policy_forward.1} parent=11 // pred_region
          _
        $region52: #{policy_forward.1} parent=11 // pred_fallthru
          _
        // Predicated region
        $region53: #{policy_forward.1} parent=11 // pred_check
          %p417 = pneg %p304
        $region54: #{policy_forward.1} parent=11 // pred_check_branch
          %419 = sbr.rel (%p417) target = $region56
        $region55: #{policy_forward.1} parent=11 // pred_region
          _
        $region56: #{policy_forward.1} parent=11 // pred_fallthru
          _
        // Predicated region
        $region57: #{policy_forward.1} parent=11 // pred_check
          %p420 = pneg %p325
        $region58: #{policy_forward.1} parent=11 // pred_check_branch
          %422 = sbr.rel (%p420) target = $region60
        $region59: #{policy_forward.1} parent=11 // pred_region
          _
        $region60: #{policy_forward.1} parent=11 // pred_fallthru
          _
        // Predicated region
        $region61: #{policy_forward.1} parent=11 // pred_check
          %p423 = pneg %p346
        $region62: #{policy_forward.1} parent=11 // pred_check_branch
          %425 = sbr.rel (%p423) target = $region64
        $region63: #{policy_forward.1} parent=11 // pred_region
          _
        $region64: #{policy_forward.1} parent=11 // pred_fallthru
          _
      $region12: #{policy_forward.1} parent=5 // pred_fallthru
        _
      %p426 = scmp.lt.s32.totalorder %s21, 2
      // Predicated region
      $region65: #{policy_forward.1} parent=5 // pred_check
        %p427 = pneg %p426
      $region66: #{policy_forward.1} parent=5 // pred_check_branch
        %429 = sbr.rel (%p427) target = $region68
      $region67: #{policy_forward.1} parent=5 // pred_region
        // Predicated region
        $region69: #{policy_forward.1} parent=67 // pred_check
          %p430 = pneg %p41
        $region70: #{policy_forward.1} parent=67 // pred_check_branch
          %432 = sbr.rel (%p430) target = $region72
        $region71: #{policy_forward.1} parent=67 // pred_region
          %s433 = sand.u32 %s31, 1
          %s434 = sand.u32 %s31, 1
          %s435 = smul.addr %s434, 120
          %s436 = scalar_lea.vmem [#allocation2], %s435
          %s437 = smul.u32 2, %s21
          %s438 = smul.addr %s437, 4
          %s439 = scalar_lea.vmem %s0, %s438
          // Predicated region
          $region73: #{policy_forward.1} parent=71 // pred_check
            _
          $region74: #{policy_forward.1} parent=71 // pred_check_branch
            %441 = sbr.rel (0) target = $region76
          $region75: #{policy_forward.1} parent=71 // pred_region
            // Predicated region
            $region77: #{policy_forward.1} parent=75 // pred_check
              _
            $region78: #{policy_forward.1} parent=75 // pred_check_branch
              %443 = sbr.rel target = $region80
            $region79: #{policy_forward.1} parent=75 // pred_region
              // Predicated region
              $region92: #{policy_forward.1} parent=79 // pred_check
                _
              $region93: #{policy_forward.1} parent=79 // pred_check_branch
                %517 = sbr.rel (0) target = $region95
              $region94: #{policy_forward.1} parent=79 // pred_region
                loop: start=0, step=1, limit=1
                $region96: #{policy_forward.1} parent=94 // loop_pre_header
                  _
                $region97: #{policy_forward.1} parent=94 // loop_header
                  %s519 = sphi 0, %s523
                  %p520 = scmp.ge.s32.totalorder %s519, 1
                  %s524 = sphi %s439, %s439
                  %s525 = sphi %s436, %s436
                $region98: #{policy_forward.1} parent=94 // loop_header_branch
                  %522 = sbr.rel (%p520) target = $region102
                $region99: #{policy_forward.1} parent=94 // loop_body
                  _
                $region100: #{policy_forward.1} parent=94 // loop_footer
                  %s523 = sadd.s32 1, %s519
                $region101: #{policy_forward.1} parent=94 // loop_footer_branch
                  %518 = sbr.rel target = $region97
                $region102: #{policy_forward.1} parent=94 // loop_exit
                  _
                %s527 = ssub.s32 16, 1
                loop: start=0, step=1, limit=1
                $region103: #{policy_forward.1} parent=94 // loop_pre_header
                  _
                $region104: #{policy_forward.1} parent=94 // loop_header
                  %s529 = sphi 0, %s533
                  %p530 = scmp.ge.s32.totalorder %s529, 1
                  %s534 = sphi %s439, %s439
                  %s535 = sphi %s436, %s436
                $region105: #{policy_forward.1} parent=94 // loop_header_branch
                  %532 = sbr.rel (%p530) target = $region109
                $region106: #{policy_forward.1} parent=94 // loop_body
                  %v536 = vld [vmem:[%s534] sm:%s527]
                  %537 = vst [vmem:[%s535] sm:%s527] %v536
                  %v538 = vld [vmem:[%s534 + $0x4] sm:%s527]
                  %539 = vst [vmem:[%s535 + $0x4] sm:%s527] %v538
                  %v540 = vld [vmem:[%s534 + $0x10] sm:%s527]
                  %541 = vst [vmem:[%s535 + $0x8] sm:%s527] %v540
                  %v542 = vld [vmem:[%s534 + $0x14] sm:%s527]
                  %543 = vst [vmem:[%s535 + $0xc] sm:%s527] %v542
                  %v544 = vld [vmem:[%s534 + $0x20] sm:%s527]
                  %545 = vst [vmem:[%s535 + $0x10] sm:%s527] %v544
                  %v546 = vld [vmem:[%s534 + $0x24] sm:%s527]
                  %547 = vst [vmem:[%s535 + $0x14] sm:%s527] %v546
                  %v548 = vld [vmem:[%s534 + $0x30] sm:%s527]
                  %549 = vst [vmem:[%s535 + $0x18] sm:%s527] %v548
                  %v550 = vld [vmem:[%s534 + $0x34] sm:%s527]
                  %551 = vst [vmem:[%s535 + $0x1c] sm:%s527] %v550
                  %v552 = vld [vmem:[%s534 + $0x40] sm:%s527]
                  %553 = vst [vmem:[%s535 + $0x20] sm:%s527] %v552
                  %v554 = vld [vmem:[%s534 + $0x44] sm:%s527]
                  %555 = vst [vmem:[%s535 + $0x24] sm:%s527] %v554
                  %v556 = vld [vmem:[%s534 + $0x50] sm:%s527]
                  %557 = vst [vmem:[%s535 + $0x28] sm:%s527] %v556
                  %v558 = vld [vmem:[%s534 + $0x54] sm:%s527]
                  %559 = vst [vmem:[%s535 + $0x2c] sm:%s527] %v558
                  %v560 = vld [vmem:[%s534 + $0x60] sm:%s527]
                  %561 = vst [vmem:[%s535 + $0x30] sm:%s527] %v560
                  %v562 = vld [vmem:[%s534 + $0x64] sm:%s527]
                  %563 = vst [vmem:[%s535 + $0x34] sm:%s527] %v562
                  %v564 = vld [vmem:[%s534 + $0x70] sm:%s527]
                  %565 = vst [vmem:[%s535 + $0x38] sm:%s527] %v564
                  %v566 = vld [vmem:[%s534 + $0x74] sm:%s527]
                  %567 = vst [vmem:[%s535 + $0x3c] sm:%s527] %v566
                  %v568 = vld [vmem:[%s534 + $0x80] sm:%s527]
                  %569 = vst [vmem:[%s535 + $0x40] sm:%s527] %v568
                  %v570 = vld [vmem:[%s534 + $0x84] sm:%s527]
                  %571 = vst [vmem:[%s535 + $0x44] sm:%s527] %v570
                  %v572 = vld [vmem:[%s534 + $0x90] sm:%s527]
                  %573 = vst [vmem:[%s535 + $0x48] sm:%s527] %v572
                  %v574 = vld [vmem:[%s534 + $0x94] sm:%s527]
                  %575 = vst [vmem:[%s535 + $0x4c] sm:%s527] %v574
                  %v576 = vld [vmem:[%s534 + $0xa0] sm:%s527]
                  %577 = vst [vmem:[%s535 + $0x50] sm:%s527] %v576
                  %v578 = vld [vmem:[%s534 + $0xa4] sm:%s527]
                  %579 = vst [vmem:[%s535 + $0x54] sm:%s527] %v578
                  %v580 = vld [vmem:[%s534 + $0xb0] sm:%s527]
                  %581 = vst [vmem:[%s535 + $0x58] sm:%s527] %v580
                  %v582 = vld [vmem:[%s534 + $0xb4] sm:%s527]
                  %583 = vst [vmem:[%s535 + $0x5c] sm:%s527] %v582
                  %v584 = vld [vmem:[%s534 + $0xc0] sm:%s527]
                  %585 = vst [vmem:[%s535 + $0x60] sm:%s527] %v584
                  %v586 = vld [vmem:[%s534 + $0xc4] sm:%s527]
                  %587 = vst [vmem:[%s535 + $0x64] sm:%s527] %v586
                  %v588 = vld [vmem:[%s534 + $0xd0] sm:%s527]
                  %589 = vst [vmem:[%s535 + $0x68] sm:%s527] %v588
                  %v590 = vld [vmem:[%s534 + $0xd4] sm:%s527]
                  %591 = vst [vmem:[%s535 + $0x6c] sm:%s527] %v590
                  %v592 = vld [vmem:[%s534 + $0xe0] sm:%s527]
                  %593 = vst [vmem:[%s535 + $0x70] sm:%s527] %v592
                  %v594 = vld [vmem:[%s534 + $0xe4] sm:%s527]
                  %595 = vst [vmem:[%s535 + $0x74] sm:%s527] %v594
                $region107: #{policy_forward.1} parent=94 // loop_footer
                  %s533 = sadd.s32 1, %s529
                $region108: #{policy_forward.1} parent=94 // loop_footer_branch
                  %528 = sbr.rel target = $region104
                $region109: #{policy_forward.1} parent=94 // loop_exit
                  _
              $region95: #{policy_forward.1} parent=79 // pred_fallthru
                _
            $region80: #{policy_forward.1} parent=75 // pred_fallthru
              _
            // Predicated region
            $region81: #{policy_forward.1} parent=75 // pred_check
              _
            $region82: #{policy_forward.1} parent=75 // pred_check_branch
              %445 = sbr.rel (0) target = $region84
            $region83: #{policy_forward.1} parent=75 // pred_region
              %s447 = ssub.s32 16, 1
              loop: start=0, step=1, limit=1
              $region85: #{policy_forward.1} parent=83 // loop_pre_header
                _
              $region86: #{policy_forward.1} parent=83 // loop_header
                %s449 = sphi 0, %s453
                %p450 = scmp.ge.s32.totalorder %s449, 1
                %s454 = sphi %s439, %s439
                %s455 = sphi %s436, %s436
              $region87: #{policy_forward.1} parent=83 // loop_header_branch
                %452 = sbr.rel (%p450) target = $region91
              $region88: #{policy_forward.1} parent=83 // loop_body
                %v456 = vld [vmem:[%s454] sm:%s447]
                %457 = vst [vmem:[%s455] sm:%s447] %v456
                %v458 = vld [vmem:[%s454 + $0x4] sm:%s447]
                %459 = vst [vmem:[%s455 + $0x4] sm:%s447] %v458
                %v460 = vld [vmem:[%s454 + $0x10] sm:%s447]
                %461 = vst [vmem:[%s455 + $0x8] sm:%s447] %v460
                %v462 = vld [vmem:[%s454 + $0x14] sm:%s447]
                %463 = vst [vmem:[%s455 + $0xc] sm:%s447] %v462
                %v464 = vld [vmem:[%s454 + $0x20] sm:%s447]
                %465 = vst [vmem:[%s455 + $0x10] sm:%s447] %v464
                %v466 = vld [vmem:[%s454 + $0x24] sm:%s447]
                %467 = vst [vmem:[%s455 + $0x14] sm:%s447] %v466
                %v468 = vld [vmem:[%s454 + $0x30] sm:%s447]
                %469 = vst [vmem:[%s455 + $0x18] sm:%s447] %v468
                %v470 = vld [vmem:[%s454 + $0x34] sm:%s447]
                %471 = vst [vmem:[%s455 + $0x1c] sm:%s447] %v470
                %v472 = vld [vmem:[%s454 + $0x40] sm:%s447]
                %473 = vst [vmem:[%s455 + $0x20] sm:%s447] %v472
                %v474 = vld [vmem:[%s454 + $0x44] sm:%s447]
                %475 = vst [vmem:[%s455 + $0x24] sm:%s447] %v474
                %v476 = vld [vmem:[%s454 + $0x50] sm:%s447]
                %477 = vst [vmem:[%s455 + $0x28] sm:%s447] %v476
                %v478 = vld [vmem:[%s454 + $0x54] sm:%s447]
                %479 = vst [vmem:[%s455 + $0x2c] sm:%s447] %v478
                %v480 = vld [vmem:[%s454 + $0x60] sm:%s447]
                %481 = vst [vmem:[%s455 + $0x30] sm:%s447] %v480
                %v482 = vld [vmem:[%s454 + $0x64] sm:%s447]
                %483 = vst [vmem:[%s455 + $0x34] sm:%s447] %v482
                %v484 = vld [vmem:[%s454 + $0x70] sm:%s447]
                %485 = vst [vmem:[%s455 + $0x38] sm:%s447] %v484
                %v486 = vld [vmem:[%s454 + $0x74] sm:%s447]
                %487 = vst [vmem:[%s455 + $0x3c] sm:%s447] %v486
                %v488 = vld [vmem:[%s454 + $0x80] sm:%s447]
                %489 = vst [vmem:[%s455 + $0x40] sm:%s447] %v488
                %v490 = vld [vmem:[%s454 + $0x84] sm:%s447]
                %491 = vst [vmem:[%s455 + $0x44] sm:%s447] %v490
                %v492 = vld [vmem:[%s454 + $0x90] sm:%s447]
                %493 = vst [vmem:[%s455 + $0x48] sm:%s447] %v492
                %v494 = vld [vmem:[%s454 + $0x94] sm:%s447]
                %495 = vst [vmem:[%s455 + $0x4c] sm:%s447] %v494
                %v496 = vld [vmem:[%s454 + $0xa0] sm:%s447]
                %497 = vst [vmem:[%s455 + $0x50] sm:%s447] %v496
                %v498 = vld [vmem:[%s454 + $0xa4] sm:%s447]
                %499 = vst [vmem:[%s455 + $0x54] sm:%s447] %v498
                %v500 = vld [vmem:[%s454 + $0xb0] sm:%s447]
                %501 = vst [vmem:[%s455 + $0x58] sm:%s447] %v500
                %v502 = vld [vmem:[%s454 + $0xb4] sm:%s447]
                %503 = vst [vmem:[%s455 + $0x5c] sm:%s447] %v502
                %v504 = vld [vmem:[%s454 + $0xc0] sm:%s447]
                %505 = vst [vmem:[%s455 + $0x60] sm:%s447] %v504
                %v506 = vld [vmem:[%s454 + $0xc4] sm:%s447]
                %507 = vst [vmem:[%s455 + $0x64] sm:%s447] %v506
                %v508 = vld [vmem:[%s454 + $0xd0] sm:%s447]
                %509 = vst [vmem:[%s455 + $0x68] sm:%s447] %v508
                %v510 = vld [vmem:[%s454 + $0xd4] sm:%s447]
                %511 = vst [vmem:[%s455 + $0x6c] sm:%s447] %v510
                %v512 = vld [vmem:[%s454 + $0xe0] sm:%s447]
                %513 = vst [vmem:[%s455 + $0x70] sm:%s447] %v512
                %v514 = vld [vmem:[%s454 + $0xe4] sm:%s447]
                %515 = vst [vmem:[%s455 + $0x74] sm:%s447] %v514
              $region89: #{policy_forward.1} parent=83 // loop_footer
                %s453 = sadd.s32 1, %s449
              $region90: #{policy_forward.1} parent=83 // loop_footer_branch
                %448 = sbr.rel target = $region86
              $region91: #{policy_forward.1} parent=83 // loop_exit
                _
            $region84: #{policy_forward.1} parent=75 // pred_fallthru
              _
          $region76: #{policy_forward.1} parent=71 // pred_fallthru
            _
          %596 = vnop
        $region72: #{policy_forward.1} parent=67 // pred_fallthru
          _
        // Predicated region
        $region110: #{policy_forward.1} parent=67 // pred_check
          %p597 = pneg %p67
        $region111: #{policy_forward.1} parent=67 // pred_check_branch
          %599 = sbr.rel (%p597) target = $region113
        $region112: #{policy_forward.1} parent=67 // pred_region
          %s600 = smul.u32 2, %s21
          %p601 = scmp.lt.s32.totalorder %s600, 3
          %s602 = scalar_select %p601, %s600, 3
          %s603 = smul.addr %s602, 4
          %s604 = scalar_lea.vmem %s1, %s603
          %s605 = smul.u32 2, %s21
        $region113: #{policy_forward.1} parent=67 // pred_fallthru
          _
      $region68: #{policy_forward.1} parent=5 // pred_fallthru
        _
      %p606 = scmp.le.s32.totalorder 1, %s21
      %p607 = scmp.lt.s32.totalorder %s21, 3
      %p608 = pnand %p606, %p607
      %p609 = pneg %p608
      // Predicated region
      $region114: #{policy_forward.1} parent=5 // pred_check
        _
      $region115: #{policy_forward.1} parent=5 // pred_check_branch
        %611 = sbr.rel (%p608) target = $region117
      $region116: #{policy_forward.1} parent=5 // pred_region
        %s612 = ssub.s32 %s21, 1
        %s613 = sand.u32 %s34, 1
        %s614 = sand.u32 %s34, 1
        %s615 = smul.addr %s614, 120
        %s616 = scalar_lea.vmem [#allocation2], %s615
        // Predicated region
        $region118: #{policy_forward.1} parent=116 // pred_check
          %p617 = pneg %p47
        $region119: #{policy_forward.1} parent=116 // pred_check_branch
          %619 = sbr.rel (%p617) target = $region121
        $region120: #{policy_forward.1} parent=116 // pred_region
          _
        $region121: #{policy_forward.1} parent=116 // pred_fallthru
          _
        %s620 = sand.u32 %s34, 1
        %s621 = sand.u32 %s34, 1
        %s622 = smul.addr %s621, 120
        %s623 = scalar_lea.vmem [#allocation2], %s622
        %p624 = pneg %p47
        %p625 = pneg %p44
        %s626 = smul.u32 2, %s26
        %p627 = scmp.lt.s32.totalorder %s626, 3
        %s628 = scalar_select %p627, %s626, 3
        %s629 = smul.addr %s628, 4
        %s630 = scalar_lea.vmem %s1, %s629
        %p631 = pneg %p73
        %p632 = pneg %p70
        %p633 = pneg %p94
        %p634 = pneg %p91
        %p635 = pneg %p115
        %p636 = pneg %p112
        %p637 = pneg %p136
        %p638 = pneg %p133
        %p639 = pneg %p157
        %p640 = pneg %p154
        %p641 = pneg %p178
        %p642 = pneg %p175
        %p643 = pneg %p199
        %p644 = pneg %p196
        %p645 = pneg %p220
        %p646 = pneg %p217
        %p647 = pneg %p241
        %p648 = pneg %p238
        %p649 = pneg %p262
        %p650 = pneg %p259
        %p651 = pneg %p283
        %p652 = pneg %p280
        %p653 = pneg %p304
        %p654 = pneg %p301
        %p655 = pneg %p325
        %p656 = pneg %p322
        %p657 = pneg %p346
        %p658 = pneg %p343
        %p659 = pneg %p372
        %p660 = pneg %p369
        %s661 = smul.u32 2, %s26
        %p662 = scmp.lt.s32.totalorder %s661, 3
        %s663 = scalar_select %p662, %s661, 3
        %s664 = smul.addr %s663, 8
        %s665 = scalar_lea.vmem %s15, %s664
        %s666 = smul.u32 2, %s26
        %s667 = smul.u32 2, %s26
        %p668 = scmp.lt.s32.totalorder %s667, 3
        %s669 = scalar_select %p668, %s667, 3
        %s670 = smul.addr %s669, 4
        %s671 = scalar_lea.vmem %s1, %s670
        %s672 = smul.u32 2, %s26
        %s673 = smul.u32 2, %s26
        %p674 = scmp.lt.s32.totalorder %s673, 3
        %s675 = scalar_select %p674, %s673, 3
        %s676 = smul.addr %s675, 8
        %s677 = scalar_lea.vmem %s15, %s676
        %s678 = smul.u32 2, %s26
        %v680 = vld [vmem:[%s616] sm:$0xf]
        %v681 = vld [vmem:[%s616 + $0x4] sm:$0xf]
        %v682 = vld [vmem:[%s2] sm:$0xf]
        %v683 = vld [vmem:[%s2 + $0x4] sm:$0xf]
        %v684 = vld [vmem:[%s2 + $0x8] sm:$0xf]
        %v685 = vld [vmem:[%s2 + $0xc] sm:$0xf]
        %v686 = vld [vmem:[%s2 + $0x10] sm:$0xf]
        %v687 = vld [vmem:[%s2 + $0x14] sm:$0xf]
        %v688 = vld [vmem:[%s2 + $0x18] sm:$0xf]
        %v689 = vld [vmem:[%s2 + $0x1c] sm:$0x3]
        %s690 = scalar_lea.vmem %s616, 8 [#allocation2]
        %v691 = vld [vmem:[%s690] sm:$0xf]
        %v692 = vld [vmem:[%s690 + $0x4] sm:$0xf]
        %s693 = scalar_lea.vmem %s2, 32
        %v694 = vld [vmem:[%s693] sm:$0xf]
        %v695 = vld [vmem:[%s693 + $0x4] sm:$0xf]
        %v696 = vld [vmem:[%s693 + $0x8] sm:$0xf]
        %v697 = vld [vmem:[%s693 + $0xc] sm:$0xf]
        %v698 = vld [vmem:[%s693 + $0x10] sm:$0xf]
        %v699 = vld [vmem:[%s693 + $0x14] sm:$0xf]
        %v700 = vld [vmem:[%s693 + $0x18] sm:$0xf]
        %v701 = vld [vmem:[%s693 + $0x1c] sm:$0x3]
        %v704 = vunpack.c.l.b16 %v691
        %v705 = vunpack.c.l.b16 %v692
        %v706 = vpack.c.b16 %v705, %v704
        %v715 = vunpack.c.l.b16 %v694
        %v716 = vunpack.c.l.b16 %v695
        %v717 = vunpack.c.l.b16 %v696
        %v718 = vunpack.c.l.b16 %v697
        %v719 = vunpack.c.l.b16 %v698
        %v720 = vunpack.c.l.b16 %v699
        %v721 = vunpack.c.l.b16 %v700
        %v722 = vunpack.c.l.b16 %v701
        %v723 = vpack.c.b16 %v716, %v715
        %v724 = vpack.c.b16 %v718, %v717
        %v725 = vpack.c.b16 %v720, %v719
        %v726 = vpack.c.b16 %v722, %v721
        %vm730 = vcmask 490496
        %v732 = vsel %vm730, %v706, 0
        %vm734 = vcmask 1045504
        %v736 = vsel %vm734, %v726, 0
        %738 = vmatpush.bf16.msra.mxu0 0
        %739 = vmatpush.bf16.msra.mxu0 0
        %740 = vmatpush.bf16.msra.mxu0 0
        %741 = vmatpush.bf16.msra.mxu0 0
        %742 = vmatpush.bf16.msra.mxu0 %v736
        %743 = vmatpush.bf16.msra.mxu0 %v725
        %744 = vmatpush.bf16.msra.mxu0 %v724
        %745 = vmatpush.bf16.msra.mxu0 %v723
        %746 = vmatmul.bf16.gmra.mxu0 %v732
        %v747 = vpop.f32.mrf.mxu0
        %v748 = vadd.f32 0.0, %v747
        %v749 = vpop.f32.mrf.mxu0
        %v750 = vadd.f32 0.0, %v749
        %751 = vdwg.mxu0
        %v754 = vunpack.c.l.b16 %v680
        %v755 = vunpack.c.l.b16 %v681
        %v756 = vpack.c.b16 %v755, %v754
        %v765 = vunpack.c.l.b16 %v682
        %v766 = vunpack.c.l.b16 %v683
        %v767 = vunpack.c.l.b16 %v684
        %v768 = vunpack.c.l.b16 %v685
        %v769 = vunpack.c.l.b16 %v686
        %v770 = vunpack.c.l.b16 %v687
        %v771 = vunpack.c.l.b16 %v688
        %v772 = vunpack.c.l.b16 %v689
        %v773 = vpack.c.b16 %v766, %v765
        %v774 = vpack.c.b16 %v768, %v767
        %v775 = vpack.c.b16 %v770, %v769
        %v776 = vpack.c.b16 %v772, %v771
        %v781 = vsel %vm730, %v756, 0
        %v784 = vsel %vm734, %v776, 0
        %786 = vmatpush.bf16.msra.mxu0 0
        %787 = vmatpush.bf16.msra.mxu0 0
        %788 = vmatpush.bf16.msra.mxu0 0
        %789 = vmatpush.bf16.msra.mxu0 0
        %790 = vmatpush.bf16.msra.mxu0 %v784
        %791 = vmatpush.bf16.msra.mxu0 %v775
        %792 = vmatpush.bf16.msra.mxu0 %v774
        %793 = vmatpush.bf16.msra.mxu0 %v773
        %794 = vmatmul.bf16.gmra.mxu0 %v781
        %v795 = vpop.f32.mrf.mxu0
        %v796 = vadd.f32 %v748, %v795
        %v797 = vpop.f32.mrf.mxu0
        %v798 = vadd.f32 %v750, %v797
        %799 = vdwg.mxu0
        %s800 = scalar_lea.vmem %s616, 16 [#allocation2]
        %v801 = vld [vmem:[%s800] sm:$0xf]
        %v802 = vld [vmem:[%s800 + $0x4] sm:$0xf]
        %s803 = scalar_lea.vmem %s2, 64
        %v804 = vld [vmem:[%s803] sm:$0xf]
        %v805 = vld [vmem:[%s803 + $0x4] sm:$0xf]
        %v806 = vld [vmem:[%s803 + $0x8] sm:$0xf]
        %v807 = vld [vmem:[%s803 + $0xc] sm:$0xf]
        %v808 = vld [vmem:[%s803 + $0x10] sm:$0xf]
        %v809 = vld [vmem:[%s803 + $0x14] sm:$0xf]
        %v810 = vld [vmem:[%s803 + $0x18] sm:$0xf]
        %v811 = vld [vmem:[%s803 + $0x1c] sm:$0x3]
        %v814 = vunpack.c.l.b16 %v801
        %v815 = vunpack.c.l.b16 %v802
        %v816 = vpack.c.b16 %v815, %v814
        %v825 = vunpack.c.l.b16 %v804
        %v826 = vunpack.c.l.b16 %v805
        %v827 = vunpack.c.l.b16 %v806
        %v828 = vunpack.c.l.b16 %v807
        %v829 = vunpack.c.l.b16 %v808
        %v830 = vunpack.c.l.b16 %v809
        %v831 = vunpack.c.l.b16 %v810
        %v832 = vunpack.c.l.b16 %v811
        %v833 = vpack.c.b16 %v826, %v825
        %v834 = vpack.c.b16 %v828, %v827
        %v835 = vpack.c.b16 %v830, %v829
        %v836 = vpack.c.b16 %v832, %v831
        %v841 = vsel %vm730, %v816, 0
        %v844 = vsel %vm734, %v836, 0
        %846 = vmatpush.bf16.msra.mxu0 0
        %847 = vmatpush.bf16.msra.mxu0 0
        %848 = vmatpush.bf16.msra.mxu0 0
        %849 = vmatpush.bf16.msra.mxu0 0
        %850 = vmatpush.bf16.msra.mxu0 %v844
        %851 = vmatpush.bf16.msra.mxu0 %v835
        %852 = vmatpush.bf16.msra.mxu0 %v834
        %853 = vmatpush.bf16.msra.mxu0 %v833
        %854 = vmatmul.bf16.gmra.mxu0 %v841
        %v855 = vpop.f32.mrf.mxu0
        %v856 = vadd.f32 0.0, %v855
        %v857 = vpop.f32.mrf.mxu0
        %v858 = vadd.f32 0.0, %v857
        %859 = vdwg.mxu0
        %v860 = vadd.f32 %v796, %v856
        %v861 = vadd.f32 %v798, %v858
        %v862 = vld [vmem:[%s3] sm:$0x1]
        %v864 = vperm.slane %v862, 0
        %v866 = vadd.f32 %v860, %v864
        %v867 = vadd.f32 %v861, %v864
        %v868 = vmax.f32 %v866, 0.0
        %v869 = vmax.f32 %v867, 0.0
        %870 = vmatpush.bf16.msra.mxu0 0
        %871 = vmatpush.bf16.msra.mxu0 0
        %872 = vmatpush.bf16.msra.mxu0 0
        %873 = vmatpush.bf16.msra.mxu0 0
        %874 = vmatpush.bf16.msra.mxu0 %v736
        %875 = vmatpush.bf16.msra.mxu0 %v725
        %876 = vmatpush.bf16.msra.mxu0 %v724
        %877 = vmatpush.bf16.msra.mxu0 %v723
        %878 = vmatmul.bf16.gmra.mxu0 %v841
        %v879 = vpop.f32.mrf.mxu0
        %v880 = vadd.f32 0.0, %v879
        %v881 = vpop.f32.mrf.mxu0
        %v882 = vadd.f32 0.0, %v881
        %883 = vdwg.mxu0
        %884 = vmatpush.bf16.msra.mxu0 0
        %885 = vmatpush.bf16.msra.mxu0 0
        %886 = vmatpush.bf16.msra.mxu0 0
        %887 = vmatpush.bf16.msra.mxu0 0
        %888 = vmatpush.bf16.msra.mxu0 %v784
        %889 = vmatpush.bf16.msra.mxu0 %v775
        %890 = vmatpush.bf16.msra.mxu0 %v774
        %891 = vmatpush.bf16.msra.mxu0 %v773
        %892 = vmatmul.bf16.gmra.mxu0 %v732
        %v893 = vpop.f32.mrf.mxu0
        %v894 = vadd.f32 %v880, %v893
        %v895 = vpop.f32.mrf.mxu0
        %v896 = vadd.f32 %v882, %v895
        %897 = vdwg.mxu0
        %s898 = scalar_lea.vmem %s616, 24 [#allocation2]
        %v899 = vld [vmem:[%s898] sm:$0xf]
        %v900 = vld [vmem:[%s898 + $0x4] sm:$0xf]
        %v903 = vunpack.c.l.b16 %v899
        %v904 = vunpack.c.l.b16 %v900
        %v905 = vpack.c.b16 %v904, %v903
        %v907 = vsel %vm730, %v905, 0
        %909 = vmatpush.bf16.msra.mxu0 0
        %910 = vmatpush.bf16.msra.mxu0 0
        %911 = vmatpush.bf16.msra.mxu0 0
        %912 = vmatpush.bf16.msra.mxu0 0
        %913 = vmatpush.bf16.msra.mxu0 %v844
        %914 = vmatpush.bf16.msra.mxu0 %v835
        %915 = vmatpush.bf16.msra.mxu0 %v834
        %916 = vmatpush.bf16.msra.mxu0 %v833
        %917 = vmatmul.bf16.gmra.mxu0 %v907
        %v918 = vpop.f32.mrf.mxu0
        %v919 = vadd.f32 0.0, %v918
        %v920 = vpop.f32.mrf.mxu0
        %v921 = vadd.f32 0.0, %v920
        %922 = vdwg.mxu0
        %v923 = vadd.f32 %v894, %v919
        %v924 = vadd.f32 %v896, %v921
        %v925 = vadd.f32 %v923, %v864
        %v926 = vadd.f32 %v924, %v864
        %v927 = vmax.f32 %v925, 0.0
        %v928 = vmax.f32 %v926, 0.0
        %v929 = vmax.f32 %v868, %v927
        %v930 = vmax.f32 %v869, %v928
        %v931 = vpack.c.bf16 %v930, %v929
        %v932 = vld [vmem:[%s4] sm:$0xf]
        %v933 = vld [vmem:[%s4 + $0x4] sm:$0xf]
        %v934 = vld [vmem:[%s4 + $0x8] sm:$0xf]
        %v935 = vld [vmem:[%s4 + $0xc] sm:$0xf]
        %v936 = vld [vmem:[%s4 + $0x10] sm:$0xf]
        %v937 = vld [vmem:[%s4 + $0x14] sm:$0xf]
        %v938 = vld [vmem:[%s4 + $0x18] sm:$0xf]
        %v939 = vld [vmem:[%s4 + $0x1c] sm:$0xf]
        %v940 = vld [vmem:[%s4 + $0x20] sm:$0xf]
        %v941 = vld [vmem:[%s4 + $0x24] sm:$0xf]
        %v942 = vld [vmem:[%s4 + $0x28] sm:$0xf]
        %v943 = vld [vmem:[%s4 + $0x2c] sm:$0xf]
        %v944 = vld [vmem:[%s4 + $0x30] sm:$0xf]
        %v958 = vunpack.c.l.b16 %v932
        %v959 = vunpack.c.l.b16 %v933
        %v960 = vunpack.c.l.b16 %v934
        %v961 = vunpack.c.l.b16 %v935
        %v962 = vunpack.c.l.b16 %v936
        %v963 = vunpack.c.l.b16 %v937
        %v964 = vunpack.c.l.b16 %v938
        %v965 = vunpack.c.l.b16 %v939
        %v966 = vunpack.c.l.b16 %v940
        %v967 = vunpack.c.l.b16 %v941
        %v968 = vunpack.c.l.b16 %v942
        %v969 = vunpack.c.l.b16 %v943
        %v970 = vunpack.c.l.b16 %v944
        %v971 = vpack.c.b16 %v959, %v958
        %v972 = vpack.c.b16 %v961, %v960
        %v973 = vpack.c.b16 %v963, %v962
        %v974 = vpack.c.b16 %v965, %v964
        %v975 = vpack.c.b16 %v967, %v966
        %v976 = vpack.c.b16 %v969, %v968
        %v977 = vpack.c.b16 %v970, %v970
        %vm984 = vcmask 850944
        %v986 = vsel %vm984, %v931, 0
        %vm988 = vcmask 1043456
        %v990 = vsel %vm988, %v977, 0
        %992 = vmatpush.bf16.msra.mxu0 0
        %993 = vmatpush.bf16.msra.mxu0 %v990
        %994 = vmatpush.bf16.msra.mxu0 %v976
        %995 = vmatpush.bf16.msra.mxu0 %v975
        %996 = vmatpush.bf16.msra.mxu0 %v974
        %997 = vmatpush.bf16.msra.mxu0 %v973
        %998 = vmatpush.bf16.msra.mxu0 %v972
        %999 = vmatpush.bf16.msra.mxu0 %v971
        %1000 = vmatmul.bf16.gmra.mxu0 %v986
        %v1001 = vpop.f32.mrf.mxu0
        %v1002 = vadd.f32 0.0, %v1001
        %v1003 = vpop.f32.mrf.mxu0
        %v1004 = vadd.f32 0.0, %v1003
        %1005 = vdwg.mxu0
        %v1006 = vld [vmem:[%s5] sm:$0xf]
        %v1007 = vld [vmem:[%s5 + $0x4] sm:$0xf]
        %v1008 = vld [vmem:[%s5 + $0x8] sm:$0xf]
        %v1009 = vld [vmem:[%s5 + $0xc] sm:$0xf]
        %v1010 = vld [vmem:[%s5 + $0x10] sm:$0xf]
        %v1011 = vld [vmem:[%s5 + $0x14] sm:$0xf]
        %v1012 = vld [vmem:[%s5 + $0x18] sm:$0xf]
        %v1013 = vld [vmem:[%s5 + $0x1c] sm:$0xf]
        %v1014 = vld [vmem:[%s5 + $0x20] sm:$0xf]
        %v1015 = vld [vmem:[%s5 + $0x24] sm:$0xf]
        %v1016 = vld [vmem:[%s5 + $0x28] sm:$0xf]
        %v1017 = vld [vmem:[%s5 + $0x2c] sm:$0xf]
        %v1018 = vld [vmem:[%s5 + $0x30] sm:$0xf]
        %v1032 = vunpack.c.l.b16 %v1006
        %v1033 = vunpack.c.l.b16 %v1007
        %v1034 = vunpack.c.l.b16 %v1008
        %v1035 = vunpack.c.l.b16 %v1009
        %v1036 = vunpack.c.l.b16 %v1010
        %v1037 = vunpack.c.l.b16 %v1011
        %v1038 = vunpack.c.l.b16 %v1012
        %v1039 = vunpack.c.l.b16 %v1013
        %v1040 = vunpack.c.l.b16 %v1014
        %v1041 = vunpack.c.l.b16 %v1015
        %v1042 = vunpack.c.l.b16 %v1016
        %v1043 = vunpack.c.l.b16 %v1017
        %v1044 = vunpack.c.l.b16 %v1018
        %v1045 = vpack.c.b16 %v1033, %v1032
        %v1046 = vpack.c.b16 %v1035, %v1034
        %v1047 = vpack.c.b16 %v1037, %v1036
        %v1048 = vpack.c.b16 %v1039, %v1038
        %v1049 = vpack.c.b16 %v1041, %v1040
        %v1050 = vpack.c.b16 %v1043, %v1042
        %v1051 = vpack.c.b16 %v1044, %v1044
        %v1059 = vsel %vm988, %v1051, 0
        %1061 = vmatpush.bf16.msra.mxu0 0
        %1062 = vmatpush.bf16.msra.mxu0 %v1059
        %1063 = vmatpush.bf16.msra.mxu0 %v1050
        %1064 = vmatpush.bf16.msra.mxu0 %v1049
        %1065 = vmatpush.bf16.msra.mxu0 %v1048
        %1066 = vmatpush.bf16.msra.mxu0 %v1047
        %1067 = vmatpush.bf16.msra.mxu0 %v1046
        %1068 = vmatpush.bf16.msra.mxu0 %v1045
        %1069 = vmatmul.bf16.gmra.mxu0 %v986
        %v1070 = vpop.f32.mrf.mxu0
        %v1071 = vadd.f32 0.0, %v1070
        %v1072 = vpop.f32.mrf.mxu0
        %v1073 = vadd.f32 0.0, %v1072
        %1074 = vdwg.mxu0
        %v1075 = vmax.f32 %v1002, %v1071
        %v1076 = vmax.f32 %v1004, %v1073
        %v1077 = vpack.c.bf16 %v1076, %v1075
        %1078 = vmatpush.bf16.msra.mxu0 0
        %1079 = vmatpush.bf16.msra.mxu0 0
        %1080 = vmatpush.bf16.msra.mxu0 0
        %1081 = vmatpush.bf16.msra.mxu0 0
        %1082 = vmatpush.bf16.msra.mxu0 %v736
        %1083 = vmatpush.bf16.msra.mxu0 %v725
        %1084 = vmatpush.bf16.msra.mxu0 %v724
        %1085 = vmatpush.bf16.msra.mxu0 %v723
        %1086 = vmatmul.bf16.gmra.mxu0 %v907
        %v1087 = vpop.f32.mrf.mxu0
        %v1088 = vadd.f32 0.0, %v1087
        %v1089 = vpop.f32.mrf.mxu0
        %v1090 = vadd.f32 0.0, %v1089
        %1091 = vdwg.mxu0
        %1092 = vmatpush.bf16.msra.mxu0 0
        %1093 = vmatpush.bf16.msra.mxu0 0
        %1094 = vmatpush.bf16.msra.mxu0 0
        %1095 = vmatpush.bf16.msra.mxu0 0
        %1096 = vmatpush.bf16.msra.mxu0 %v784
        %1097 = vmatpush.bf16.msra.mxu0 %v775
        %1098 = vmatpush.bf16.msra.mxu0 %v774
        %1099 = vmatpush.bf16.msra.mxu0 %v773
        %1100 = vmatmul.bf16.gmra.mxu0 %v841
        %v1101 = vpop.f32.mrf.mxu0
        %v1102 = vadd.f32 %v1088, %v1101
        %v1103 = vpop.f32.mrf.mxu0
        %v1104 = vadd.f32 %v1090, %v1103
        %1105 = vdwg.mxu0
        %s1106 = scalar_lea.vmem %s616, 32 [#allocation2]
        %v1107 = vld [vmem:[%s1106] sm:$0xf]
        %v1108 = vld [vmem:[%s1106 + $0x4] sm:$0xf]
        %v1111 = vunpack.c.l.b16 %v1107
        %v1112 = vunpack.c.l.b16 %v1108
        %v1113 = vpack.c.b16 %v1112, %v1111
        %v1115 = vsel %vm730, %v1113, 0
        %1117 = vmatpush.bf16.msra.mxu0 0
        %1118 = vmatpush.bf16.msra.mxu0 0
        %1119 = vmatpush.bf16.msra.mxu0 0
        %1120 = vmatpush.bf16.msra.mxu0 0
        %1121 = vmatpush.bf16.msra.mxu0 %v844
        %1122 = vmatpush.bf16.msra.mxu0 %v835
        %1123 = vmatpush.bf16.msra.mxu0 %v834
        %1124 = vmatpush.bf16.msra.mxu0 %v833
        %1125 = vmatmul.bf16.gmra.mxu0 %v1115
        %v1126 = vpop.f32.mrf.mxu0
        %v1127 = vadd.f32 0.0, %v1126
        %v1128 = vpop.f32.mrf.mxu0
        %v1129 = vadd.f32 0.0, %v1128
        %1130 = vdwg.mxu0
        %v1131 = vadd.f32 %v1102, %v1127
        %v1132 = vadd.f32 %v1104, %v1129
        %v1133 = vadd.f32 %v1131, %v864
        %v1134 = vadd.f32 %v1132, %v864
        %v1135 = vmax.f32 %v1133, 0.0
        %v1136 = vmax.f32 %v1134, 0.0
        %1137 = vmatpush.bf16.msra.mxu0 0
        %1138 = vmatpush.bf16.msra.mxu0 0
        %1139 = vmatpush.bf16.msra.mxu0 0
        %1140 = vmatpush.bf16.msra.mxu0 0
        %1141 = vmatpush.bf16.msra.mxu0 %v736
        %1142 = vmatpush.bf16.msra.mxu0 %v725
        %1143 = vmatpush.bf16.msra.mxu0 %v724
        %1144 = vmatpush.bf16.msra.mxu0 %v723
        %1145 = vmatmul.bf16.gmra.mxu0 %v1115
        %v1146 = vpop.f32.mrf.mxu0
        %v1147 = vadd.f32 0.0, %v1146
        %v1148 = vpop.f32.mrf.mxu0
        %v1149 = vadd.f32 0.0, %v1148
        %1150 = vdwg.mxu0
        %1151 = vmatpush.bf16.msra.mxu0 0
        %1152 = vmatpush.bf16.msra.mxu0 0
        %1153 = vmatpush.bf16.msra.mxu0 0
        %1154 = vmatpush.bf16.msra.mxu0 0
        %1155 = vmatpush.bf16.msra.mxu0 %v784
        %1156 = vmatpush.bf16.msra.mxu0 %v775
        %1157 = vmatpush.bf16.msra.mxu0 %v774
        %1158 = vmatpush.bf16.msra.mxu0 %v773
        %1159 = vmatmul.bf16.gmra.mxu0 %v907
        %v1160 = vpop.f32.mrf.mxu0
        %v1161 = vadd.f32 %v1147, %v1160
        %v1162 = vpop.f32.mrf.mxu0
        %v1163 = vadd.f32 %v1149, %v1162
        %1164 = vdwg.mxu0
        %s1165 = scalar_lea.vmem %s616, 40 [#allocation2]
        %v1166 = vld [vmem:[%s1165] sm:$0xf]
        %v1167 = vld [vmem:[%s1165 + $0x4] sm:$0xf]
        %v1170 = vunpack.c.l.b16 %v1166
        %v1171 = vunpack.c.l.b16 %v1167
        %v1172 = vpack.c.b16 %v1171, %v1170
        %v1174 = vsel %vm730, %v1172, 0
        %1176 = vmatpush.bf16.msra.mxu0 0
        %1177 = vmatpush.bf16.msra.mxu0 0
        %1178 = vmatpush.bf16.msra.mxu0 0
        %1179 = vmatpush.bf16.msra.mxu0 0
        %1180 = vmatpush.bf16.msra.mxu0 %v844
        %1181 = vmatpush.bf16.msra.mxu0 %v835
        %1182 = vmatpush.bf16.msra.mxu0 %v834
        %1183 = vmatpush.bf16.msra.mxu0 %v833
        %1184 = vmatmul.bf16.gmra.mxu0 %v1174
        %v1185 = vpop.f32.mrf.mxu0
        %v1186 = vadd.f32 0.0, %v1185
        %v1187 = vpop.f32.mrf.mxu0
        %v1188 = vadd.f32 0.0, %v1187
        %1189 = vdwg.mxu0
        %v1190 = vadd.f32 %v1161, %v1186
        %v1191 = vadd.f32 %v1163, %v1188
        %v1192 = vadd.f32 %v1190, %v864
        %v1193 = vadd.f32 %v1191, %v864
        %v1194 = vmax.f32 %v1192, 0.0
        %v1195 = vmax.f32 %v1193, 0.0
        %v1196 = vmax.f32 %v1135, %v1194
        %v1197 = vmax.f32 %v1136, %v1195
        %v1198 = vpack.c.bf16 %v1197, %v1196
        %v1200 = vsel %vm984, %v1198, 0
        %1202 = vmatpush.bf16.msra.mxu0 0
        %1203 = vmatpush.bf16.msra.mxu0 %v990
        %1204 = vmatpush.bf16.msra.mxu0 %v976
        %1205 = vmatpush.bf16.msra.mxu0 %v975
        %1206 = vmatpush.bf16.msra.mxu0 %v974
        %1207 = vmatpush.bf16.msra.mxu0 %v973
        %1208 = vmatpush.bf16.msra.mxu0 %v972
        %1209 = vmatpush.bf16.msra.mxu0 %v971
        %1210 = vmatmul.bf16.gmra.mxu0 %v1200
        %v1211 = vpop.f32.mrf.mxu0
        %v1212 = vadd.f32 0.0, %v1211
        %v1213 = vpop.f32.mrf.mxu0
        %v1214 = vadd.f32 0.0, %v1213
        %1215 = vdwg.mxu0
        %1216 = vmatpush.bf16.msra.mxu0 0
        %1217 = vmatpush.bf16.msra.mxu0 %v1059
        %1218 = vmatpush.bf16.msra.mxu0 %v1050
        %1219 = vmatpush.bf16.msra.mxu0 %v1049
        %1220 = vmatpush.bf16.msra.mxu0 %v1048
        %1221 = vmatpush.bf16.msra.mxu0 %v1047
        %1222 = vmatpush.bf16.msra.mxu0 %v1046
        %1223 = vmatpush.bf16.msra.mxu0 %v1045
        %1224 = vmatmul.bf16.gmra.mxu0 %v1200
        %v1225 = vpop.f32.mrf.mxu0
        %v1226 = vadd.f32 0.0, %v1225
        %v1227 = vpop.f32.mrf.mxu0
        %v1228 = vadd.f32 0.0, %v1227
        %1229 = vdwg.mxu0
        %v1230 = vmax.f32 %v1212, %v1226
        %v1231 = vmax.f32 %v1214, %v1228
        %v1232 = vpack.c.bf16 %v1231, %v1230
        %1233 = vmatpush.bf16.msra.mxu0 0
        %1234 = vmatpush.bf16.msra.mxu0 0
        %1235 = vmatpush.bf16.msra.mxu0 0
        %1236 = vmatpush.bf16.msra.mxu0 0
        %1237 = vmatpush.bf16.msra.mxu0 %v736
        %1238 = vmatpush.bf16.msra.mxu0 %v725
        %1239 = vmatpush.bf16.msra.mxu0 %v724
        %1240 = vmatpush.bf16.msra.mxu0 %v723
        %1241 = vmatmul.bf16.gmra.mxu0 %v1174
        %v1242 = vpop.f32.mrf.mxu0
        %v1243 = vadd.f32 0.0, %v1242
        %v1244 = vpop.f32.mrf.mxu0
        %v1245 = vadd.f32 0.0, %v1244
        %1246 = vdwg.mxu0
        %1247 = vmatpush.bf16.msra.mxu0 0
        %1248 = vmatpush.bf16.msra.mxu0 0
        %1249 = vmatpush.bf16.msra.mxu0 0
        %1250 = vmatpush.bf16.msra.mxu0 0
        %1251 = vmatpush.bf16.msra.mxu0 %v784
        %1252 = vmatpush.bf16.msra.mxu0 %v775
        %1253 = vmatpush.bf16.msra.mxu0 %v774
        %1254 = vmatpush.bf16.msra.mxu0 %v773
        %1255 = vmatmul.bf16.gmra.mxu0 %v1115
        %v1256 = vpop.f32.mrf.mxu0
        %v1257 = vadd.f32 %v1243, %v1256
        %v1258 = vpop.f32.mrf.mxu0
        %v1259 = vadd.f32 %v1245, %v1258
        %1260 = vdwg.mxu0
        %s1261 = scalar_lea.vmem %s616, 48 [#allocation2]
        %v1262 = vld [vmem:[%s1261] sm:$0xf]
        %v1263 = vld [vmem:[%s1261 + $0x4] sm:$0xf]
        %v1266 = vunpack.c.l.b16 %v1262
        %v1267 = vunpack.c.l.b16 %v1263
        %v1268 = vpack.c.b16 %v1267, %v1266
        %v1270 = vsel %vm730, %v1268, 0
        %1272 = vmatpush.bf16.msra.mxu0 0
        %1273 = vmatpush.bf16.msra.mxu0 0
        %1274 = vmatpush.bf16.msra.mxu0 0
        %1275 = vmatpush.bf16.msra.mxu0 0
        %1276 = vmatpush.bf16.msra.mxu0 %v844
        %1277 = vmatpush.bf16.msra.mxu0 %v835
        %1278 = vmatpush.bf16.msra.mxu0 %v834
        %1279 = vmatpush.bf16.msra.mxu0 %v833
        %1280 = vmatmul.bf16.gmra.mxu0 %v1270
        %v1281 = vpop.f32.mrf.mxu0
        %v1282 = vadd.f32 0.0, %v1281
        %v1283 = vpop.f32.mrf.mxu0
        %v1284 = vadd.f32 0.0, %v1283
        %1285 = vdwg.mxu0
        %v1286 = vadd.f32 %v1257, %v1282
        %v1287 = vadd.f32 %v1259, %v1284
        %v1288 = vadd.f32 %v1286, %v864
        %v1289 = vadd.f32 %v1287, %v864
        %v1290 = vmax.f32 %v1288, 0.0
        %v1291 = vmax.f32 %v1289, 0.0
        %1292 = vmatpush.bf16.msra.mxu0 0
        %1293 = vmatpush.bf16.msra.mxu0 0
        %1294 = vmatpush.bf16.msra.mxu0 0
        %1295 = vmatpush.bf16.msra.mxu0 0
        %1296 = vmatpush.bf16.msra.mxu0 %v736
        %1297 = vmatpush.bf16.msra.mxu0 %v725
        %1298 = vmatpush.bf16.msra.mxu0 %v724
        %1299 = vmatpush.bf16.msra.mxu0 %v723
        %1300 = vmatmul.bf16.gmra.mxu0 %v1270
        %v1301 = vpop.f32.mrf.mxu0
        %v1302 = vadd.f32 0.0, %v1301
        %v1303 = vpop.f32.mrf.mxu0
        %v1304 = vadd.f32 0.0, %v1303
        %1305 = vdwg.mxu0
        %1306 = vmatpush.bf16.msra.mxu0 0
        %1307 = vmatpush.bf16.msra.mxu0 0
        %1308 = vmatpush.bf16.msra.mxu0 0
        %1309 = vmatpush.bf16.msra.mxu0 0
        %1310 = vmatpush.bf16.msra.mxu0 %v784
        %1311 = vmatpush.bf16.msra.mxu0 %v775
        %1312 = vmatpush.bf16.msra.mxu0 %v774
        %1313 = vmatpush.bf16.msra.mxu0 %v773
        %1314 = vmatmul.bf16.gmra.mxu0 %v1174
        %v1315 = vpop.f32.mrf.mxu0
        %v1316 = vadd.f32 %v1302, %v1315
        %v1317 = vpop.f32.mrf.mxu0
        %v1318 = vadd.f32 %v1304, %v1317
        %1319 = vdwg.mxu0
        %s1320 = scalar_lea.vmem %s616, 56 [#allocation2]
        %v1321 = vld [vmem:[%s1320] sm:$0xf]
        %v1322 = vld [vmem:[%s1320 + $0x4] sm:$0xf]
        %v1325 = vunpack.c.l.b16 %v1321
        %v1326 = vunpack.c.l.b16 %v1322
        %v1327 = vpack.c.b16 %v1326, %v1325
        %v1329 = vsel %vm730, %v1327, 0
        %1331 = vmatpush.bf16.msra.mxu0 0
        %1332 = vmatpush.bf16.msra.mxu0 0
        %1333 = vmatpush.bf16.msra.mxu0 0
        %1334 = vmatpush.bf16.msra.mxu0 0
        %1335 = vmatpush.bf16.msra.mxu0 %v844
        %1336 = vmatpush.bf16.msra.mxu0 %v835
        %1337 = vmatpush.bf16.msra.mxu0 %v834
        %1338 = vmatpush.bf16.msra.mxu0 %v833
        %1339 = vmatmul.bf16.gmra.mxu0 %v1329
        %v1340 = vpop.f32.mrf.mxu0
        %v1341 = vadd.f32 0.0, %v1340
        %v1342 = vpop.f32.mrf.mxu0
        %v1343 = vadd.f32 0.0, %v1342
        %1344 = vdwg.mxu0
        %v1345 = vadd.f32 %v1316, %v1341
        %v1346 = vadd.f32 %v1318, %v1343
        %v1347 = vadd.f32 %v1345, %v864
        %v1348 = vadd.f32 %v1346, %v864
        %v1349 = vmax.f32 %v1347, 0.0
        %v1350 = vmax.f32 %v1348, 0.0
        %v1351 = vmax.f32 %v1290, %v1349
        %v1352 = vmax.f32 %v1291, %v1350
        %v1353 = vpack.c.bf16 %v1352, %v1351
        %v1355 = vsel %vm984, %v1353, 0
        %1357 = vmatpush.bf16.msra.mxu0 0
        %1358 = vmatpush.bf16.msra.mxu0 %v990
        %1359 = vmatpush.bf16.msra.mxu0 %v976
        %1360 = vmatpush.bf16.msra.mxu0 %v975
        %1361 = vmatpush.bf16.msra.mxu0 %v974
        %1362 = vmatpush.bf16.msra.mxu0 %v973
        %1363 = vmatpush.bf16.msra.mxu0 %v972
        %1364 = vmatpush.bf16.msra.mxu0 %v971
        %1365 = vmatmul.bf16.gmra.mxu0 %v1355
        %v1366 = vpop.f32.mrf.mxu0
        %v1367 = vadd.f32 0.0, %v1366
        %v1368 = vpop.f32.mrf.mxu0
        %v1369 = vadd.f32 0.0, %v1368
        %1370 = vdwg.mxu0
        %1371 = vmatpush.bf16.msra.mxu0 0
        %1372 = vmatpush.bf16.msra.mxu0 %v1059
        %1373 = vmatpush.bf16.msra.mxu0 %v1050
        %1374 = vmatpush.bf16.msra.mxu0 %v1049
        %1375 = vmatpush.bf16.msra.mxu0 %v1048
        %1376 = vmatpush.bf16.msra.mxu0 %v1047
        %1377 = vmatpush.bf16.msra.mxu0 %v1046
        %1378 = vmatpush.bf16.msra.mxu0 %v1045
        %1379 = vmatmul.bf16.gmra.mxu0 %v1355
        %v1380 = vpop.f32.mrf.mxu0
        %v1381 = vadd.f32 0.0, %v1380
        %v1382 = vpop.f32.mrf.mxu0
        %v1383 = vadd.f32 0.0, %v1382
        %1384 = vdwg.mxu0
        %v1385 = vmax.f32 %v1367, %v1381
        %v1386 = vmax.f32 %v1369, %v1383
        %v1387 = vpack.c.bf16 %v1386, %v1385
        %1388 = vmatpush.bf16.msra.mxu0 0
        %1389 = vmatpush.bf16.msra.mxu0 0
        %1390 = vmatpush.bf16.msra.mxu0 0
        %1391 = vmatpush.bf16.msra.mxu0 0
        %1392 = vmatpush.bf16.msra.mxu0 %v736
        %1393 = vmatpush.bf16.msra.mxu0 %v725
        %1394 = vmatpush.bf16.msra.mxu0 %v724
        %1395 = vmatpush.bf16.msra.mxu0 %v723
        %1396 = vmatmul.bf16.gmra.mxu0 %v1329
        %v1397 = vpop.f32.mrf.mxu0
        %v1398 = vadd.f32 0.0, %v1397
        %v1399 = vpop.f32.mrf.mxu0
        %v1400 = vadd.f32 0.0, %v1399
        %1401 = vdwg.mxu0
        %1402 = vmatpush.bf16.msra.mxu0 0
        %1403 = vmatpush.bf16.msra.mxu0 0
        %1404 = vmatpush.bf16.msra.mxu0 0
        %1405 = vmatpush.bf16.msra.mxu0 0
        %1406 = vmatpush.bf16.msra.mxu0 %v784
        %1407 = vmatpush.bf16.msra.mxu0 %v775
        %1408 = vmatpush.bf16.msra.mxu0 %v774
        %1409 = vmatpush.bf16.msra.mxu0 %v773
        %1410 = vmatmul.bf16.gmra.mxu0 %v1270
        %v1411 = vpop.f32.mrf.mxu0
        %v1412 = vadd.f32 %v1398, %v1411
        %v1413 = vpop.f32.mrf.mxu0
        %v1414 = vadd.f32 %v1400, %v1413
        %1415 = vdwg.mxu0
        %s1416 = scalar_lea.vmem %s616, 64 [#allocation2]
        %v1417 = vld [vmem:[%s1416] sm:$0xf]
        %v1418 = vld [vmem:[%s1416 + $0x4] sm:$0xf]
        %v1421 = vunpack.c.l.b16 %v1417
        %v1422 = vunpack.c.l.b16 %v1418
        %v1423 = vpack.c.b16 %v1422, %v1421
        %v1425 = vsel %vm730, %v1423, 0
        %1427 = vmatpush.bf16.msra.mxu0 0
        %1428 = vmatpush.bf16.msra.mxu0 0
        %1429 = vmatpush.bf16.msra.mxu0 0
        %1430 = vmatpush.bf16.msra.mxu0 0
        %1431 = vmatpush.bf16.msra.mxu0 %v844
        %1432 = vmatpush.bf16.msra.mxu0 %v835
        %1433 = vmatpush.bf16.msra.mxu0 %v834
        %1434 = vmatpush.bf16.msra.mxu0 %v833
        %1435 = vmatmul.bf16.gmra.mxu0 %v1425
        %v1436 = vpop.f32.mrf.mxu0
        %v1437 = vadd.f32 0.0, %v1436
        %v1438 = vpop.f32.mrf.mxu0
        %v1439 = vadd.f32 0.0, %v1438
        %1440 = vdwg.mxu0
        %v1441 = vadd.f32 %v1412, %v1437
        %v1442 = vadd.f32 %v1414, %v1439
        %v1443 = vadd.f32 %v1441, %v864
        %v1444 = vadd.f32 %v1442, %v864
        %v1445 = vmax.f32 %v1443, 0.0
        %v1446 = vmax.f32 %v1444, 0.0
        %1447 = vmatpush.bf16.msra.mxu0 0
        %1448 = vmatpush.bf16.msra.mxu0 0
        %1449 = vmatpush.bf16.msra.mxu0 0
        %1450 = vmatpush.bf16.msra.mxu0 0
        %1451 = vmatpush.bf16.msra.mxu0 %v736
        %1452 = vmatpush.bf16.msra.mxu0 %v725
        %1453 = vmatpush.bf16.msra.mxu0 %v724
        %1454 = vmatpush.bf16.msra.mxu0 %v723
        %1455 = vmatmul.bf16.gmra.mxu0 %v1425
        %v1456 = vpop.f32.mrf.mxu0
        %v1457 = vadd.f32 0.0, %v1456
        %v1458 = vpop.f32.mrf.mxu0
        %v1459 = vadd.f32 0.0, %v1458
        %1460 = vdwg.mxu0
        %1461 = vmatpush.bf16.msra.mxu0 0
        %1462 = vmatpush.bf16.msra.mxu0 0
        %1463 = vmatpush.bf16.msra.mxu0 0
        %1464 = vmatpush.bf16.msra.mxu0 0
        %1465 = vmatpush.bf16.msra.mxu0 %v784
        %1466 = vmatpush.bf16.msra.mxu0 %v775
        %1467 = vmatpush.bf16.msra.mxu0 %v774
        %1468 = vmatpush.bf16.msra.mxu0 %v773
        %1469 = vmatmul.bf16.gmra.mxu0 %v1329
        %v1470 = vpop.f32.mrf.mxu0
        %v1471 = vadd.f32 %v1457, %v1470
        %v1472 = vpop.f32.mrf.mxu0
        %v1473 = vadd.f32 %v1459, %v1472
        %1474 = vdwg.mxu0
        %s1475 = scalar_lea.vmem %s616, 72 [#allocation2]
        %v1476 = vld [vmem:[%s1475] sm:$0xf]
        %v1477 = vld [vmem:[%s1475 + $0x4] sm:$0xf]
        %v1480 = vunpack.c.l.b16 %v1476
        %v1481 = vunpack.c.l.b16 %v1477
        %v1482 = vpack.c.b16 %v1481, %v1480
        %v1484 = vsel %vm730, %v1482, 0
        %1486 = vmatpush.bf16.msra.mxu0 0
        %1487 = vmatpush.bf16.msra.mxu0 0
        %1488 = vmatpush.bf16.msra.mxu0 0
        %1489 = vmatpush.bf16.msra.mxu0 0
        %1490 = vmatpush.bf16.msra.mxu0 %v844
        %1491 = vmatpush.bf16.msra.mxu0 %v835
        %1492 = vmatpush.bf16.msra.mxu0 %v834
        %1493 = vmatpush.bf16.msra.mxu0 %v833
        %1494 = vmatmul.bf16.gmra.mxu0 %v1484
        %v1495 = vpop.f32.mrf.mxu0
        %v1496 = vadd.f32 0.0, %v1495
        %v1497 = vpop.f32.mrf.mxu0
        %v1498 = vadd.f32 0.0, %v1497
        %1499 = vdwg.mxu0
        %v1500 = vadd.f32 %v1471, %v1496
        %v1501 = vadd.f32 %v1473, %v1498
        %v1502 = vadd.f32 %v1500, %v864
        %v1503 = vadd.f32 %v1501, %v864
        %v1504 = vmax.f32 %v1502, 0.0
        %v1505 = vmax.f32 %v1503, 0.0
        %v1506 = vmax.f32 %v1445, %v1504
        %v1507 = vmax.f32 %v1446, %v1505
        %v1508 = vpack.c.bf16 %v1507, %v1506
        %v1510 = vsel %vm984, %v1508, 0
        %1512 = vmatpush.bf16.msra.mxu0 0
        %1513 = vmatpush.bf16.msra.mxu0 %v990
        %1514 = vmatpush.bf16.msra.mxu0 %v976
        %1515 = vmatpush.bf16.msra.mxu0 %v975
        %1516 = vmatpush.bf16.msra.mxu0 %v974
        %1517 = vmatpush.bf16.msra.mxu0 %v973
        %1518 = vmatpush.bf16.msra.mxu0 %v972
        %1519 = vmatpush.bf16.msra.mxu0 %v971
        %1520 = vmatmul.bf16.gmra.mxu0 %v1510
        %v1521 = vpop.f32.mrf.mxu0
        %v1522 = vadd.f32 0.0, %v1521
        %v1523 = vpop.f32.mrf.mxu0
        %v1524 = vadd.f32 0.0, %v1523
        %1525 = vdwg.mxu0
        %1526 = vmatpush.bf16.msra.mxu0 0
        %1527 = vmatpush.bf16.msra.mxu0 %v1059
        %1528 = vmatpush.bf16.msra.mxu0 %v1050
        %1529 = vmatpush.bf16.msra.mxu0 %v1049
        %1530 = vmatpush.bf16.msra.mxu0 %v1048
        %1531 = vmatpush.bf16.msra.mxu0 %v1047
        %1532 = vmatpush.bf16.msra.mxu0 %v1046
        %1533 = vmatpush.bf16.msra.mxu0 %v1045
        %1534 = vmatmul.bf16.gmra.mxu0 %v1510
        %v1535 = vpop.f32.mrf.mxu0
        %v1536 = vadd.f32 0.0, %v1535
        %v1537 = vpop.f32.mrf.mxu0
        %v1538 = vadd.f32 0.0, %v1537
        %1539 = vdwg.mxu0
        %v1540 = vmax.f32 %v1522, %v1536
        %v1541 = vmax.f32 %v1524, %v1538
        %v1542 = vpack.c.bf16 %v1541, %v1540
        %1543 = vmatpush.bf16.msra.mxu0 0
        %1544 = vmatpush.bf16.msra.mxu0 0
        %1545 = vmatpush.bf16.msra.mxu0 0
        %1546 = vmatpush.bf16.msra.mxu0 0
        %1547 = vmatpush.bf16.msra.mxu0 %v736
        %1548 = vmatpush.bf16.msra.mxu0 %v725
        %1549 = vmatpush.bf16.msra.mxu0 %v724
        %1550 = vmatpush.bf16.msra.mxu0 %v723
        %1551 = vmatmul.bf16.gmra.mxu0 %v1484
        %v1552 = vpop.f32.mrf.mxu0
        %v1553 = vadd.f32 0.0, %v1552
        %v1554 = vpop.f32.mrf.mxu0
        %v1555 = vadd.f32 0.0, %v1554
        %1556 = vdwg.mxu0
        %1557 = vmatpush.bf16.msra.mxu0 0
        %1558 = vmatpush.bf16.msra.mxu0 0
        %1559 = vmatpush.bf16.msra.mxu0 0
        %1560 = vmatpush.bf16.msra.mxu0 0
        %1561 = vmatpush.bf16.msra.mxu0 %v784
        %1562 = vmatpush.bf16.msra.mxu0 %v775
        %1563 = vmatpush.bf16.msra.mxu0 %v774
        %1564 = vmatpush.bf16.msra.mxu0 %v773
        %1565 = vmatmul.bf16.gmra.mxu0 %v1425
        %v1566 = vpop.f32.mrf.mxu0
        %v1567 = vadd.f32 %v1553, %v1566
        %v1568 = vpop.f32.mrf.mxu0
        %v1569 = vadd.f32 %v1555, %v1568
        %1570 = vdwg.mxu0
        %s1571 = scalar_lea.vmem %s616, 80 [#allocation2]
        %v1572 = vld [vmem:[%s1571] sm:$0xf]
        %v1573 = vld [vmem:[%s1571 + $0x4] sm:$0xf]
        %v1576 = vunpack.c.l.b16 %v1572
        %v1577 = vunpack.c.l.b16 %v1573
        %v1578 = vpack.c.b16 %v1577, %v1576
        %v1580 = vsel %vm730, %v1578, 0
        %1582 = vmatpush.bf16.msra.mxu0 0
        %1583 = vmatpush.bf16.msra.mxu0 0
        %1584 = vmatpush.bf16.msra.mxu0 0
        %1585 = vmatpush.bf16.msra.mxu0 0
        %1586 = vmatpush.bf16.msra.mxu0 %v844
        %1587 = vmatpush.bf16.msra.mxu0 %v835
        %1588 = vmatpush.bf16.msra.mxu0 %v834
        %1589 = vmatpush.bf16.msra.mxu0 %v833
        %1590 = vmatmul.bf16.gmra.mxu0 %v1580
        %v1591 = vpop.f32.mrf.mxu0
        %v1592 = vadd.f32 0.0, %v1591
        %v1593 = vpop.f32.mrf.mxu0
        %v1594 = vadd.f32 0.0, %v1593
        %1595 = vdwg.mxu0
        %v1596 = vadd.f32 %v1567, %v1592
        %v1597 = vadd.f32 %v1569, %v1594
        %v1598 = vadd.f32 %v1596, %v864
        %v1599 = vadd.f32 %v1597, %v864
        %v1600 = vmax.f32 %v1598, 0.0
        %v1601 = vmax.f32 %v1599, 0.0
        %1602 = vmatpush.bf16.msra.mxu0 0
        %1603 = vmatpush.bf16.msra.mxu0 0
        %1604 = vmatpush.bf16.msra.mxu0 0
        %1605 = vmatpush.bf16.msra.mxu0 0
        %1606 = vmatpush.bf16.msra.mxu0 %v736
        %1607 = vmatpush.bf16.msra.mxu0 %v725
        %1608 = vmatpush.bf16.msra.mxu0 %v724
        %1609 = vmatpush.bf16.msra.mxu0 %v723
        %1610 = vmatmul.bf16.gmra.mxu0 %v1580
        %v1611 = vpop.f32.mrf.mxu0
        %v1612 = vadd.f32 0.0, %v1611
        %v1613 = vpop.f32.mrf.mxu0
        %v1614 = vadd.f32 0.0, %v1613
        %1615 = vdwg.mxu0
        %1616 = vmatpush.bf16.msra.mxu0 0
        %1617 = vmatpush.bf16.msra.mxu0 0
        %1618 = vmatpush.bf16.msra.mxu0 0
        %1619 = vmatpush.bf16.msra.mxu0 0
        %1620 = vmatpush.bf16.msra.mxu0 %v784
        %1621 = vmatpush.bf16.msra.mxu0 %v775
        %1622 = vmatpush.bf16.msra.mxu0 %v774
        %1623 = vmatpush.bf16.msra.mxu0 %v773
        %1624 = vmatmul.bf16.gmra.mxu0 %v1484
        %v1625 = vpop.f32.mrf.mxu0
        %v1626 = vadd.f32 %v1612, %v1625
        %v1627 = vpop.f32.mrf.mxu0
        %v1628 = vadd.f32 %v1614, %v1627
        %1629 = vdwg.mxu0
        %s1630 = scalar_lea.vmem %s616, 88 [#allocation2]
        %v1631 = vld [vmem:[%s1630] sm:$0xf]
        %v1632 = vld [vmem:[%s1630 + $0x4] sm:$0xf]
        %v1635 = vunpack.c.l.b16 %v1631
        %v1636 = vunpack.c.l.b16 %v1632
        %v1637 = vpack.c.b16 %v1636, %v1635
        %v1639 = vsel %vm730, %v1637, 0
        %1641 = vmatpush.bf16.msra.mxu0 0
        %1642 = vmatpush.bf16.msra.mxu0 0
        %1643 = vmatpush.bf16.msra.mxu0 0
        %1644 = vmatpush.bf16.msra.mxu0 0
        %1645 = vmatpush.bf16.msra.mxu0 %v844
        %1646 = vmatpush.bf16.msra.mxu0 %v835
        %1647 = vmatpush.bf16.msra.mxu0 %v834
        %1648 = vmatpush.bf16.msra.mxu0 %v833
        %1649 = vmatmul.bf16.gmra.mxu0 %v1639
        %v1650 = vpop.f32.mrf.mxu0
        %v1651 = vadd.f32 0.0, %v1650
        %v1652 = vpop.f32.mrf.mxu0
        %v1653 = vadd.f32 0.0, %v1652
        %1654 = vdwg.mxu0
        %v1655 = vadd.f32 %v1626, %v1651
        %v1656 = vadd.f32 %v1628, %v1653
        %v1657 = vadd.f32 %v1655, %v864
        %v1658 = vadd.f32 %v1656, %v864
        %v1659 = vmax.f32 %v1657, 0.0
        %v1660 = vmax.f32 %v1658, 0.0
        %v1661 = vmax.f32 %v1600, %v1659
        %v1662 = vmax.f32 %v1601, %v1660
        %v1663 = vpack.c.bf16 %v1662, %v1661
        %v1665 = vsel %vm984, %v1663, 0
        %1667 = vmatpush.bf16.msra.mxu0 0
        %1668 = vmatpush.bf16.msra.mxu0 %v990
        %1669 = vmatpush.bf16.msra.mxu0 %v976
        %1670 = vmatpush.bf16.msra.mxu0 %v975
        %1671 = vmatpush.bf16.msra.mxu0 %v974
        %1672 = vmatpush.bf16.msra.mxu0 %v973
        %1673 = vmatpush.bf16.msra.mxu0 %v972
        %1674 = vmatpush.bf16.msra.mxu0 %v971
        %1675 = vmatmul.bf16.gmra.mxu0 %v1665
        %v1676 = vpop.f32.mrf.mxu0
        %v1677 = vadd.f32 0.0, %v1676
        %v1678 = vpop.f32.mrf.mxu0
        %v1679 = vadd.f32 0.0, %v1678
        %1680 = vdwg.mxu0
        %1681 = vmatpush.bf16.msra.mxu0 0
        %1682 = vmatpush.bf16.msra.mxu0 %v1059
        %1683 = vmatpush.bf16.msra.mxu0 %v1050
        %1684 = vmatpush.bf16.msra.mxu0 %v1049
        %1685 = vmatpush.bf16.msra.mxu0 %v1048
        %1686 = vmatpush.bf16.msra.mxu0 %v1047
        %1687 = vmatpush.bf16.msra.mxu0 %v1046
        %1688 = vmatpush.bf16.msra.mxu0 %v1045
        %1689 = vmatmul.bf16.gmra.mxu0 %v1665
        %v1690 = vpop.f32.mrf.mxu0
        %v1691 = vadd.f32 0.0, %v1690
        %v1692 = vpop.f32.mrf.mxu0
        %v1693 = vadd.f32 0.0, %v1692
        %1694 = vdwg.mxu0
        %v1695 = vmax.f32 %v1677, %v1691
        %v1696 = vmax.f32 %v1679, %v1693
        %v1697 = vpack.c.bf16 %v1696, %v1695
        %1698 = vmatpush.bf16.msra.mxu0 0
        %1699 = vmatpush.bf16.msra.mxu0 0
        %1700 = vmatpush.bf16.msra.mxu0 0
        %1701 = vmatpush.bf16.msra.mxu0 0
        %1702 = vmatpush.bf16.msra.mxu0 %v736
        %1703 = vmatpush.bf16.msra.mxu0 %v725
        %1704 = vmatpush.bf16.msra.mxu0 %v724
        %1705 = vmatpush.bf16.msra.mxu0 %v723
        %1706 = vmatmul.bf16.gmra.mxu0 %v1639
        %v1707 = vpop.f32.mrf.mxu0
        %v1708 = vadd.f32 0.0, %v1707
        %v1709 = vpop.f32.mrf.mxu0
        %v1710 = vadd.f32 0.0, %v1709
        %1711 = vdwg.mxu0
        %1712 = vmatpush.bf16.msra.mxu0 0
        %1713 = vmatpush.bf16.msra.mxu0 0
        %1714 = vmatpush.bf16.msra.mxu0 0
        %1715 = vmatpush.bf16.msra.mxu0 0
        %1716 = vmatpush.bf16.msra.mxu0 %v784
        %1717 = vmatpush.bf16.msra.mxu0 %v775
        %1718 = vmatpush.bf16.msra.mxu0 %v774
        %1719 = vmatpush.bf16.msra.mxu0 %v773
        %1720 = vmatmul.bf16.gmra.mxu0 %v1580
        %v1721 = vpop.f32.mrf.mxu0
        %v1722 = vadd.f32 %v1708, %v1721
        %v1723 = vpop.f32.mrf.mxu0
        %v1724 = vadd.f32 %v1710, %v1723
        %1725 = vdwg.mxu0
        %s1726 = scalar_lea.vmem %s616, 96 [#allocation2]
        %v1727 = vld [vmem:[%s1726] sm:$0xf]
        %v1728 = vld [vmem:[%s1726 + $0x4] sm:$0xf]
        %v1731 = vunpack.c.l.b16 %v1727
        %v1732 = vunpack.c.l.b16 %v1728
        %v1733 = vpack.c.b16 %v1732, %v1731
        %v1735 = vsel %vm730, %v1733, 0
        %1737 = vmatpush.bf16.msra.mxu0 0
        %1738 = vmatpush.bf16.msra.mxu0 0
        %1739 = vmatpush.bf16.msra.mxu0 0
        %1740 = vmatpush.bf16.msra.mxu0 0
        %1741 = vmatpush.bf16.msra.mxu0 %v844
        %1742 = vmatpush.bf16.msra.mxu0 %v835
        %1743 = vmatpush.bf16.msra.mxu0 %v834
        %1744 = vmatpush.bf16.msra.mxu0 %v833
        %1745 = vmatmul.bf16.gmra.mxu0 %v1735
        %v1746 = vpop.f32.mrf.mxu0
        %v1747 = vadd.f32 0.0, %v1746
        %v1748 = vpop.f32.mrf.mxu0
        %v1749 = vadd.f32 0.0, %v1748
        %1750 = vdwg.mxu0
        %v1751 = vadd.f32 %v1722, %v1747
        %v1752 = vadd.f32 %v1724, %v1749
        %v1753 = vadd.f32 %v1751, %v864
        %v1754 = vadd.f32 %v1752, %v864
        %v1755 = vmax.f32 %v1753, 0.0
        %v1756 = vmax.f32 %v1754, 0.0
        %1757 = vmatpush.bf16.msra.mxu0 0
        %1758 = vmatpush.bf16.msra.mxu0 0
        %1759 = vmatpush.bf16.msra.mxu0 0
        %1760 = vmatpush.bf16.msra.mxu0 0
        %1761 = vmatpush.bf16.msra.mxu0 %v736
        %1762 = vmatpush.bf16.msra.mxu0 %v725
        %1763 = vmatpush.bf16.msra.mxu0 %v724
        %1764 = vmatpush.bf16.msra.mxu0 %v723
        %1765 = vmatmul.bf16.gmra.mxu0 %v1735
        %v1766 = vpop.f32.mrf.mxu0
        %v1767 = vadd.f32 0.0, %v1766
        %v1768 = vpop.f32.mrf.mxu0
        %v1769 = vadd.f32 0.0, %v1768
        %1770 = vdwg.mxu0
        %1771 = vmatpush.bf16.msra.mxu0 0
        %1772 = vmatpush.bf16.msra.mxu0 0
        %1773 = vmatpush.bf16.msra.mxu0 0
        %1774 = vmatpush.bf16.msra.mxu0 0
        %1775 = vmatpush.bf16.msra.mxu0 %v784
        %1776 = vmatpush.bf16.msra.mxu0 %v775
        %1777 = vmatpush.bf16.msra.mxu0 %v774
        %1778 = vmatpush.bf16.msra.mxu0 %v773
        %1779 = vmatmul.bf16.gmra.mxu0 %v1639
        %v1780 = vpop.f32.mrf.mxu0
        %v1781 = vadd.f32 %v1767, %v1780
        %v1782 = vpop.f32.mrf.mxu0
        %v1783 = vadd.f32 %v1769, %v1782
        %1784 = vdwg.mxu0
        %s1785 = scalar_lea.vmem %s616, 104 [#allocation2]
        %v1786 = vld [vmem:[%s1785] sm:$0xf]
        %v1787 = vld [vmem:[%s1785 + $0x4] sm:$0xf]
        %v1790 = vunpack.c.l.b16 %v1786
        %v1791 = vunpack.c.l.b16 %v1787
        %v1792 = vpack.c.b16 %v1791, %v1790
        %v1794 = vsel %vm730, %v1792, 0
        %1796 = vmatpush.bf16.msra.mxu0 0
        %1797 = vmatpush.bf16.msra.mxu0 0
        %1798 = vmatpush.bf16.msra.mxu0 0
        %1799 = vmatpush.bf16.msra.mxu0 0
        %1800 = vmatpush.bf16.msra.mxu0 %v844
        %1801 = vmatpush.bf16.msra.mxu0 %v835
        %1802 = vmatpush.bf16.msra.mxu0 %v834
        %1803 = vmatpush.bf16.msra.mxu0 %v833
        %1804 = vmatmul.bf16.gmra.mxu0 %v1794
        %v1805 = vpop.f32.mrf.mxu0
        %v1806 = vadd.f32 0.0, %v1805
        %v1807 = vpop.f32.mrf.mxu0
        %v1808 = vadd.f32 0.0, %v1807
        %1809 = vdwg.mxu0
        %v1810 = vadd.f32 %v1781, %v1806
        %v1811 = vadd.f32 %v1783, %v1808
        %v1812 = vadd.f32 %v1810, %v864
        %v1813 = vadd.f32 %v1811, %v864
        %v1814 = vmax.f32 %v1812, 0.0
        %v1815 = vmax.f32 %v1813, 0.0
        %v1816 = vmax.f32 %v1755, %v1814
        %v1817 = vmax.f32 %v1756, %v1815
        %v1818 = vpack.c.bf16 %v1817, %v1816
        %v1820 = vsel %vm984, %v1818, 0
        %1822 = vmatpush.bf16.msra.mxu0 0
        %1823 = vmatpush.bf16.msra.mxu0 %v990
        %1824 = vmatpush.bf16.msra.mxu0 %v976
        %1825 = vmatpush.bf16.msra.mxu0 %v975
        %1826 = vmatpush.bf16.msra.mxu0 %v974
        %1827 = vmatpush.bf16.msra.mxu0 %v973
        %1828 = vmatpush.bf16.msra.mxu0 %v972
        %1829 = vmatpush.bf16.msra.mxu0 %v971
        %1830 = vmatmul.bf16.gmra.mxu0 %v1820
        %v1831 = vpop.f32.mrf.mxu0
        %v1832 = vadd.f32 0.0, %v1831
        %v1833 = vpop.f32.mrf.mxu0
        %v1834 = vadd.f32 0.0, %v1833
        %1835 = vdwg.mxu0
        %1836 = vmatpush.bf16.msra.mxu0 0
        %1837 = vmatpush.bf16.msra.mxu0 %v1059
        %1838 = vmatpush.bf16.msra.mxu0 %v1050
        %1839 = vmatpush.bf16.msra.mxu0 %v1049
        %1840 = vmatpush.bf16.msra.mxu0 %v1048
        %1841 = vmatpush.bf16.msra.mxu0 %v1047
        %1842 = vmatpush.bf16.msra.mxu0 %v1046
        %1843 = vmatpush.bf16.msra.mxu0 %v1045
        %1844 = vmatmul.bf16.gmra.mxu0 %v1820
        %v1845 = vpop.f32.mrf.mxu0
        %v1846 = vadd.f32 0.0, %v1845
        %v1847 = vpop.f32.mrf.mxu0
        %v1848 = vadd.f32 0.0, %v1847
        %1849 = vdwg.mxu0
        %v1850 = vmax.f32 %v1832, %v1846
        %v1851 = vmax.f32 %v1834, %v1848
        %v1852 = vpack.c.bf16 %v1851, %v1850
        %v1853 = vld [vmem:[%s671] sm:$0xf]
        %v1854 = vld [vmem:[%s671 + $0x4] sm:$0xf]
        %v1855 = vld [vmem:[%s9] sm:$0x3]
        %v1856 = vld [vmem:[%s6] sm:$0xf]
        %v1857 = vld [vmem:[%s6 + $0x4] sm:$0xf]
        %v1858 = vld [vmem:[%s6 + $0x8] sm:$0xf]
        %v1859 = vld [vmem:[%s6 + $0xc] sm:$0xf]
        %v1860 = vld [vmem:[%s6 + $0x10] sm:$0xf]
        %v1861 = vld [vmem:[%s6 + $0x14] sm:$0xf]
        %s1862 = scalar_lea.vmem %s6, 24
        %v1863 = vld [vmem:[%s1862] sm:$0xf]
        %v1864 = vld [vmem:[%s1862 + $0x4] sm:$0xf]
        %v1865 = vld [vmem:[%s1862 + $0x8] sm:$0xf]
        %v1866 = vld [vmem:[%s1862 + $0xc] sm:$0xf]
        %v1867 = vld [vmem:[%s1862 + $0x10] sm:$0xf]
        %v1868 = vld [vmem:[%s1862 + $0x14] sm:$0xf]
        %v1875 = vunpack.c.l.b16 %v1863
        %v1876 = vunpack.c.l.b16 %v1864
        %v1877 = vunpack.c.l.b16 %v1865
        %v1878 = vunpack.c.l.b16 %v1866
        %v1879 = vunpack.c.l.b16 %v1867
        %v1880 = vunpack.c.l.b16 %v1868
        %v1881 = vpack.c.b16 %v1876, %v1875
        %v1882 = vpack.c.b16 %v1878, %v1877
        %v1883 = vpack.c.b16 %v1880, %v1879
        %vm1887 = vcmask 392192
        %v1889 = vsel %vm1887, %v1232, 0
        %1891 = vmatpush.bf16.msra.mxu0 0
        %1892 = vmatpush.bf16.msra.mxu0 0
        %1893 = vmatpush.bf16.msra.mxu0 0
        %1894 = vmatpush.bf16.msra.mxu0 0
        %1895 = vmatpush.bf16.msra.mxu0 0
        %1896 = vmatpush.bf16.msra.mxu0 %v1883
        %1897 = vmatpush.bf16.msra.mxu0 %v1882
        %1898 = vmatpush.bf16.msra.mxu0 %v1881
        %1899 = vmatmul.bf16.gmra.mxu0 %v1889
        %v1900 = vpop.f32.mrf.mxu0
        %v1901 = vadd.f32 0.0, %v1900
        %v1902 = vpop.f32.mrf.mxu0
        %v1903 = vadd.f32 0.0, %v1902
        %1904 = vdwg.mxu0
        %v1911 = vunpack.c.l.b16 %v1856
        %v1912 = vunpack.c.l.b16 %v1857
        %v1913 = vunpack.c.l.b16 %v1858
        %v1914 = vunpack.c.l.b16 %v1859
        %v1915 = vunpack.c.l.b16 %v1860
        %v1916 = vunpack.c.l.b16 %v1861
        %v1917 = vpack.c.b16 %v1912, %v1911
        %v1918 = vpack.c.b16 %v1914, %v1913
        %v1919 = vpack.c.b16 %v1916, %v1915
        %v1924 = vsel %vm1887, %v1077, 0
        %1926 = vmatpush.bf16.msra.mxu0 0
        %1927 = vmatpush.bf16.msra.mxu0 0
        %1928 = vmatpush.bf16.msra.mxu0 0
        %1929 = vmatpush.bf16.msra.mxu0 0
        %1930 = vmatpush.bf16.msra.mxu0 0
        %1931 = vmatpush.bf16.msra.mxu0 %v1919
        %1932 = vmatpush.bf16.msra.mxu0 %v1918
        %1933 = vmatpush.bf16.msra.mxu0 %v1917
        %1934 = vmatmul.bf16.gmra.mxu0 %v1924
        %v1935 = vpop.f32.mrf.mxu0
        %v1936 = vadd.f32 %v1901, %v1935
        %v1937 = vpop.f32.mrf.mxu0
        %v1938 = vadd.f32 %v1903, %v1937
        %1939 = vdwg.mxu0
        %s1940 = scalar_lea.vmem %s6, 48
        %v1941 = vld [vmem:[%s1940] sm:$0xf]
        %v1942 = vld [vmem:[%s1940 + $0x4] sm:$0xf]
        %v1943 = vld [vmem:[%s1940 + $0x8] sm:$0xf]
        %v1944 = vld [vmem:[%s1940 + $0xc] sm:$0xf]
        %v1945 = vld [vmem:[%s1940 + $0x10] sm:$0xf]
        %v1946 = vld [vmem:[%s1940 + $0x14] sm:$0xf]
        %v1953 = vunpack.c.l.b16 %v1941
        %v1954 = vunpack.c.l.b16 %v1942
        %v1955 = vunpack.c.l.b16 %v1943
        %v1956 = vunpack.c.l.b16 %v1944
        %v1957 = vunpack.c.l.b16 %v1945
        %v1958 = vunpack.c.l.b16 %v1946
        %v1959 = vpack.c.b16 %v1954, %v1953
        %v1960 = vpack.c.b16 %v1956, %v1955
        %v1961 = vpack.c.b16 %v1958, %v1957
        %v1966 = vsel %vm1887, %v1387, 0
        %1968 = vmatpush.bf16.msra.mxu0 0
        %1969 = vmatpush.bf16.msra.mxu0 0
        %1970 = vmatpush.bf16.msra.mxu0 0
        %1971 = vmatpush.bf16.msra.mxu0 0
        %1972 = vmatpush.bf16.msra.mxu0 0
        %1973 = vmatpush.bf16.msra.mxu0 %v1961
        %1974 = vmatpush.bf16.msra.mxu0 %v1960
        %1975 = vmatpush.bf16.msra.mxu0 %v1959
        %1976 = vmatmul.bf16.gmra.mxu0 %v1966
        %v1977 = vpop.f32.mrf.mxu0
        %v1978 = vadd.f32 0.0, %v1977
        %v1979 = vpop.f32.mrf.mxu0
        %v1980 = vadd.f32 0.0, %v1979
        %1981 = vdwg.mxu0
        %v1982 = vadd.f32 %v1936, %v1978
        %v1983 = vadd.f32 %v1938, %v1980
        %v1984 = vld [vmem:[%s7] sm:$0x1]
        %v1986 = vperm.slane %v1984, 0
        %v1988 = vadd.f32 %v1982, %v1986
        %v1989 = vadd.f32 %v1983, %v1986
        %v1990 = vmax.f32 %v1988, 0.0
        %v1991 = vmax.f32 %v1989, 0.0
        %v1992 = vpack.c.bf16 %v1991, %v1990
        %v1993 = vld [vmem:[%s8] sm:$0xf]
        %v1994 = vld [vmem:[%s8 + $0x4] sm:$0xf]
        %v1995 = vld [vmem:[%s8 + $0x8] sm:$0xf]
        %v1996 = vld [vmem:[%s8 + $0xc] sm:$0xf]
        %v2001 = vunpack.c.l.b16 %v1993
        %v2002 = vunpack.c.l.b16 %v1994
        %v2003 = vunpack.c.l.b16 %v1995
        %v2004 = vunpack.c.l.b16 %v1996
        %v2005 = vpack.c.b16 %v2002, %v2001
        %v2006 = vpack.c.b16 %v2004, %v2003
        %vm2009 = vcmask 261120
        %v2011 = vsel %vm2009, %v1992, 0
        %2013 = vmatpush.bf16.msra.mxu0 0
        %2014 = vmatpush.bf16.msra.mxu0 0
        %2015 = vmatpush.bf16.msra.mxu0 0
        %2016 = vmatpush.bf16.msra.mxu0 0
        %2017 = vmatpush.bf16.msra.mxu0 0
        %2018 = vmatpush.bf16.msra.mxu0 0
        %2019 = vmatpush.bf16.msra.mxu0 %v2006
        %2020 = vmatpush.bf16.msra.mxu0 %v2005
        %2021 = vmatmul.bf16.gmra.mxu0 %v2011
        %v2022 = vpop.f32.mrf.mxu0
        %v2023 = vadd.f32 0.0, %v2022
        %v2024 = vpop.f32.mrf.mxu0
        %v2025 = vadd.f32 0.0, %v2024
        %2026 = vdwg.mxu0
        %v2029 = vunpack.c.l.b16 %v1853
        %v2030 = vunpack.c.l.b16 %v1854
        %v2031 = vpack.c.b16 %v2030, %v2029
        %vm2032 = vcmask 31744
        %v2034 = vsel %vm2032, %v2031, 0
        %vm2036 = vcmask 1041408
        %v2038 = vsel %vm2036, %v1855, 0
        %2040 = vmatpush.bf16.msra.mxu0 0
        %2041 = vmatpush.bf16.msra.mxu0 0
        %2042 = vmatpush.bf16.msra.mxu0 0
        %2043 = vmatpush.bf16.msra.mxu0 0
        %2044 = vmatpush.bf16.msra.mxu0 0
        %2045 = vmatpush.bf16.msra.mxu0 0
        %2046 = vmatpush.bf16.msra.mxu0 0
        %2047 = vmatpush.bf16.msra.mxu0 %v2038
        %2048 = vmatmul.bf16.gmra.mxu0 %v2034
        %v2049 = vpop.f32.mrf.mxu0
        %v2050 = vadd.f32 %v2023, %v2049
        %v2051 = vpop.f32.mrf.mxu0
        %v2052 = vadd.f32 %v2025, %v2051
        %2053 = vdwg.mxu0
        %2054 = vmatpush.bf16.msra.mxu0 0
        %2055 = vmatpush.bf16.msra.mxu0 0
        %2056 = vmatpush.bf16.msra.mxu0 0
        %2057 = vmatpush.bf16.msra.mxu0 0
        %2058 = vmatpush.bf16.msra.mxu0 0
        %2059 = vmatpush.bf16.msra.mxu0 %v1883
        %2060 = vmatpush.bf16.msra.mxu0 %v1882
        %2061 = vmatpush.bf16.msra.mxu0 %v1881
        %2062 = vmatmul.bf16.gmra.mxu0 %v1966
        %v2063 = vpop.f32.mrf.mxu0
        %v2064 = vadd.f32 0.0, %v2063
        %v2065 = vpop.f32.mrf.mxu0
        %v2066 = vadd.f32 0.0, %v2065
        %2067 = vdwg.mxu0
        %2068 = vmatpush.bf16.msra.mxu0 0
        %2069 = vmatpush.bf16.msra.mxu0 0
        %2070 = vmatpush.bf16.msra.mxu0 0
        %2071 = vmatpush.bf16.msra.mxu0 0
        %2072 = vmatpush.bf16.msra.mxu0 0
        %2073 = vmatpush.bf16.msra.mxu0 %v1919
        %2074 = vmatpush.bf16.msra.mxu0 %v1918
        %2075 = vmatpush.bf16.msra.mxu0 %v1917
        %2076 = vmatmul.bf16.gmra.mxu0 %v1889
        %v2077 = vpop.f32.mrf.mxu0
        %v2078 = vadd.f32 %v2064, %v2077
        %v2079 = vpop.f32.mrf.mxu0
        %v2080 = vadd.f32 %v2066, %v2079
        %2081 = vdwg.mxu0
        %v2083 = vsel %vm1887, %v1542, 0
        %2085 = vmatpush.bf16.msra.mxu0 0
        %2086 = vmatpush.bf16.msra.mxu0 0
        %2087 = vmatpush.bf16.msra.mxu0 0
        %2088 = vmatpush.bf16.msra.mxu0 0
        %2089 = vmatpush.bf16.msra.mxu0 0
        %2090 = vmatpush.bf16.msra.mxu0 %v1961
        %2091 = vmatpush.bf16.msra.mxu0 %v1960
        %2092 = vmatpush.bf16.msra.mxu0 %v1959
        %2093 = vmatmul.bf16.gmra.mxu0 %v2083
        %v2094 = vpop.f32.mrf.mxu0
        %v2095 = vadd.f32 0.0, %v2094
        %v2096 = vpop.f32.mrf.mxu0
        %v2097 = vadd.f32 0.0, %v2096
        %2098 = vdwg.mxu0
        %v2099 = vadd.f32 %v2078, %v2095
        %v2100 = vadd.f32 %v2080, %v2097
        %v2101 = vadd.f32 %v2099, %v1986
        %v2102 = vadd.f32 %v2100, %v1986
        %v2103 = vmax.f32 %v2101, 0.0
        %v2104 = vmax.f32 %v2102, 0.0
        %v2105 = vpack.c.bf16 %v2104, %v2103
        %s2106 = scalar_lea.vmem %s8, 16
        %v2107 = vld [vmem:[%s2106] sm:$0xf]
        %v2108 = vld [vmem:[%s2106 + $0x4] sm:$0xf]
        %v2109 = vld [vmem:[%s2106 + $0x8] sm:$0xf]
        %v2110 = vld [vmem:[%s2106 + $0xc] sm:$0xf]
        %v2115 = vunpack.c.l.b16 %v2107
        %v2116 = vunpack.c.l.b16 %v2108
        %v2117 = vunpack.c.l.b16 %v2109
        %v2118 = vunpack.c.l.b16 %v2110
        %v2119 = vpack.c.b16 %v2116, %v2115
        %v2120 = vpack.c.b16 %v2118, %v2117
        %v2124 = vsel %vm2009, %v2105, 0
        %2126 = vmatpush.bf16.msra.mxu0 0
        %2127 = vmatpush.bf16.msra.mxu0 0
        %2128 = vmatpush.bf16.msra.mxu0 0
        %2129 = vmatpush.bf16.msra.mxu0 0
        %2130 = vmatpush.bf16.msra.mxu0 0
        %2131 = vmatpush.bf16.msra.mxu0 0
        %2132 = vmatpush.bf16.msra.mxu0 %v2120
        %2133 = vmatpush.bf16.msra.mxu0 %v2119
        %2134 = vmatmul.bf16.gmra.mxu0 %v2124
        %v2135 = vpop.f32.mrf.mxu0
        %v2136 = vadd.f32 0.0, %v2135
        %v2137 = vpop.f32.mrf.mxu0
        %v2138 = vadd.f32 0.0, %v2137
        %2139 = vdwg.mxu0
        %v2140 = vadd.f32 %v2050, %v2136
        %v2141 = vadd.f32 %v2052, %v2138
        %2142 = vmatpush.bf16.msra.mxu0 0
        %2143 = vmatpush.bf16.msra.mxu0 0
        %2144 = vmatpush.bf16.msra.mxu0 0
        %2145 = vmatpush.bf16.msra.mxu0 0
        %2146 = vmatpush.bf16.msra.mxu0 0
        %2147 = vmatpush.bf16.msra.mxu0 %v1883
        %2148 = vmatpush.bf16.msra.mxu0 %v1882
        %2149 = vmatpush.bf16.msra.mxu0 %v1881
        %2150 = vmatmul.bf16.gmra.mxu0 %v2083
        %v2151 = vpop.f32.mrf.mxu0
        %v2152 = vadd.f32 0.0, %v2151
        %v2153 = vpop.f32.mrf.mxu0
        %v2154 = vadd.f32 0.0, %v2153
        %2155 = vdwg.mxu0
        %2156 = vmatpush.bf16.msra.mxu0 0
        %2157 = vmatpush.bf16.msra.mxu0 0
        %2158 = vmatpush.bf16.msra.mxu0 0
        %2159 = vmatpush.bf16.msra.mxu0 0
        %2160 = vmatpush.bf16.msra.mxu0 0
        %2161 = vmatpush.bf16.msra.mxu0 %v1919
        %2162 = vmatpush.bf16.msra.mxu0 %v1918
        %2163 = vmatpush.bf16.msra.mxu0 %v1917
        %2164 = vmatmul.bf16.gmra.mxu0 %v1966
        %v2165 = vpop.f32.mrf.mxu0
        %v2166 = vadd.f32 %v2152, %v2165
        %v2167 = vpop.f32.mrf.mxu0
        %v2168 = vadd.f32 %v2154, %v2167
        %2169 = vdwg.mxu0
        %v2171 = vsel %vm1887, %v1697, 0
        %2173 = vmatpush.bf16.msra.mxu0 0
        %2174 = vmatpush.bf16.msra.mxu0 0
        %2175 = vmatpush.bf16.msra.mxu0 0
        %2176 = vmatpush.bf16.msra.mxu0 0
        %2177 = vmatpush.bf16.msra.mxu0 0
        %2178 = vmatpush.bf16.msra.mxu0 %v1961
        %2179 = vmatpush.bf16.msra.mxu0 %v1960
        %2180 = vmatpush.bf16.msra.mxu0 %v1959
        %2181 = vmatmul.bf16.gmra.mxu0 %v2171
        %v2182 = vpop.f32.mrf.mxu0
        %v2183 = vadd.f32 0.0, %v2182
        %v2184 = vpop.f32.mrf.mxu0
        %v2185 = vadd.f32 0.0, %v2184
        %2186 = vdwg.mxu0
        %v2187 = vadd.f32 %v2166, %v2183
        %v2188 = vadd.f32 %v2168, %v2185
        %v2189 = vadd.f32 %v2187, %v1986
        %v2190 = vadd.f32 %v2188, %v1986
        %v2191 = vmax.f32 %v2189, 0.0
        %v2192 = vmax.f32 %v2190, 0.0
        %v2193 = vpack.c.bf16 %v2192, %v2191
        %s2194 = scalar_lea.vmem %s8, 32
        %v2195 = vld [vmem:[%s2194] sm:$0xf]
        %v2196 = vld [vmem:[%s2194 + $0x4] sm:$0xf]
        %v2197 = vld [vmem:[%s2194 + $0x8] sm:$0xf]
        %v2198 = vld [vmem:[%s2194 + $0xc] sm:$0xf]
        %v2203 = vunpack.c.l.b16 %v2195
        %v2204 = vunpack.c.l.b16 %v2196
        %v2205 = vunpack.c.l.b16 %v2197
        %v2206 = vunpack.c.l.b16 %v2198
        %v2207 = vpack.c.b16 %v2204, %v2203
        %v2208 = vpack.c.b16 %v2206, %v2205
        %v2212 = vsel %vm2009, %v2193, 0
        %2214 = vmatpush.bf16.msra.mxu0 0
        %2215 = vmatpush.bf16.msra.mxu0 0
        %2216 = vmatpush.bf16.msra.mxu0 0
        %2217 = vmatpush.bf16.msra.mxu0 0
        %2218 = vmatpush.bf16.msra.mxu0 0
        %2219 = vmatpush.bf16.msra.mxu0 0
        %2220 = vmatpush.bf16.msra.mxu0 %v2208
        %2221 = vmatpush.bf16.msra.mxu0 %v2207
        %2222 = vmatmul.bf16.gmra.mxu0 %v2212
        %v2223 = vpop.f32.mrf.mxu0
        %v2224 = vadd.f32 0.0, %v2223
        %v2225 = vpop.f32.mrf.mxu0
        %v2226 = vadd.f32 0.0, %v2225
        %2227 = vdwg.mxu0
        %v2228 = vadd.f32 %v2140, %v2224
        %v2229 = vadd.f32 %v2141, %v2226
        %2230 = vmatpush.bf16.msra.mxu0 0
        %2231 = vmatpush.bf16.msra.mxu0 0
        %2232 = vmatpush.bf16.msra.mxu0 0
        %2233 = vmatpush.bf16.msra.mxu0 0
        %2234 = vmatpush.bf16.msra.mxu0 0
        %2235 = vmatpush.bf16.msra.mxu0 %v1883
        %2236 = vmatpush.bf16.msra.mxu0 %v1882
        %2237 = vmatpush.bf16.msra.mxu0 %v1881
        %2238 = vmatmul.bf16.gmra.mxu0 %v2171
        %v2239 = vpop.f32.mrf.mxu0
        %v2240 = vadd.f32 0.0, %v2239
        %v2241 = vpop.f32.mrf.mxu0
        %v2242 = vadd.f32 0.0, %v2241
        %2243 = vdwg.mxu0
        %2244 = vmatpush.bf16.msra.mxu0 0
        %2245 = vmatpush.bf16.msra.mxu0 0
        %2246 = vmatpush.bf16.msra.mxu0 0
        %2247 = vmatpush.bf16.msra.mxu0 0
        %2248 = vmatpush.bf16.msra.mxu0 0
        %2249 = vmatpush.bf16.msra.mxu0 %v1919
        %2250 = vmatpush.bf16.msra.mxu0 %v1918
        %2251 = vmatpush.bf16.msra.mxu0 %v1917
        %2252 = vmatmul.bf16.gmra.mxu0 %v2083
        %v2253 = vpop.f32.mrf.mxu0
        %v2254 = vadd.f32 %v2240, %v2253
        %v2255 = vpop.f32.mrf.mxu0
        %v2256 = vadd.f32 %v2242, %v2255
        %2257 = vdwg.mxu0
        %v2259 = vsel %vm1887, %v1852, 0
        %2261 = vmatpush.bf16.msra.mxu0 0
        %2262 = vmatpush.bf16.msra.mxu0 0
        %2263 = vmatpush.bf16.msra.mxu0 0
        %2264 = vmatpush.bf16.msra.mxu0 0
        %2265 = vmatpush.bf16.msra.mxu0 0
        %2266 = vmatpush.bf16.msra.mxu0 %v1961
        %2267 = vmatpush.bf16.msra.mxu0 %v1960
        %2268 = vmatpush.bf16.msra.mxu0 %v1959
        %2269 = vmatmul.bf16.gmra.mxu0 %v2259
        %v2270 = vpop.f32.mrf.mxu0
        %v2271 = vadd.f32 0.0, %v2270
        %v2272 = vpop.f32.mrf.mxu0
        %v2273 = vadd.f32 0.0, %v2272
        %2274 = vdwg.mxu0
        %v2275 = vadd.f32 %v2254, %v2271
        %v2276 = vadd.f32 %v2256, %v2273
        %v2277 = vadd.f32 %v2275, %v1986
        %v2278 = vadd.f32 %v2276, %v1986
        %v2279 = vmax.f32 %v2277, 0.0
        %v2280 = vmax.f32 %v2278, 0.0
        %v2281 = vpack.c.bf16 %v2280, %v2279
        %s2282 = scalar_lea.vmem %s8, 48
        %v2283 = vld [vmem:[%s2282] sm:$0xf]
        %v2284 = vld [vmem:[%s2282 + $0x4] sm:$0xf]
        %v2285 = vld [vmem:[%s2282 + $0x8] sm:$0xf]
        %v2286 = vld [vmem:[%s2282 + $0xc] sm:$0xf]
        %v2291 = vunpack.c.l.b16 %v2283
        %v2292 = vunpack.c.l.b16 %v2284
        %v2293 = vunpack.c.l.b16 %v2285
        %v2294 = vunpack.c.l.b16 %v2286
        %v2295 = vpack.c.b16 %v2292, %v2291
        %v2296 = vpack.c.b16 %v2294, %v2293
        %v2300 = vsel %vm2009, %v2281, 0
        %2302 = vmatpush.bf16.msra.mxu0 0
        %2303 = vmatpush.bf16.msra.mxu0 0
        %2304 = vmatpush.bf16.msra.mxu0 0
        %2305 = vmatpush.bf16.msra.mxu0 0
        %2306 = vmatpush.bf16.msra.mxu0 0
        %2307 = vmatpush.bf16.msra.mxu0 0
        %2308 = vmatpush.bf16.msra.mxu0 %v2296
        %2309 = vmatpush.bf16.msra.mxu0 %v2295
        %2310 = vmatmul.bf16.gmra.mxu0 %v2300
        %v2311 = vpop.f32.mrf.mxu0
        %v2312 = vadd.f32 0.0, %v2311
        %v2313 = vpop.f32.mrf.mxu0
        %v2314 = vadd.f32 0.0, %v2313
        %2315 = vdwg.mxu0
        %v2316 = vadd.f32 %v2228, %v2312
        %v2317 = vadd.f32 %v2229, %v2314
        %v2318 = vld [vmem:[%s10] sm:$0x1]
        %v2320 = vperm.slane %v2318, 0
        %v2322 = vadd.f32 %v2316, %v2320
        %v2323 = vadd.f32 %v2317, %v2320
        %v2324 = vmax.f32 %v2322, 0.0
        %v2325 = vmax.f32 %v2323, 0.0
        %v2326 = vpack.c.bf16 %v2325, %v2324
        %v2327 = vld [vmem:[%s11] sm:$0xf]
        %v2328 = vld [vmem:[%s11 + $0x4] sm:$0xf]
        %v2329 = vld [vmem:[%s11 + $0x8] sm:$0xf]
        %v2330 = vld [vmem:[%s11 + $0xc] sm:$0xf]
        %v2331 = vld [vmem:[%s12] sm:$0x1]
        %v2333 = vperm.slane %v2331, 0
        %v2339 = vunpack.c.l.b16 %v2327
        %v2340 = vunpack.c.l.b16 %v2328
        %v2341 = vunpack.c.l.b16 %v2329
        %v2342 = vunpack.c.l.b16 %v2330
        %v2343 = vpack.c.b16 %v2340, %v2339
        %v2344 = vpack.c.b16 %v2342, %v2341
        %v2348 = vsel %vm2009, %v2326, 0
        %2350 = vmatpush.bf16.msra.mxu0 0
        %2351 = vmatpush.bf16.msra.mxu0 0
        %2352 = vmatpush.bf16.msra.mxu0 0
        %2353 = vmatpush.bf16.msra.mxu0 0
        %2354 = vmatpush.bf16.msra.mxu0 0
        %2355 = vmatpush.bf16.msra.mxu0 0
        %2356 = vmatpush.bf16.msra.mxu0 %v2344
        %2357 = vmatpush.bf16.msra.mxu0 %v2343
        %2358 = vmatmul.bf16.gmra.mxu0 %v2348
        %v2359 = vpop.f32.mrf.mxu0
        %v2360 = vadd.f32 %v2333, %v2359
        %v2361 = vpop.f32.mrf.mxu0
        %v2362 = vadd.f32 %v2333, %v2361
        %2363 = vdwg.mxu0
        %v2364 = vmax.f32 %v2360, 0.0
        %v2365 = vmax.f32 %v2362, 0.0
        %v2366 = vpack.c.bf16 %v2365, %v2364
        %v2367 = vld [vmem:[%s13] sm:$0xf]
        %v2368 = vld [vmem:[%s13 + $0x4] sm:$0xf]
        %v2369 = vld [vmem:[%s13 + $0x8] sm:$0xf]
        %v2370 = vld [vmem:[%s13 + $0xc] sm:$0xf]
        %v2371 = vld [vmem:[%s14] sm:$0x1]
        %v2373 = vperm.slane %v2371, 0
        %v2379 = vunpack.c.l.b16 %v2367
        %v2380 = vunpack.c.l.b16 %v2368
        %v2381 = vunpack.c.l.b16 %v2369
        %v2382 = vunpack.c.l.b16 %v2370
        %v2383 = vpack.c.b16 %v2380, %v2379
        %v2384 = vpack.c.b16 %v2382, %v2381
        %v2388 = vsel %vm2009, %v2366, 0
        %2390 = vmatpush.bf16.msra.mxu0 0
        %2391 = vmatpush.bf16.msra.mxu0 0
        %2392 = vmatpush.bf16.msra.mxu0 0
        %2393 = vmatpush.bf16.msra.mxu0 0
        %2394 = vmatpush.bf16.msra.mxu0 0
        %2395 = vmatpush.bf16.msra.mxu0 0
        %2396 = vmatpush.bf16.msra.mxu0 %v2384
        %2397 = vmatpush.bf16.msra.mxu0 %v2383
        %2398 = vmatmul.bf16.gmra.mxu0 %v2388
        %v2399 = vpop.f32.mrf.mxu0
        %v2400 = vadd.f32 %v2373, %v2399
        %v2401 = vpop.f32.mrf.mxu0
        %v2402 = vadd.f32 %v2373, %v2401
        %2403 = vdwg.mxu0
        %v2404 = vsel %vm2032, %v2400, -inf
        %2405 = vmax.xlane.f32.xlu0 %v2404
        %v2406 = vpop.xlane.xlu0 %2405
        %v2407 = vsel %vm2032, %v2402, -inf
        %2408 = vmax.xlane.f32.xlu0 %v2407
        %v2409 = vpop.xlane.xlu0 %2408
        %v2410 = vsub.f32 %v2400, %v2406
        %v2411 = vsub.f32 %v2402, %v2409
        %v2412 = vmul.f32 %v2410, 1.442695
        %v2413 = vpow.pop %v2412
        %v2414 = vmul.f32 %v2411, 1.442695
        %v2415 = vpow.pop %v2414
        %v2416 = vsel %vm2032, %v2413, 0.0
        %2417 = vadd.xlane.f32.xlu0 %v2416
        %v2418 = vpop.xlane.xlu0 %2417
        %v2419 = vsel %vm2032, %v2415, 0.0
        %2420 = vadd.xlane.f32.xlu0 %v2419
        %v2421 = vpop.xlane.xlu0 %2420
        %v2422 = vrcp.pop %v2418
        %v2423 = vmul.f32 %v2418, %v2422
        %v2424 = vsub.f32 1.0, %v2423
        %v2425 = vmul.f32 %v2422, %v2424
        %v2426 = vadd.f32 %v2422, %v2425
        %vm2427 = vweird.f32 %v2418
        %vm2428 = vweird.f32 %v2422
        %vm2429 = vmor %vm2427, %vm2428
        %v2430 = vsel %vm2429, %v2422, %v2426
        %v2431 = vand.u32 2147483647, %v2418
        %vm2432 = vcmp.eq.f32.partialorder %v2431, 8.507059e+37
        %v2433 = vand.u32 %v2418, 2147483648
        %v2434 = vor.u32 1.1754944e-38, %v2433
        %v2435 = vsel %vm2432, %v2434, %v2430
        %v2436 = vrcp.pop %v2421
        %v2437 = vmul.f32 %v2421, %v2436
        %v2438 = vsub.f32 1.0, %v2437
        %v2439 = vmul.f32 %v2436, %v2438
        %v2440 = vadd.f32 %v2436, %v2439
        %vm2441 = vweird.f32 %v2421
        %vm2442 = vweird.f32 %v2436
        %vm2443 = vmor %vm2441, %vm2442
        %v2444 = vsel %vm2443, %v2436, %v2440
        %v2445 = vand.u32 2147483647, %v2421
        %vm2446 = vcmp.eq.f32.partialorder %v2445, 8.507059e+37
        %v2447 = vand.u32 %v2421, 2147483648
        %v2448 = vor.u32 1.1754944e-38, %v2447
        %v2449 = vsel %vm2446, %v2448, %v2444
        %v2450 = vmul.f32 %v2413, %v2435
        %v2451 = vmul.f32 %v2415, %v2449
        %2452 = vst.msk [vmem:[%s677] sm:$0xff] %vm2032, %v2450
        %2453 = vst.msk [vmem:[%s677 + $0x8] sm:$0xff] %vm2032, %v2451
        %s2454 = smul.u32 2, %s26
        %p2455 = scmp.lt.s32.totalorder %s2454, 3
        %s2456 = scalar_select %p2455, %s2454, 3
        %s2457 = smul.addr %s2456, 8
        %s2458 = scalar_lea.vmem %s15, %s2457
        // Predicated region
        $region122: #{policy_forward.1} parent=116 // pred_check
          %p2459 = pneg %p369
        $region123: #{policy_forward.1} parent=116 // pred_check_branch
          %2461 = sbr.rel (%p2459) target = $region125
        $region124: #{policy_forward.1} parent=116 // pred_region
          %s2462 = smul.u32 2, %s26
        $region125: #{policy_forward.1} parent=116 // pred_fallthru
          _
      $region117: #{policy_forward.1} parent=5 // pred_fallthru
        _
      %p2463 = scmp.le.s32.totalorder 2, %s21
      // Predicated region
      $region126: #{policy_forward.1} parent=5 // pred_check
        %p2464 = pneg %p2463
      $region127: #{policy_forward.1} parent=5 // pred_check_branch
        %2466 = sbr.rel (%p2464) target = $region129
      $region128: #{policy_forward.1} parent=5 // pred_region
        %s2467 = ssub.s32 %s21, 2
        // Predicated region
        $region130: #{policy_forward.1} parent=128 // pred_check
          %p2468 = pneg %p375
        $region131: #{policy_forward.1} parent=128 // pred_check_branch
          %2470 = sbr.rel (%p2468) target = $region133
        $region132: #{policy_forward.1} parent=128 // pred_region
          %s2471 = smul.u32 2, %s27
          %p2472 = scmp.lt.s32.totalorder %s2471, 3
          %s2473 = scalar_select %p2472, %s2471, 3
          %s2474 = smul.addr %s2473, 8
          %s2475 = scalar_lea.vmem %s15, %s2474
        $region133: #{policy_forward.1} parent=128 // pred_fallthru
          _
      $region129: #{policy_forward.1} parent=5 // pred_fallthru
        _
    $region6: #{policy_forward.1} parent=1 // loop_footer
      %s25 = sadd.s32 1, %s21
    $region7: #{policy_forward.1} parent=1 // loop_footer_branch
      %20 = sbr.rel target = $region3
    $region8: #{policy_forward.1} parent=1 // loop_exit
      _

</llo_original>
